<compile_context>
chip_gen: v7x
topology: tpu7x:2x2x1
jax: 0.10.0
libtpu: 0.0.40
codegen_flags: <defaults>
</compile_context>

<pallas_src>
import jax
import jax.numpy as jnp
from jax.experimental import pallas as pl
from jax.experimental.pallas import tpu as pltpu

LN_EPS = 1e-5
MXU_ROWS = 256  # full-height MXU pass on v6e/v7x; v5e's 128-row passes divide it


def _round_up(n, m):
    return ((n + m - 1) // m) * m


def _ln_relu(h, gamma, beta):
    # LayerNorm over the last dim (biased variance, matching torch.nn.LayerNorm),
    # fused with ReLU. Variance via E[h^2] - mean^2 saves one full-width VALU
    # pass; clamped at 0 for safety (fine at DQN activation scales).
    mean = jnp.mean(h, axis=-1, keepdims=True)
    var = jnp.maximum(jnp.mean(h * h, axis=-1, keepdims=True) - mean * mean, 0.0)
    inv = jax.lax.rsqrt(var + LN_EPS)
    y = (h - mean) * inv * gamma + beta
    return jnp.maximum(y, 0.0)


def dqn_kernel(x_ref,
               w1_ref, b1_ref, g1_ref, be1_ref,
               w2_ref, b2_ref, g2_ref, be2_ref,
               w3_ref, b3_ref, g3_ref, be3_ref,
               w4_ref, b4_ref,
               o_ref):
    # x arrives as f32 (no wrapper-side cast); the bf16 cast rides under the DMA.
    x = x_ref[...].astype(jnp.bfloat16)

    # fc1 -> LN -> ReLU   (dropout1 == identity in eval)
    h = jnp.dot(x, w1_ref[...], preferred_element_type=jnp.float32) + b1_ref[...]
    h = _ln_relu(h, g1_ref[...], be1_ref[...]).astype(jnp.bfloat16)

    # fc2 -> LN -> ReLU   (dropout2 == identity in eval)
    h = jnp.dot(h, w2_ref[...], preferred_element_type=jnp.float32) + b2_ref[...]
    h = _ln_relu(h, g2_ref[...], be2_ref[...]).astype(jnp.bfloat16)

    # fc3 -> LN -> ReLU
    h = jnp.dot(h, w3_ref[...], preferred_element_type=jnp.float32) + b3_ref[...]
    h = _ln_relu(h, g3_ref[...], be3_ref[...]).astype(jnp.bfloat16)

    # fc4 head, no activation. Output block is narrow (output_dim columns);
    # the few lane-masked stores are far cheaper than a padded-128 f32 slab.
    out = jnp.dot(h, w4_ref[...], preferred_element_type=jnp.float32) + b4_ref[...]
    o_ref[...] = out.astype(o_ref.dtype)


def enhanced_dqn_forward(x, params, *, batch_tile=2048):
    """x: (B, input_dim) f32. params: dict from init_params.

    batch_tile is a sweep parameter (try 1024 / 2048 / 4096). Tiles are rounded
    to 256 rows; for B >= 512 the tile is capped so the grid has >= 2 steps and
    the "parallel" axis can shard across both v7x TensorCores.
    """
    B, input_dim = x.shape
    output_dim = params["w4"].shape[1]

    # Tile selection: multiple of 256 rows, never (much) larger than the batch.
    eff_tile = _round_up(min(batch_tile, _round_up(B, MXU_ROWS)), MXU_ROWS)
    if B >= 2 * MXU_ROWS:
        # v7x: guarantee >= 2 grid steps so both TensorCores get work.
        half = _round_up(_round_up(B, MXU_ROWS) // 2, MXU_ROWS)
        eff_tile = min(eff_tile, half)
    B_pad = _round_up(B, eff_tile)

    x_in = x if B_pad == B else jnp.pad(x, ((0, B_pad - B), (0, 0)))

    param_arrays = [
        params["w1"], params["b1"], params["g1"], params["be1"],
        params["w2"], params["b2"], params["g2"], params["be2"],
        params["w3"], params["b3"], params["g3"], params["be3"],
        params["w4"], params["b4"],
    ]

    # Parameters easily fit VMEM; full-extent blocks with a constant index_map
    # (no re-DMA across the batch grid).
    def full_spec(arr):
        return pl.BlockSpec(arr.shape, lambda i: (0, 0))

    in_specs = [pl.BlockSpec((eff_tile, input_dim), lambda i: (i, 0))]
    in_specs += [full_spec(p) for p in param_arrays]
    # Narrow, contiguous output: last dim equals the full array dim.
    out_spec = pl.BlockSpec((eff_tile, output_dim), lambda i: (i, 0))

    # VMEM budget from the actual footprint: double-buffered x/out tiles,
    # (double-buffered) resident params, and f32 LN/activation temps of width
    # 256. 1.5x margin; clamped to stay inside v7x's 64 MiB physical VMEM while
    # beating the low scoped defaults.
    param_bytes = sum(int(p.size) * p.dtype.itemsize for p in param_arrays)
    x_tile_bytes = eff_tile * input_dim * 4        # f32 input tile
    out_tile_bytes = eff_tile * output_dim * 4     # f32 narrow output tile
    act_bytes = 8 * eff_tile * 256 * 4             # f32 activation temps
    footprint = 2 * (x_tile_bytes + out_tile_bytes + param_bytes) + act_bytes
    vmem_limit = int(min(max(int(footprint * 1.5), 24 * 1024 * 1024),
                         56 * 1024 * 1024))

    out_padded = pl.pallas_call(
        dqn_kernel,
        out_shape=jax.ShapeDtypeStruct((B_pad, output_dim), jnp.float32),
        grid_spec=pltpu.PrefetchScalarGridSpec(
            num_scalar_prefetch=0,
            grid=(B_pad // eff_tile,),
            in_specs=in_specs,
            out_specs=out_spec,
        ),
        compiler_params=pltpu.CompilerParams(
            dimension_semantics=("parallel",),
            vmem_limit_bytes=vmem_limit,
        ),
    )(x_in, *param_arrays)

    # Only the (cheap, narrow) batch-padding rows get sliced off; no more
    # full-width column slice re-reading a padded slab.
    return out_padded if B_pad == B else out_padded[:B]


def init_params(key, input_dim, output_dim):
    """Deterministic init mimicking PyTorch Linear defaults (uniform +-1/sqrt(fan_in)).
    Weights stored in bf16 (MXU-native); biases and LayerNorm params in f32."""
    dims = [(input_dim, 128), (128, 256), (256, 128), (128, output_dim)]
    params = {}
    for li, (fin, fout) in enumerate(dims, start=1):
        key, kw, kb = jax.random.split(key, 3)
        bound = 1.0 / jnp.sqrt(float(fin))
        params[f"w{li}"] = jax.random.uniform(
            kw, (fin, fout), jnp.float32, -bound, bound).astype(jnp.bfloat16)
        params[f"b{li}"] = jax.random.uniform(
            kb, (1, fout), jnp.float32, -bound, bound)
    for li, dim in zip((1, 2, 3), (128, 256, 128)):
        params[f"g{li}"] = jnp.ones((1, dim), jnp.float32)
        params[f"be{li}"] = jnp.zeros((1, dim), jnp.float32)
    return params


def _layernorm_ref(h, gamma, beta):
    mean = jnp.mean(h, axis=-1, keepdims=True)
    var = jnp.mean((h - mean) ** 2, axis=-1, keepdims=True)
    return (h - mean) * jax.lax.rsqrt(var + LN_EPS) * gamma + beta


def reference_forward(x, params):
    """Pure-JAX reference mirroring the kernel's precision policy
    (bf16 weights/activations, f32 accumulation and LayerNorm)."""
    def dot(a, w):
        return jnp.dot(a.astype(jnp.float32), w.astype(jnp.float32))

    h = x.astype(jnp.bfloat16)
    h = dot(h, params["w1"]) + params["b1"]
    h = jnp.maximum(_layernorm_ref(h, params["g1"], params["be1"]), 0.0).astype(jnp.bfloat16)
    h = dot(h, params["w2"]) + params["b2"]
    h = jnp.maximum(_layernorm_ref(h, params["g2"], params["be2"]), 0.0).astype(jnp.bfloat16)
    h = dot(h, params["w3"]) + params["b3"]
    h = jnp.maximum(_layernorm_ref(h, params["g3"], params["be3"]), 0.0).astype(jnp.bfloat16)
    return dot(h, params["w4"]) + params["b4"]


if __name__ == "__main__":
    key = jax.random.PRNGKey(0)
    kx, kp = jax.random.split(key)

    batch, input_dim, output_dim = 8, 16, 4
    x = jax.random.normal(kx, (batch, input_dim), jnp.float32)
    params = init_params(kp, input_dim, output_dim)

    out = enhanced_dqn_forward(x, params, batch_tile=2048)
    out = jax.block_until_ready(out)

    ref = reference_forward(x, params)
    assert out.shape == (batch, output_dim), out.shape
    assert jnp.allclose(out, ref, atol=2e-2, rtol=2e-2), (
        "mismatch vs reference: max |diff| = %g" % float(jnp.max(jnp.abs(out - ref))))

    print("KERNEL_OK")
</pallas_src>

<mosaic_0001>
module attributes {stable_mosaic.version = 11 : i64} {
  func.func @dqn_kernel(%arg0: i32, %arg1: memref<256x16xf32, #tpu.memory_space<vmem>>, %arg2: memref<16x128xbf16, #tpu.memory_space<vmem>>, %arg3: memref<1x128xf32, #tpu.memory_space<vmem>>, %arg4: memref<1x128xf32, #tpu.memory_space<vmem>>, %arg5: memref<1x128xf32, #tpu.memory_space<vmem>>, %arg6: memref<128x256xbf16, #tpu.memory_space<vmem>>, %arg7: memref<1x256xf32, #tpu.memory_space<vmem>>, %arg8: memref<1x256xf32, #tpu.memory_space<vmem>>, %arg9: memref<1x256xf32, #tpu.memory_space<vmem>>, %arg10: memref<256x128xbf16, #tpu.memory_space<vmem>>, %arg11: memref<1x128xf32, #tpu.memory_space<vmem>>, %arg12: memref<1x128xf32, #tpu.memory_space<vmem>>, %arg13: memref<1x128xf32, #tpu.memory_space<vmem>>, %arg14: memref<128x4xbf16, #tpu.memory_space<vmem>>, %arg15: memref<1x4xf32, #tpu.memory_space<vmem>>, %arg16: memref<256x4xf32, #tpu.memory_space<vmem>>) attributes {dimension_semantics = [#tpu.dimension_semantics<parallel>], iteration_bounds = array<i64: 1>, scalar_prefetch = 0 : i64, scratch_operands = 0 : i64, tpu.core_type = #tpu.core_type<tc>, window_params = [{transform_indices = @transform_0, window_bounds = array<i64: 256, 16>}, {pipeline_mode = #tpu.pipeline_mode<synchronous>, transform_indices = @transform_1, window_bounds = array<i64: 16, 128>}, {pipeline_mode = #tpu.pipeline_mode<synchronous>, transform_indices = @transform_2, window_bounds = array<i64: 1, 128>}, {pipeline_mode = #tpu.pipeline_mode<synchronous>, transform_indices = @transform_3, window_bounds = array<i64: 1, 128>}, {pipeline_mode = #tpu.pipeline_mode<synchronous>, transform_indices = @transform_4, window_bounds = array<i64: 1, 128>}, {pipeline_mode = #tpu.pipeline_mode<synchronous>, transform_indices = @transform_5, window_bounds = array<i64: 128, 256>}, {pipeline_mode = #tpu.pipeline_mode<synchronous>, transform_indices = @transform_6, window_bounds = array<i64: 1, 256>}, {pipeline_mode = #tpu.pipeline_mode<synchronous>, transform_indices = @transform_7, window_bounds = array<i64: 1, 256>}, {pipeline_mode = #tpu.pipeline_mode<synchronous>, transform_indices = @transform_8, window_bounds = array<i64: 1, 256>}, {pipeline_mode = #tpu.pipeline_mode<synchronous>, transform_indices = @transform_9, window_bounds = array<i64: 256, 128>}, {pipeline_mode = #tpu.pipeline_mode<synchronous>, transform_indices = @transform_10, window_bounds = array<i64: 1, 128>}, {pipeline_mode = #tpu.pipeline_mode<synchronous>, transform_indices = @transform_11, window_bounds = array<i64: 1, 128>}, {pipeline_mode = #tpu.pipeline_mode<synchronous>, transform_indices = @transform_12, window_bounds = array<i64: 1, 128>}, {pipeline_mode = #tpu.pipeline_mode<synchronous>, transform_indices = @transform_13, window_bounds = array<i64: 128, 4>}, {pipeline_mode = #tpu.pipeline_mode<synchronous>, transform_indices = @transform_14, window_bounds = array<i64: 1, 4>}, {transform_indices = @transform_15, window_bounds = array<i64: 256, 4>}]} {
    %c0 = arith.constant 0 : index
    %c0_0 = arith.constant 0 : index
    %0 = vector.load %arg1[%c0, %c0_0] : memref<256x16xf32, #tpu.memory_space<vmem>>, vector<256x16xf32>
    %1 = arith.truncf %0 : vector<256x16xf32> to vector<256x16xbf16>
    %c0_1 = arith.constant 0 : index
    %c0_2 = arith.constant 0 : index
    %2 = vector.load %arg2[%c0_1, %c0_2] : memref<16x128xbf16, #tpu.memory_space<vmem>>, vector<16x128xbf16>
    %cst = arith.constant dense<0.000000e+00> : vector<256x128xf32>
    %3 = tpu.matmul %1, %2, %cst {dimension_numbers = #tpu.dot_dimension_numbers<[1], [0], [0], [1], [0, 0, 1, 1], [], []>} : vector<256x16xbf16>, vector<16x128xbf16>, vector<256x128xf32> -> vector<256x128xf32>
    %c0_3 = arith.constant 0 : index
    %c0_4 = arith.constant 0 : index
    %4 = vector.load %arg3[%c0_3, %c0_4] : memref<1x128xf32, #tpu.memory_space<vmem>>, vector<1x128xf32>
    %5 = vector.broadcast %4 : vector<1x128xf32> to vector<256x128xf32>
    %6 = arith.addf %3, %5 : vector<256x128xf32>
    %c0_5 = arith.constant 0 : index
    %c0_6 = arith.constant 0 : index
    %7 = vector.load %arg4[%c0_5, %c0_6] : memref<1x128xf32, #tpu.memory_space<vmem>>, vector<1x128xf32>
    %c0_7 = arith.constant 0 : index
    %c0_8 = arith.constant 0 : index
    %8 = vector.load %arg5[%c0_7, %c0_8] : memref<1x128xf32, #tpu.memory_space<vmem>>, vector<1x128xf32>
    %cst_9 = arith.constant dense<0.000000e+00> : vector<256xf32>
    %9 = vector.multi_reduction <add>, %6, %cst_9 [1] : vector<256x128xf32> to vector<256xf32>
    %10 = vector.shape_cast %9 : vector<256xf32> to vector<256x1xf32>
    %cst_10 = arith.constant 1.280000e+02 : f32
    %11 = vector.broadcast %cst_10 : f32 to vector<256x1xf32>
    %12 = arith.divf %10, %11 : vector<256x1xf32>
    %13 = arith.mulf %6, %6 : vector<256x128xf32>
    %cst_11 = arith.constant dense<0.000000e+00> : vector<256xf32>
    %14 = vector.multi_reduction <add>, %13, %cst_11 [1] : vector<256x128xf32> to vector<256xf32>
    %15 = vector.shape_cast %14 : vector<256xf32> to vector<256x1xf32>
    %cst_12 = arith.constant 1.280000e+02 : f32
    %16 = vector.broadcast %cst_12 : f32 to vector<256x1xf32>
    %17 = arith.divf %15, %16 : vector<256x1xf32>
    %18 = arith.mulf %12, %12 : vector<256x1xf32>
    %19 = arith.subf %17, %18 : vector<256x1xf32>
    %cst_13 = arith.constant 0.000000e+00 : f32
    %20 = vector.broadcast %cst_13 : f32 to vector<256x1xf32>
    %21 = arith.maximumf %19, %20 : vector<256x1xf32>
    %cst_14 = arith.constant 9.99999974E-6 : f32
    %22 = vector.broadcast %cst_14 : f32 to vector<256x1xf32>
    %23 = arith.addf %21, %22 : vector<256x1xf32>
    %24 = math.rsqrt %23 : vector<256x1xf32>
    %25 = vector.broadcast %12 : vector<256x1xf32> to vector<256x128xf32>
    %26 = arith.subf %6, %25 : vector<256x128xf32>
    %27 = vector.broadcast %24 : vector<256x1xf32> to vector<256x128xf32>
    %28 = arith.mulf %26, %27 : vector<256x128xf32>
    %29 = vector.broadcast %7 : vector<1x128xf32> to vector<256x128xf32>
    %30 = arith.mulf %28, %29 : vector<256x128xf32>
    %31 = vector.broadcast %8 : vector<1x128xf32> to vector<256x128xf32>
    %32 = arith.addf %30, %31 : vector<256x128xf32>
    %cst_15 = arith.constant 0.000000e+00 : f32
    %33 = vector.broadcast %cst_15 : f32 to vector<256x128xf32>
    %34 = arith.maximumf %32, %33 : vector<256x128xf32>
    %35 = arith.truncf %34 : vector<256x128xf32> to vector<256x128xbf16>
    %c0_16 = arith.constant 0 : index
    %c0_17 = arith.constant 0 : index
    %36 = vector.load %arg6[%c0_16, %c0_17] : memref<128x256xbf16, #tpu.memory_space<vmem>>, vector<128x256xbf16>
    %cst_18 = arith.constant dense<0.000000e+00> : vector<256x256xf32>
    %37 = tpu.matmul %35, %36, %cst_18 {dimension_numbers = #tpu.dot_dimension_numbers<[1], [0], [0], [1], [0, 0, 1, 1], [], []>} : vector<256x128xbf16>, vector<128x256xbf16>, vector<256x256xf32> -> vector<256x256xf32>
    %c0_19 = arith.constant 0 : index
    %c0_20 = arith.constant 0 : index
    %38 = vector.load %arg7[%c0_19, %c0_20] : memref<1x256xf32, #tpu.memory_space<vmem>>, vector<1x256xf32>
    %39 = vector.broadcast %38 : vector<1x256xf32> to vector<256x256xf32>
    %40 = arith.addf %37, %39 : vector<256x256xf32>
    %c0_21 = arith.constant 0 : index
    %c0_22 = arith.constant 0 : index
    %41 = vector.load %arg8[%c0_21, %c0_22] : memref<1x256xf32, #tpu.memory_space<vmem>>, vector<1x256xf32>
    %c0_23 = arith.constant 0 : index
    %c0_24 = arith.constant 0 : index
    %42 = vector.load %arg9[%c0_23, %c0_24] : memref<1x256xf32, #tpu.memory_space<vmem>>, vector<1x256xf32>
    %cst_25 = arith.constant dense<0.000000e+00> : vector<256xf32>
    %43 = vector.multi_reduction <add>, %40, %cst_25 [1] : vector<256x256xf32> to vector<256xf32>
    %44 = vector.shape_cast %43 : vector<256xf32> to vector<256x1xf32>
    %cst_26 = arith.constant 2.560000e+02 : f32
    %45 = vector.broadcast %cst_26 : f32 to vector<256x1xf32>
    %46 = arith.divf %44, %45 : vector<256x1xf32>
    %47 = arith.mulf %40, %40 : vector<256x256xf32>
    %cst_27 = arith.constant dense<0.000000e+00> : vector<256xf32>
    %48 = vector.multi_reduction <add>, %47, %cst_27 [1] : vector<256x256xf32> to vector<256xf32>
    %49 = vector.shape_cast %48 : vector<256xf32> to vector<256x1xf32>
    %cst_28 = arith.constant 2.560000e+02 : f32
    %50 = vector.broadcast %cst_28 : f32 to vector<256x1xf32>
    %51 = arith.divf %49, %50 : vector<256x1xf32>
    %52 = arith.mulf %46, %46 : vector<256x1xf32>
    %53 = arith.subf %51, %52 : vector<256x1xf32>
    %cst_29 = arith.constant 0.000000e+00 : f32
    %54 = vector.broadcast %cst_29 : f32 to vector<256x1xf32>
    %55 = arith.maximumf %53, %54 : vector<256x1xf32>
    %cst_30 = arith.constant 9.99999974E-6 : f32
    %56 = vector.broadcast %cst_30 : f32 to vector<256x1xf32>
    %57 = arith.addf %55, %56 : vector<256x1xf32>
    %58 = math.rsqrt %57 : vector<256x1xf32>
    %59 = vector.broadcast %46 : vector<256x1xf32> to vector<256x256xf32>
    %60 = arith.subf %40, %59 : vector<256x256xf32>
    %61 = vector.broadcast %58 : vector<256x1xf32> to vector<256x256xf32>
    %62 = arith.mulf %60, %61 : vector<256x256xf32>
    %63 = vector.broadcast %41 : vector<1x256xf32> to vector<256x256xf32>
    %64 = arith.mulf %62, %63 : vector<256x256xf32>
    %65 = vector.broadcast %42 : vector<1x256xf32> to vector<256x256xf32>
    %66 = arith.addf %64, %65 : vector<256x256xf32>
    %cst_31 = arith.constant 0.000000e+00 : f32
    %67 = vector.broadcast %cst_31 : f32 to vector<256x256xf32>
    %68 = arith.maximumf %66, %67 : vector<256x256xf32>
    %69 = arith.truncf %68 : vector<256x256xf32> to vector<256x256xbf16>
    %c0_32 = arith.constant 0 : index
    %c0_33 = arith.constant 0 : index
    %70 = vector.load %arg10[%c0_32, %c0_33] : memref<256x128xbf16, #tpu.memory_space<vmem>>, vector<256x128xbf16>
    %cst_34 = arith.constant dense<0.000000e+00> : vector<256x128xf32>
    %71 = tpu.matmul %69, %70, %cst_34 {dimension_numbers = #tpu.dot_dimension_numbers<[1], [0], [0], [1], [0, 0, 1, 1], [], []>} : vector<256x256xbf16>, vector<256x128xbf16>, vector<256x128xf32> -> vector<256x128xf32>
    %c0_35 = arith.constant 0 : index
    %c0_36 = arith.constant 0 : index
    %72 = vector.load %arg11[%c0_35, %c0_36] : memref<1x128xf32, #tpu.memory_space<vmem>>, vector<1x128xf32>
    %73 = vector.broadcast %72 : vector<1x128xf32> to vector<256x128xf32>
    %74 = arith.addf %71, %73 : vector<256x128xf32>
    %c0_37 = arith.constant 0 : index
    %c0_38 = arith.constant 0 : index
    %75 = vector.load %arg12[%c0_37, %c0_38] : memref<1x128xf32, #tpu.memory_space<vmem>>, vector<1x128xf32>
    %c0_39 = arith.constant 0 : index
    %c0_40 = arith.constant 0 : index
    %76 = vector.load %arg13[%c0_39, %c0_40] : memref<1x128xf32, #tpu.memory_space<vmem>>, vector<1x128xf32>
    %cst_41 = arith.constant dense<0.000000e+00> : vector<256xf32>
    %77 = vector.multi_reduction <add>, %74, %cst_41 [1] : vector<256x128xf32> to vector<256xf32>
    %78 = vector.shape_cast %77 : vector<256xf32> to vector<256x1xf32>
    %cst_42 = arith.constant 1.280000e+02 : f32
    %79 = vector.broadcast %cst_42 : f32 to vector<256x1xf32>
    %80 = arith.divf %78, %79 : vector<256x1xf32>
    %81 = arith.mulf %74, %74 : vector<256x128xf32>
    %cst_43 = arith.constant dense<0.000000e+00> : vector<256xf32>
    %82 = vector.multi_reduction <add>, %81, %cst_43 [1] : vector<256x128xf32> to vector<256xf32>
    %83 = vector.shape_cast %82 : vector<256xf32> to vector<256x1xf32>
    %cst_44 = arith.constant 1.280000e+02 : f32
    %84 = vector.broadcast %cst_44 : f32 to vector<256x1xf32>
    %85 = arith.divf %83, %84 : vector<256x1xf32>
    %86 = arith.mulf %80, %80 : vector<256x1xf32>
    %87 = arith.subf %85, %86 : vector<256x1xf32>
    %cst_45 = arith.constant 0.000000e+00 : f32
    %88 = vector.broadcast %cst_45 : f32 to vector<256x1xf32>
    %89 = arith.maximumf %87, %88 : vector<256x1xf32>
    %cst_46 = arith.constant 9.99999974E-6 : f32
    %90 = vector.broadcast %cst_46 : f32 to vector<256x1xf32>
    %91 = arith.addf %89, %90 : vector<256x1xf32>
    %92 = math.rsqrt %91 : vector<256x1xf32>
    %93 = vector.broadcast %80 : vector<256x1xf32> to vector<256x128xf32>
    %94 = arith.subf %74, %93 : vector<256x128xf32>
    %95 = vector.broadcast %92 : vector<256x1xf32> to vector<256x128xf32>
    %96 = arith.mulf %94, %95 : vector<256x128xf32>
    %97 = vector.broadcast %75 : vector<1x128xf32> to vector<256x128xf32>
    %98 = arith.mulf %96, %97 : vector<256x128xf32>
    %99 = vector.broadcast %76 : vector<1x128xf32> to vector<256x128xf32>
    %100 = arith.addf %98, %99 : vector<256x128xf32>
    %cst_47 = arith.constant 0.000000e+00 : f32
    %101 = vector.broadcast %cst_47 : f32 to vector<256x128xf32>
    %102 = arith.maximumf %100, %101 : vector<256x128xf32>
    %103 = arith.truncf %102 : vector<256x128xf32> to vector<256x128xbf16>
    %c0_48 = arith.constant 0 : index
    %c0_49 = arith.constant 0 : index
    %104 = vector.load %arg14[%c0_48, %c0_49] : memref<128x4xbf16, #tpu.memory_space<vmem>>, vector<128x4xbf16>
    %cst_50 = arith.constant dense<0.000000e+00> : vector<256x4xf32>
    %105 = tpu.matmul %103, %104, %cst_50 {dimension_numbers = #tpu.dot_dimension_numbers<[1], [0], [0], [1], [0, 0, 1, 1], [], []>} : vector<256x128xbf16>, vector<128x4xbf16>, vector<256x4xf32> -> vector<256x4xf32>
    %c0_51 = arith.constant 0 : index
    %c0_52 = arith.constant 0 : index
    %106 = vector.load %arg15[%c0_51, %c0_52] : memref<1x4xf32, #tpu.memory_space<vmem>>, vector<1x4xf32>
    %107 = vector.broadcast %106 : vector<1x4xf32> to vector<256x4xf32>
    %108 = arith.addf %105, %107 : vector<256x4xf32>
    %c0_53 = arith.constant 0 : index
    %c0_54 = arith.constant 0 : index
    %109 = vector.load %arg16[%c0_53, %c0_54] : memref<256x4xf32, #tpu.memory_space<vmem>>, vector<256x4xf32>
    tpu.vector_store %arg16[%c0_53, %c0_54], %108 {strides = array<i32>} : memref<256x4xf32, #tpu.memory_space<vmem>>, vector<256x4xf32>,
    return
  }
  func.func @transform_0(%arg0: i32) -> (i32, i32) {
    %c0_i32 = arith.constant 0 : i32
    %c0_i32_0 = arith.constant 0 : i32
    return %arg0, %c0_i32 : i32, i32
  }
  func.func @transform_1(%arg0: i32) -> (i32, i32) {
    %c0_i32 = arith.constant 0 : i32
    %c0_i32_0 = arith.constant 0 : i32
    %c0_i32_1 = arith.constant 0 : i32
    return %c0_i32, %c0_i32_0 : i32, i32
  }
  func.func @transform_2(%arg0: i32) -> (i32, i32) {
    %c0_i32 = arith.constant 0 : i32
    %c0_i32_0 = arith.constant 0 : i32
    %c0_i32_1 = arith.constant 0 : i32
    return %c0_i32, %c0_i32_0 : i32, i32
  }
  func.func @transform_3(%arg0: i32) -> (i32, i32) {
    %c0_i32 = arith.constant 0 : i32
    %c0_i32_0 = arith.constant 0 : i32
    %c0_i32_1 = arith.constant 0 : i32
    return %c0_i32, %c0_i32_0 : i32, i32
  }
  func.func @transform_4(%arg0: i32) -> (i32, i32) {
    %c0_i32 = arith.constant 0 : i32
    %c0_i32_0 = arith.constant 0 : i32
    %c0_i32_1 = arith.constant 0 : i32
    return %c0_i32, %c0_i32_0 : i32, i32
  }
  func.func @transform_5(%arg0: i32) -> (i32, i32) {
    %c0_i32 = arith.constant 0 : i32
    %c0_i32_0 = arith.constant 0 : i32
    %c0_i32_1 = arith.constant 0 : i32
    return %c0_i32, %c0_i32_0 : i32, i32
  }
  func.func @transform_6(%arg0: i32) -> (i32, i32) {
    %c0_i32 = arith.constant 0 : i32
    %c0_i32_0 = arith.constant 0 : i32
    %c0_i32_1 = arith.constant 0 : i32
    return %c0_i32, %c0_i32_0 : i32, i32
  }
  func.func @transform_7(%arg0: i32) -> (i32, i32) {
    %c0_i32 = arith.constant 0 : i32
    %c0_i32_0 = arith.constant 0 : i32
    %c0_i32_1 = arith.constant 0 : i32
    return %c0_i32, %c0_i32_0 : i32, i32
  }
  func.func @transform_8(%arg0: i32) -> (i32, i32) {
    %c0_i32 = arith.constant 0 : i32
    %c0_i32_0 = arith.constant 0 : i32
    %c0_i32_1 = arith.constant 0 : i32
    return %c0_i32, %c0_i32_0 : i32, i32
  }
  func.func @transform_9(%arg0: i32) -> (i32, i32) {
    %c0_i32 = arith.constant 0 : i32
    %c0_i32_0 = arith.constant 0 : i32
    %c0_i32_1 = arith.constant 0 : i32
    return %c0_i32, %c0_i32_0 : i32, i32
  }
  func.func @transform_10(%arg0: i32) -> (i32, i32) {
    %c0_i32 = arith.constant 0 : i32
    %c0_i32_0 = arith.constant 0 : i32
    %c0_i32_1 = arith.constant 0 : i32
    return %c0_i32, %c0_i32_0 : i32, i32
  }
  func.func @transform_11(%arg0: i32) -> (i32, i32) {
    %c0_i32 = arith.constant 0 : i32
    %c0_i32_0 = arith.constant 0 : i32
    %c0_i32_1 = arith.constant 0 : i32
    return %c0_i32, %c0_i32_0 : i32, i32
  }
  func.func @transform_12(%arg0: i32) -> (i32, i32) {
    %c0_i32 = arith.constant 0 : i32
    %c0_i32_0 = arith.constant 0 : i32
    %c0_i32_1 = arith.constant 0 : i32
    return %c0_i32, %c0_i32_0 : i32, i32
  }
  func.func @transform_13(%arg0: i32) -> (i32, i32) {
    %c0_i32 = arith.constant 0 : i32
    %c0_i32_0 = arith.constant 0 : i32
    %c0_i32_1 = arith.constant 0 : i32
    return %c0_i32, %c0_i32_0 : i32, i32
  }
  func.func @transform_14(%arg0: i32) -> (i32, i32) {
    %c0_i32 = arith.constant 0 : i32
    %c0_i32_0 = arith.constant 0 : i32
    %c0_i32_1 = arith.constant 0 : i32
    return %c0_i32, %c0_i32_0 : i32, i32
  }
  func.func @transform_15(%arg0: i32) -> (i32, i32) {
    %c0_i32 = arith.constant 0 : i32
    %c0_i32_0 = arith.constant 0 : i32
    return %arg0, %c0_i32 : i32, i32
  }
}

</mosaic_0001>

<llo_original>
// kernel: tpu_custom_call.1
$region0: #{tpu_custom_call.1}
  #allocation0 [shape = 'u32[]', space=smem, size = 0x4, offset = 0x4, fixed_abs, tag = 'smem constant byte address 0x4 - core index']
  #allocation1 [shape = 'u32[144,128]{1,0:T(1,128)}', space=vmem, size = 0x12000, scoped, tag = 'internal scratch']
  %s0 = inlined_call_operand.vmem [shape: f32[256,16], index: 0, kind: input, shape index: {}]
  %s1 = inlined_call_operand.vmem [shape: bf16[16,128], index: 1, kind: input, shape index: {}]
  %s2 = inlined_call_operand.vmem [shape: f32[1,128], index: 2, kind: input, shape index: {}]
  %s3 = inlined_call_operand.vmem [shape: f32[1,128], index: 3, kind: input, shape index: {}]
  %s4 = inlined_call_operand.vmem [shape: f32[1,128], index: 4, kind: input, shape index: {}]
  %s5 = inlined_call_operand.vmem [shape: bf16[128,256], index: 5, kind: input, shape index: {}]
  %s6 = inlined_call_operand.vmem [shape: f32[1,256], index: 6, kind: input, shape index: {}]
  %s7 = inlined_call_operand.vmem [shape: f32[1,256], index: 7, kind: input, shape index: {}]
  %s8 = inlined_call_operand.vmem [shape: f32[1,256], index: 8, kind: input, shape index: {}]
  %s9 = inlined_call_operand.vmem [shape: bf16[256,128], index: 9, kind: input, shape index: {}]
  %s10 = inlined_call_operand.vmem [shape: f32[1,128], index: 10, kind: input, shape index: {}]
  %s11 = inlined_call_operand.vmem [shape: f32[1,128], index: 11, kind: input, shape index: {}]
  %s12 = inlined_call_operand.vmem [shape: f32[1,128], index: 12, kind: input, shape index: {}]
  %s13 = inlined_call_operand.vmem [shape: bf16[128,4], index: 13, kind: input, shape index: {}]
  %s14 = inlined_call_operand.vmem [shape: f32[1,4], index: 14, kind: input, shape index: {}]
  %s15 = inlined_call_operand.vmem [shape: f32[256,4], index: 15, kind: output, shape index: {}]
  %s16 = sld [smem:[#allocation0]]
  $region70: #{tpu_custom_call.1} parent=0
    _
  %s18 = ssub.s32 1, %s16
  %s19 = scalar_select 0, %s18, %s16
  // Predicated region
  $region2: #{tpu_custom_call.1} parent=0 // pred_check
    _
  $region3: #{tpu_custom_call.1} parent=0 // pred_check_branch
    %21 = sbr.rel (0) target = $region5
  $region4: #{tpu_custom_call.1} parent=0 // pred_region
    _
  $region5: #{tpu_custom_call.1} parent=0 // pred_fallthru
    _
  // Predicated region
  $region6: #{tpu_custom_call.1} parent=0 // pred_check
    _
  $region7: #{tpu_custom_call.1} parent=0 // pred_check_branch
    %23 = sbr.rel (0) target = $region9
  $region8: #{tpu_custom_call.1} parent=0 // pred_region
    _
  $region9: #{tpu_custom_call.1} parent=0 // pred_fallthru
    _
  // Predicated region
  $region10: #{tpu_custom_call.1} parent=0 // pred_check
    _
  $region11: #{tpu_custom_call.1} parent=0 // pred_check_branch
    %25 = sbr.rel (0) target = $region13
  $region12: #{tpu_custom_call.1} parent=0 // pred_region
    _
  $region13: #{tpu_custom_call.1} parent=0 // pred_fallthru
    _
  // Predicated region
  $region14: #{tpu_custom_call.1} parent=0 // pred_check
    _
  $region15: #{tpu_custom_call.1} parent=0 // pred_check_branch
    %27 = sbr.rel (0) target = $region17
  $region16: #{tpu_custom_call.1} parent=0 // pred_region
    _
  $region17: #{tpu_custom_call.1} parent=0 // pred_fallthru
    _
  // Predicated region
  $region18: #{tpu_custom_call.1} parent=0 // pred_check
    _
  $region19: #{tpu_custom_call.1} parent=0 // pred_check_branch
    %29 = sbr.rel (0) target = $region21
  $region20: #{tpu_custom_call.1} parent=0 // pred_region
    _
  $region21: #{tpu_custom_call.1} parent=0 // pred_fallthru
    _
  // Predicated region
  $region22: #{tpu_custom_call.1} parent=0 // pred_check
    _
  $region23: #{tpu_custom_call.1} parent=0 // pred_check_branch
    %31 = sbr.rel (0) target = $region25
  $region24: #{tpu_custom_call.1} parent=0 // pred_region
    _
  $region25: #{tpu_custom_call.1} parent=0 // pred_fallthru
    _
  // Predicated region
  $region26: #{tpu_custom_call.1} parent=0 // pred_check
    _
  $region27: #{tpu_custom_call.1} parent=0 // pred_check_branch
    %33 = sbr.rel (0) target = $region29
  $region28: #{tpu_custom_call.1} parent=0 // pred_region
    _
  $region29: #{tpu_custom_call.1} parent=0 // pred_fallthru
    _
  // Predicated region
  $region30: #{tpu_custom_call.1} parent=0 // pred_check
    _
  $region31: #{tpu_custom_call.1} parent=0 // pred_check_branch
    %35 = sbr.rel (0) target = $region33
  $region32: #{tpu_custom_call.1} parent=0 // pred_region
    _
  $region33: #{tpu_custom_call.1} parent=0 // pred_fallthru
    _
  // Predicated region
  $region34: #{tpu_custom_call.1} parent=0 // pred_check
    _
  $region35: #{tpu_custom_call.1} parent=0 // pred_check_branch
    %37 = sbr.rel (0) target = $region37
  $region36: #{tpu_custom_call.1} parent=0 // pred_region
    _
  $region37: #{tpu_custom_call.1} parent=0 // pred_fallthru
    _
  // Predicated region
  $region38: #{tpu_custom_call.1} parent=0 // pred_check
    _
  $region39: #{tpu_custom_call.1} parent=0 // pred_check_branch
    %39 = sbr.rel (0) target = $region41
  $region40: #{tpu_custom_call.1} parent=0 // pred_region
    _
  $region41: #{tpu_custom_call.1} parent=0 // pred_fallthru
    _
  // Predicated region
  $region42: #{tpu_custom_call.1} parent=0 // pred_check
    _
  $region43: #{tpu_custom_call.1} parent=0 // pred_check_branch
    %41 = sbr.rel (0) target = $region45
  $region44: #{tpu_custom_call.1} parent=0 // pred_region
    _
  $region45: #{tpu_custom_call.1} parent=0 // pred_fallthru
    _
  // Predicated region
  $region46: #{tpu_custom_call.1} parent=0 // pred_check
    _
  $region47: #{tpu_custom_call.1} parent=0 // pred_check_branch
    %43 = sbr.rel (0) target = $region49
  $region48: #{tpu_custom_call.1} parent=0 // pred_region
    _
  $region49: #{tpu_custom_call.1} parent=0 // pred_fallthru
    _
  // Predicated region
  $region50: #{tpu_custom_call.1} parent=0 // pred_check
    _
  $region51: #{tpu_custom_call.1} parent=0 // pred_check_branch
    %45 = sbr.rel (0) target = $region53
  $region52: #{tpu_custom_call.1} parent=0 // pred_region
    _
  $region53: #{tpu_custom_call.1} parent=0 // pred_fallthru
    _
  // Predicated region
  $region54: #{tpu_custom_call.1} parent=0 // pred_check
    _
  $region55: #{tpu_custom_call.1} parent=0 // pred_check_branch
    %47 = sbr.rel (0) target = $region57
  $region56: #{tpu_custom_call.1} parent=0 // pred_region
    _
  $region57: #{tpu_custom_call.1} parent=0 // pred_fallthru
    _
  // Predicated region
  $region58: #{tpu_custom_call.1} parent=0 // pred_check
    _
  $region59: #{tpu_custom_call.1} parent=0 // pred_check_branch
    %49 = sbr.rel (0) target = $region61
  $region60: #{tpu_custom_call.1} parent=0 // pred_region
    _
  $region61: #{tpu_custom_call.1} parent=0 // pred_fallthru
    _
  %v51 = vld [vmem:[%s0] sm:$0xff]
  %v52 = vld [vmem:[%s0 + $0x8] sm:$0xff]
  %v53 = vld [vmem:[%s0 + $0x10] sm:$0xff]
  %v54 = vld [vmem:[%s0 + $0x18] sm:$0xff]
  %v55 = vld [vmem:[%s0 + $0x20] sm:$0xff]
  %v56 = vld [vmem:[%s0 + $0x28] sm:$0xff]
  %v57 = vld [vmem:[%s0 + $0x30] sm:$0xff]
  %v58 = vld [vmem:[%s0 + $0x38] sm:$0xff]
  %v59 = vld [vmem:[%s0 + $0x40] sm:$0xff]
  %v60 = vld [vmem:[%s0 + $0x48] sm:$0xff]
  %v61 = vld [vmem:[%s0 + $0x50] sm:$0xff]
  %v62 = vld [vmem:[%s0 + $0x58] sm:$0xff]
  %v63 = vld [vmem:[%s0 + $0x60] sm:$0xff]
  %v64 = vld [vmem:[%s0 + $0x68] sm:$0xff]
  %v65 = vld [vmem:[%s0 + $0x70] sm:$0xff]
  %v66 = vld [vmem:[%s0 + $0x78] sm:$0xff]
  %v67 = vld [vmem:[%s0 + $0x80] sm:$0xff]
  %v68 = vld [vmem:[%s0 + $0x88] sm:$0xff]
  %v69 = vld [vmem:[%s0 + $0x90] sm:$0xff]
  %v70 = vld [vmem:[%s0 + $0x98] sm:$0xff]
  %v71 = vld [vmem:[%s0 + $0xa0] sm:$0xff]
  %v72 = vld [vmem:[%s0 + $0xa8] sm:$0xff]
  %v73 = vld [vmem:[%s0 + $0xb0] sm:$0xff]
  %v74 = vld [vmem:[%s0 + $0xb8] sm:$0xff]
  %v75 = vld [vmem:[%s0 + $0xc0] sm:$0xff]
  %v76 = vld [vmem:[%s0 + $0xc8] sm:$0xff]
  %v77 = vld [vmem:[%s0 + $0xd0] sm:$0xff]
  %v78 = vld [vmem:[%s0 + $0xd8] sm:$0xff]
  %v79 = vld [vmem:[%s0 + $0xe0] sm:$0xff]
  %v80 = vld [vmem:[%s0 + $0xe8] sm:$0xff]
  %v81 = vld [vmem:[%s0 + $0xf0] sm:$0xff]
  %v82 = vld [vmem:[%s0 + $0xf8] sm:$0xff]
  %v83 = vpack.c.bf16 %v52, %v51
  %v84 = vpack.c.bf16 %v54, %v53
  %v85 = vpack.c.bf16 %v56, %v55
  %v86 = vpack.c.bf16 %v58, %v57
  %v87 = vpack.c.bf16 %v60, %v59
  %v88 = vpack.c.bf16 %v62, %v61
  %v89 = vpack.c.bf16 %v64, %v63
  %v90 = vpack.c.bf16 %v66, %v65
  %v91 = vpack.c.bf16 %v68, %v67
  %v92 = vpack.c.bf16 %v70, %v69
  %v93 = vpack.c.bf16 %v72, %v71
  %v94 = vpack.c.bf16 %v74, %v73
  %v95 = vpack.c.bf16 %v76, %v75
  %v96 = vpack.c.bf16 %v78, %v77
  %v97 = vpack.c.bf16 %v80, %v79
  %v98 = vpack.c.bf16 %v82, %v81
  %v99 = vld [vmem:[%s1] sm:$0xf]
  %v100 = vld [vmem:[%s1 + $0x4] sm:$0xf]
  %v101 = vld [vmem:[%s2] sm:$0x1]
  %v103 = vlaneseq
  %v104 = vshrl.u32 %v103, 7
  %v105 = vsub.s32 0, %v104
  %v106 = vrot.slane %v101, %v105
  %v110 = vunpack.c.l.b16 %v99
  %v111 = vunpack.c.l.b16 %v100
  %v112 = vpack.c.b16 %v111, %v110
  %vm114 = vcmask 130048
  %v116 = vsel %vm114, %v83, 0
  %v119 = vsel %vm114, %v84, 0
  %v122 = vsel %vm114, %v85, 0
  %v125 = vsel %vm114, %v86, 0
  %v128 = vsel %vm114, %v87, 0
  %v131 = vsel %vm114, %v88, 0
  %v134 = vsel %vm114, %v89, 0
  %v137 = vsel %vm114, %v90, 0
  %v140 = vsel %vm114, %v91, 0
  %v143 = vsel %vm114, %v92, 0
  %v146 = vsel %vm114, %v93, 0
  %v149 = vsel %vm114, %v94, 0
  %v152 = vsel %vm114, %v95, 0
  %v155 = vsel %vm114, %v96, 0
  %v158 = vsel %vm114, %v97, 0
  %v161 = vsel %vm114, %v98, 0
  %163 = vmatprep.subr.bf16.mxu0 0
  %164 = vmatpush1.bf16.msra.mxu0 %v112
  %165 = vmatprep.subr.bf16.mxu0 0
  %166 = vmatpush1.bf16.msra.mxu0 0
  %167 = vmatprep.subr.bf16.mxu0 0
  %168 = vmatpush1.bf16.msra.mxu0 0
  %169 = vmatprep.subr.bf16.mxu0 0
  %170 = vmatpush1.bf16.msra.mxu0 0
  %171 = vmatprep.subr.bf16.mxu0 0
  %172 = vmatpush1.bf16.msra.mxu0 0
  %173 = vmatprep.subr.bf16.mxu0 0
  %174 = vmatpush1.bf16.msra.mxu0 0
  %175 = vmatprep.subr.bf16.mxu0 0
  %176 = vmatpush1.bf16.msra.mxu0 0
  %177 = vmatprep.subr.bf16.mxu0 0
  %178 = vmatpush1.bf16.msra.mxu0 0
  %179 = vmatprep.subr.bf16.mxu0 0
  %180 = vmatpush1.bf16.msra.mxu0 0
  %181 = vmatprep.subr.bf16.mxu0 0
  %182 = vmatpush1.bf16.msra.mxu0 0
  %183 = vmatprep.subr.bf16.mxu0 0
  %184 = vmatpush1.bf16.msra.mxu0 0
  %185 = vmatprep.subr.bf16.mxu0 0
  %186 = vmatpush1.bf16.msra.mxu0 0
  %187 = vmatprep.subr.bf16.mxu0 0
  %188 = vmatpush1.bf16.msra.mxu0 0
  %189 = vmatprep.subr.bf16.mxu0 0
  %190 = vmatpush1.bf16.msra.mxu0 0
  %191 = vmatprep.subr.bf16.mxu0 0
  %192 = vmatpush1.bf16.msra.mxu0 0
  %193 = vmatprep.subr.bf16.mxu0 0
  %194 = vmatpush1.bf16.msra.mxu0 0
  %195 = vmatprep.mubr.bf16.mxu0 0
  %196 = vmatmul.mubr.bf16.gmra.mrb[0].mxu0 %v116
  %v197 = vpop.f32.mrb[0].mxu0
  %v198 = vadd.f32 %v106, %v197
  %v199 = vpop.f32.mrb[0].mxu0
  %v200 = vpop.f32.mrb[0].mxu0
  %v201 = vadd.f32 %v106, %v200
  %v202 = vpop.f32.mrb[0].mxu0
  %203 = vmatprep.mubr.bf16.mxu0 0
  %204 = vmatmul.mubr.bf16.gmra.mrb[0].mxu0 %v119
  %v205 = vpop.f32.mrb[0].mxu0
  %v206 = vadd.f32 %v106, %v205
  %v207 = vpop.f32.mrb[0].mxu0
  %v208 = vpop.f32.mrb[0].mxu0
  %v209 = vadd.f32 %v106, %v208
  %v210 = vpop.f32.mrb[0].mxu0
  %211 = vmatprep.mubr.bf16.mxu0 0
  %212 = vmatmul.mubr.bf16.gmra.mrb[0].mxu0 %v122
  %v213 = vpop.f32.mrb[0].mxu0
  %v214 = vadd.f32 %v106, %v213
  %v215 = vpop.f32.mrb[0].mxu0
  %v216 = vpop.f32.mrb[0].mxu0
  %v217 = vadd.f32 %v106, %v216
  %v218 = vpop.f32.mrb[0].mxu0
  %219 = vmatprep.mubr.bf16.mxu0 0
  %220 = vmatmul.mubr.bf16.gmra.mrb[0].mxu0 %v125
  %v221 = vpop.f32.mrb[0].mxu0
  %v222 = vadd.f32 %v106, %v221
  %v223 = vpop.f32.mrb[0].mxu0
  %v224 = vpop.f32.mrb[0].mxu0
  %v225 = vadd.f32 %v106, %v224
  %v226 = vpop.f32.mrb[0].mxu0
  %227 = vmatprep.mubr.bf16.mxu0 0
  %228 = vmatmul.mubr.bf16.gmra.mrb[0].mxu0 %v128
  %v229 = vpop.f32.mrb[0].mxu0
  %v230 = vadd.f32 %v106, %v229
  %v231 = vpop.f32.mrb[0].mxu0
  %v232 = vpop.f32.mrb[0].mxu0
  %v233 = vadd.f32 %v106, %v232
  %v234 = vpop.f32.mrb[0].mxu0
  %235 = vmatprep.mubr.bf16.mxu0 0
  %236 = vmatmul.mubr.bf16.gmra.mrb[0].mxu0 %v131
  %v237 = vpop.f32.mrb[0].mxu0
  %v238 = vadd.f32 %v106, %v237
  %v239 = vpop.f32.mrb[0].mxu0
  %v240 = vpop.f32.mrb[0].mxu0
  %v241 = vadd.f32 %v106, %v240
  %v242 = vpop.f32.mrb[0].mxu0
  %243 = vmatprep.mubr.bf16.mxu0 0
  %244 = vmatmul.mubr.bf16.gmra.mrb[0].mxu0 %v134
  %v245 = vpop.f32.mrb[0].mxu0
  %v246 = vadd.f32 %v106, %v245
  %v247 = vpop.f32.mrb[0].mxu0
  %v248 = vpop.f32.mrb[0].mxu0
  %v249 = vadd.f32 %v106, %v248
  %v250 = vpop.f32.mrb[0].mxu0
  %251 = vmatprep.mubr.bf16.mxu0 0
  %252 = vmatmul.mubr.bf16.gmra.mrb[0].mxu0 %v137
  %v253 = vpop.f32.mrb[0].mxu0
  %v254 = vadd.f32 %v106, %v253
  %v255 = vpop.f32.mrb[0].mxu0
  %v256 = vpop.f32.mrb[0].mxu0
  %v257 = vadd.f32 %v106, %v256
  %v258 = vpop.f32.mrb[0].mxu0
  %259 = vmatprep.mubr.bf16.mxu0 0
  %260 = vmatmul.mubr.bf16.gmra.mrb[0].mxu0 %v140
  %v261 = vpop.f32.mrb[0].mxu0
  %v262 = vadd.f32 %v106, %v261
  %v263 = vpop.f32.mrb[0].mxu0
  %v264 = vpop.f32.mrb[0].mxu0
  %v265 = vadd.f32 %v106, %v264
  %v266 = vpop.f32.mrb[0].mxu0
  %267 = vmatprep.mubr.bf16.mxu0 0
  %268 = vmatmul.mubr.bf16.gmra.mrb[0].mxu0 %v143
  %v269 = vpop.f32.mrb[0].mxu0
  %v270 = vadd.f32 %v106, %v269
  %v271 = vpop.f32.mrb[0].mxu0
  %v272 = vpop.f32.mrb[0].mxu0
  %v273 = vadd.f32 %v106, %v272
  %v274 = vpop.f32.mrb[0].mxu0
  %275 = vmatprep.mubr.bf16.mxu0 0
  %276 = vmatmul.mubr.bf16.gmra.mrb[0].mxu0 %v146
  %v277 = vpop.f32.mrb[0].mxu0
  %v278 = vadd.f32 %v106, %v277
  %v279 = vpop.f32.mrb[0].mxu0
  %v280 = vpop.f32.mrb[0].mxu0
  %v281 = vadd.f32 %v106, %v280
  %v282 = vpop.f32.mrb[0].mxu0
  %283 = vmatprep.mubr.bf16.mxu0 0
  %284 = vmatmul.mubr.bf16.gmra.mrb[0].mxu0 %v149
  %v285 = vpop.f32.mrb[0].mxu0
  %v286 = vadd.f32 %v106, %v285
  %v287 = vpop.f32.mrb[0].mxu0
  %v288 = vpop.f32.mrb[0].mxu0
  %v289 = vadd.f32 %v106, %v288
  %v290 = vpop.f32.mrb[0].mxu0
  %291 = vmatprep.mubr.bf16.mxu0 0
  %292 = vmatmul.mubr.bf16.gmra.mrb[0].mxu0 %v152
  %v293 = vpop.f32.mrb[0].mxu0
  %v294 = vadd.f32 %v106, %v293
  %v295 = vpop.f32.mrb[0].mxu0
  %v296 = vpop.f32.mrb[0].mxu0
  %v297 = vadd.f32 %v106, %v296
  %v298 = vpop.f32.mrb[0].mxu0
  %299 = vmatprep.mubr.bf16.mxu0 0
  %300 = vmatmul.mubr.bf16.gmra.mrb[0].mxu0 %v155
  %v301 = vpop.f32.mrb[0].mxu0
  %v302 = vadd.f32 %v106, %v301
  %v303 = vpop.f32.mrb[0].mxu0
  %v304 = vpop.f32.mrb[0].mxu0
  %v305 = vadd.f32 %v106, %v304
  %v306 = vpop.f32.mrb[0].mxu0
  %307 = vmatprep.mubr.bf16.mxu0 0
  %308 = vmatmul.mubr.bf16.gmra.mrb[0].mxu0 %v158
  %v309 = vpop.f32.mrb[0].mxu0
  %v310 = vadd.f32 %v106, %v309
  %v311 = vpop.f32.mrb[0].mxu0
  %v312 = vpop.f32.mrb[0].mxu0
  %v313 = vadd.f32 %v106, %v312
  %v314 = vpop.f32.mrb[0].mxu0
  %315 = vmatprep.mubr.bf16.mxu0 0
  %316 = vmatmul.mubr.bf16.gmra.mrb[0].mxu0 %v161
  %v317 = vpop.f32.mrb[0].mxu0
  %v318 = vadd.f32 %v106, %v317
  %v319 = vpop.f32.mrb[0].mxu0
  %v320 = vpop.f32.mrb[0].mxu0
  %v321 = vadd.f32 %v106, %v320
  %v322 = vpop.f32.mrb[0].mxu0
  %323 = vdwg.mxu0
  %v324 = vld [vmem:[%s3] sm:$0x1]
  %v325 = vld [vmem:[%s4] sm:$0x1]
  %326 = vadd.xlane.f32.xlu0 %v198
  %v327 = vpop.xlane.xlu0 %326
  %328 = vadd.xlane.f32.xlu0 %v201
  %v329 = vpop.xlane.xlu0 %328
  %330 = vadd.xlane.f32.xlu0 %v206
  %v331 = vpop.xlane.xlu0 %330
  %332 = vadd.xlane.f32.xlu0 %v209
  %v333 = vpop.xlane.xlu0 %332
  %334 = vadd.xlane.f32.xlu0 %v214
  %v335 = vpop.xlane.xlu0 %334
  %336 = vadd.xlane.f32.xlu0 %v217
  %v337 = vpop.xlane.xlu0 %336
  %338 = vadd.xlane.f32.xlu0 %v222
  %v339 = vpop.xlane.xlu0 %338
  %340 = vadd.xlane.f32.xlu0 %v225
  %v341 = vpop.xlane.xlu0 %340
  %342 = vadd.xlane.f32.xlu0 %v230
  %v343 = vpop.xlane.xlu0 %342
  %344 = vadd.xlane.f32.xlu0 %v233
  %v345 = vpop.xlane.xlu0 %344
  %346 = vadd.xlane.f32.xlu0 %v238
  %v347 = vpop.xlane.xlu0 %346
  %348 = vadd.xlane.f32.xlu0 %v241
  %v349 = vpop.xlane.xlu0 %348
  %350 = vadd.xlane.f32.xlu0 %v246
  %v351 = vpop.xlane.xlu0 %350
  %352 = vadd.xlane.f32.xlu0 %v249
  %v353 = vpop.xlane.xlu0 %352
  %354 = vadd.xlane.f32.xlu0 %v254
  %v355 = vpop.xlane.xlu0 %354
  %356 = vadd.xlane.f32.xlu0 %v257
  %v357 = vpop.xlane.xlu0 %356
  %358 = vadd.xlane.f32.xlu0 %v262
  %v359 = vpop.xlane.xlu0 %358
  %360 = vadd.xlane.f32.xlu0 %v265
  %v361 = vpop.xlane.xlu0 %360
  %362 = vadd.xlane.f32.xlu0 %v270
  %v363 = vpop.xlane.xlu0 %362
  %364 = vadd.xlane.f32.xlu0 %v273
  %v365 = vpop.xlane.xlu0 %364
  %366 = vadd.xlane.f32.xlu0 %v278
  %v367 = vpop.xlane.xlu0 %366
  %368 = vadd.xlane.f32.xlu0 %v281
  %v369 = vpop.xlane.xlu0 %368
  %370 = vadd.xlane.f32.xlu0 %v286
  %v371 = vpop.xlane.xlu0 %370
  %372 = vadd.xlane.f32.xlu0 %v289
  %v373 = vpop.xlane.xlu0 %372
  %374 = vadd.xlane.f32.xlu0 %v294
  %v375 = vpop.xlane.xlu0 %374
  %376 = vadd.xlane.f32.xlu0 %v297
  %v377 = vpop.xlane.xlu0 %376
  %378 = vadd.xlane.f32.xlu0 %v302
  %v379 = vpop.xlane.xlu0 %378
  %380 = vadd.xlane.f32.xlu0 %v305
  %v381 = vpop.xlane.xlu0 %380
  %382 = vadd.xlane.f32.xlu0 %v310
  %v383 = vpop.xlane.xlu0 %382
  %384 = vadd.xlane.f32.xlu0 %v313
  %v385 = vpop.xlane.xlu0 %384
  %386 = vadd.xlane.f32.xlu0 %v318
  %v387 = vpop.xlane.xlu0 %386
  %388 = vadd.xlane.f32.xlu0 %v321
  %v389 = vpop.xlane.xlu0 %388
  %v390 = vrcp.pop 128.0
  %v391 = vmul.f32 %v327, %v390
  %v392 = vmul.f32 %v329, %v390
  %v393 = vmul.f32 %v331, %v390
  %v394 = vmul.f32 %v333, %v390
  %v395 = vmul.f32 %v335, %v390
  %v396 = vmul.f32 %v337, %v390
  %v397 = vmul.f32 %v339, %v390
  %v398 = vmul.f32 %v341, %v390
  %v399 = vmul.f32 %v343, %v390
  %v400 = vmul.f32 %v345, %v390
  %v401 = vmul.f32 %v347, %v390
  %v402 = vmul.f32 %v349, %v390
  %v403 = vmul.f32 %v351, %v390
  %v404 = vmul.f32 %v353, %v390
  %v405 = vmul.f32 %v355, %v390
  %v406 = vmul.f32 %v357, %v390
  %v407 = vmul.f32 %v359, %v390
  %v408 = vmul.f32 %v361, %v390
  %v409 = vmul.f32 %v363, %v390
  %v410 = vmul.f32 %v365, %v390
  %v411 = vmul.f32 %v367, %v390
  %v412 = vmul.f32 %v369, %v390
  %v413 = vmul.f32 %v371, %v390
  %v414 = vmul.f32 %v373, %v390
  %v415 = vmul.f32 %v375, %v390
  %v416 = vmul.f32 %v377, %v390
  %v417 = vmul.f32 %v379, %v390
  %v418 = vmul.f32 %v381, %v390
  %v419 = vmul.f32 %v383, %v390
  %v420 = vmul.f32 %v385, %v390
  %v421 = vmul.f32 %v387, %v390
  %v422 = vmul.f32 %v389, %v390
  %v423 = vmul.f32 %v198, %v198
  %v424 = vmul.f32 %v201, %v201
  %v425 = vmul.f32 %v206, %v206
  %v426 = vmul.f32 %v209, %v209
  %v427 = vmul.f32 %v214, %v214
  %v428 = vmul.f32 %v217, %v217
  %v429 = vmul.f32 %v222, %v222
  %v430 = vmul.f32 %v225, %v225
  %v431 = vmul.f32 %v230, %v230
  %v432 = vmul.f32 %v233, %v233
  %v433 = vmul.f32 %v238, %v238
  %v434 = vmul.f32 %v241, %v241
  %v435 = vmul.f32 %v246, %v246
  %v436 = vmul.f32 %v249, %v249
  %v437 = vmul.f32 %v254, %v254
  %v438 = vmul.f32 %v257, %v257
  %v439 = vmul.f32 %v262, %v262
  %v440 = vmul.f32 %v265, %v265
  %v441 = vmul.f32 %v270, %v270
  %v442 = vmul.f32 %v273, %v273
  %v443 = vmul.f32 %v278, %v278
  %v444 = vmul.f32 %v281, %v281
  %v445 = vmul.f32 %v286, %v286
  %v446 = vmul.f32 %v289, %v289
  %v447 = vmul.f32 %v294, %v294
  %v448 = vmul.f32 %v297, %v297
  %v449 = vmul.f32 %v302, %v302
  %v450 = vmul.f32 %v305, %v305
  %v451 = vmul.f32 %v310, %v310
  %v452 = vmul.f32 %v313, %v313
  %v453 = vmul.f32 %v318, %v318
  %v454 = vmul.f32 %v321, %v321
  %455 = vadd.xlane.f32.xlu0 %v423
  %v456 = vpop.xlane.xlu0 %455
  %457 = vadd.xlane.f32.xlu0 %v424
  %v458 = vpop.xlane.xlu0 %457
  %459 = vadd.xlane.f32.xlu0 %v425
  %v460 = vpop.xlane.xlu0 %459
  %461 = vadd.xlane.f32.xlu0 %v426
  %v462 = vpop.xlane.xlu0 %461
  %463 = vadd.xlane.f32.xlu0 %v427
  %v464 = vpop.xlane.xlu0 %463
  %465 = vadd.xlane.f32.xlu0 %v428
  %v466 = vpop.xlane.xlu0 %465
  %467 = vadd.xlane.f32.xlu0 %v429
  %v468 = vpop.xlane.xlu0 %467
  %469 = vadd.xlane.f32.xlu0 %v430
  %v470 = vpop.xlane.xlu0 %469
  %471 = vadd.xlane.f32.xlu0 %v431
  %v472 = vpop.xlane.xlu0 %471
  %473 = vadd.xlane.f32.xlu0 %v432
  %v474 = vpop.xlane.xlu0 %473
  %475 = vadd.xlane.f32.xlu0 %v433
  %v476 = vpop.xlane.xlu0 %475
  %477 = vadd.xlane.f32.xlu0 %v434
  %v478 = vpop.xlane.xlu0 %477
  %479 = vadd.xlane.f32.xlu0 %v435
  %v480 = vpop.xlane.xlu0 %479
  %481 = vadd.xlane.f32.xlu0 %v436
  %v482 = vpop.xlane.xlu0 %481
  %483 = vadd.xlane.f32.xlu0 %v437
  %v484 = vpop.xlane.xlu0 %483
  %485 = vadd.xlane.f32.xlu0 %v438
  %v486 = vpop.xlane.xlu0 %485
  %487 = vadd.xlane.f32.xlu0 %v439
  %v488 = vpop.xlane.xlu0 %487
  %489 = vadd.xlane.f32.xlu0 %v440
  %v490 = vpop.xlane.xlu0 %489
  %491 = vadd.xlane.f32.xlu0 %v441
  %v492 = vpop.xlane.xlu0 %491
  %493 = vadd.xlane.f32.xlu0 %v442
  %v494 = vpop.xlane.xlu0 %493
  %495 = vadd.xlane.f32.xlu0 %v443
  %v496 = vpop.xlane.xlu0 %495
  %497 = vadd.xlane.f32.xlu0 %v444
  %v498 = vpop.xlane.xlu0 %497
  %499 = vadd.xlane.f32.xlu0 %v445
  %v500 = vpop.xlane.xlu0 %499
  %501 = vadd.xlane.f32.xlu0 %v446
  %v502 = vpop.xlane.xlu0 %501
  %503 = vadd.xlane.f32.xlu0 %v447
  %v504 = vpop.xlane.xlu0 %503
  %505 = vadd.xlane.f32.xlu0 %v448
  %v506 = vpop.xlane.xlu0 %505
  %507 = vadd.xlane.f32.xlu0 %v449
  %v508 = vpop.xlane.xlu0 %507
  %509 = vadd.xlane.f32.xlu0 %v450
  %v510 = vpop.xlane.xlu0 %509
  %511 = vadd.xlane.f32.xlu0 %v451
  %v512 = vpop.xlane.xlu0 %511
  %513 = vadd.xlane.f32.xlu0 %v452
  %v514 = vpop.xlane.xlu0 %513
  %515 = vadd.xlane.f32.xlu0 %v453
  %v516 = vpop.xlane.xlu0 %515
  %517 = vadd.xlane.f32.xlu0 %v454
  %v518 = vpop.xlane.xlu0 %517
  %v519 = vmul.f32 %v456, %v390
  %v520 = vmul.f32 %v458, %v390
  %v521 = vmul.f32 %v460, %v390
  %v522 = vmul.f32 %v462, %v390
  %v523 = vmul.f32 %v464, %v390
  %v524 = vmul.f32 %v466, %v390
  %v525 = vmul.f32 %v468, %v390
  %v526 = vmul.f32 %v470, %v390
  %v527 = vmul.f32 %v472, %v390
  %v528 = vmul.f32 %v474, %v390
  %v529 = vmul.f32 %v476, %v390
  %v530 = vmul.f32 %v478, %v390
  %v531 = vmul.f32 %v480, %v390
  %v532 = vmul.f32 %v482, %v390
  %v533 = vmul.f32 %v484, %v390
  %v534 = vmul.f32 %v486, %v390
  %v535 = vmul.f32 %v488, %v390
  %v536 = vmul.f32 %v490, %v390
  %v537 = vmul.f32 %v492, %v390
  %v538 = vmul.f32 %v494, %v390
  %v539 = vmul.f32 %v496, %v390
  %v540 = vmul.f32 %v498, %v390
  %v541 = vmul.f32 %v500, %v390
  %v542 = vmul.f32 %v502, %v390
  %v543 = vmul.f32 %v504, %v390
  %v544 = vmul.f32 %v506, %v390
  %v545 = vmul.f32 %v508, %v390
  %v546 = vmul.f32 %v510, %v390
  %v547 = vmul.f32 %v512, %v390
  %v548 = vmul.f32 %v514, %v390
  %v549 = vmul.f32 %v516, %v390
  %v550 = vmul.f32 %v518, %v390
  %v551 = vmul.f32 %v391, %v391
  %v552 = vmul.f32 %v392, %v392
  %v553 = vmul.f32 %v393, %v393
  %v554 = vmul.f32 %v394, %v394
  %v555 = vmul.f32 %v395, %v395
  %v556 = vmul.f32 %v396, %v396
  %v557 = vmul.f32 %v397, %v397
  %v558 = vmul.f32 %v398, %v398
  %v559 = vmul.f32 %v399, %v399
  %v560 = vmul.f32 %v400, %v400
  %v561 = vmul.f32 %v401, %v401
  %v562 = vmul.f32 %v402, %v402
  %v563 = vmul.f32 %v403, %v403
  %v564 = vmul.f32 %v404, %v404
  %v565 = vmul.f32 %v405, %v405
  %v566 = vmul.f32 %v406, %v406
  %v567 = vmul.f32 %v407, %v407
  %v568 = vmul.f32 %v408, %v408
  %v569 = vmul.f32 %v409, %v409
  %v570 = vmul.f32 %v410, %v410
  %v571 = vmul.f32 %v411, %v411
  %v572 = vmul.f32 %v412, %v412
  %v573 = vmul.f32 %v413, %v413
  %v574 = vmul.f32 %v414, %v414
  %v575 = vmul.f32 %v415, %v415
  %v576 = vmul.f32 %v416, %v416
  %v577 = vmul.f32 %v417, %v417
  %v578 = vmul.f32 %v418, %v418
  %v579 = vmul.f32 %v419, %v419
  %v580 = vmul.f32 %v420, %v420
  %v581 = vmul.f32 %v421, %v421
  %v582 = vmul.f32 %v422, %v422
  %v583 = vsub.f32 %v519, %v551
  %v584 = vsub.f32 %v520, %v552
  %v585 = vsub.f32 %v521, %v553
  %v586 = vsub.f32 %v522, %v554
  %v587 = vsub.f32 %v523, %v555
  %v588 = vsub.f32 %v524, %v556
  %v589 = vsub.f32 %v525, %v557
  %v590 = vsub.f32 %v526, %v558
  %v591 = vsub.f32 %v527, %v559
  %v592 = vsub.f32 %v528, %v560
  %v593 = vsub.f32 %v529, %v561
  %v594 = vsub.f32 %v530, %v562
  %v595 = vsub.f32 %v531, %v563
  %v596 = vsub.f32 %v532, %v564
  %v597 = vsub.f32 %v533, %v565
  %v598 = vsub.f32 %v534, %v566
  %v599 = vsub.f32 %v535, %v567
  %v600 = vsub.f32 %v536, %v568
  %v601 = vsub.f32 %v537, %v569
  %v602 = vsub.f32 %v538, %v570
  %v603 = vsub.f32 %v539, %v571
  %v604 = vsub.f32 %v540, %v572
  %v605 = vsub.f32 %v541, %v573
  %v606 = vsub.f32 %v542, %v574
  %v607 = vsub.f32 %v543, %v575
  %v608 = vsub.f32 %v544, %v576
  %v609 = vsub.f32 %v545, %v577
  %v610 = vsub.f32 %v546, %v578
  %v611 = vsub.f32 %v547, %v579
  %v612 = vsub.f32 %v548, %v580
  %v613 = vsub.f32 %v549, %v581
  %v614 = vsub.f32 %v550, %v582
  %v615 = vmax.f32 %v583, 0.0
  %v616 = vmax.f32 %v584, 0.0
  %v617 = vmax.f32 %v585, 0.0
  %v618 = vmax.f32 %v586, 0.0
  %v619 = vmax.f32 %v587, 0.0
  %v620 = vmax.f32 %v588, 0.0
  %v621 = vmax.f32 %v589, 0.0
  %v622 = vmax.f32 %v590, 0.0
  %v623 = vmax.f32 %v591, 0.0
  %v624 = vmax.f32 %v592, 0.0
  %v625 = vmax.f32 %v593, 0.0
  %v626 = vmax.f32 %v594, 0.0
  %v627 = vmax.f32 %v595, 0.0
  %v628 = vmax.f32 %v596, 0.0
  %v629 = vmax.f32 %v597, 0.0
  %v630 = vmax.f32 %v598, 0.0
  %v631 = vmax.f32 %v599, 0.0
  %v632 = vmax.f32 %v600, 0.0
  %v633 = vmax.f32 %v601, 0.0
  %v634 = vmax.f32 %v602, 0.0
  %v635 = vmax.f32 %v603, 0.0
  %v636 = vmax.f32 %v604, 0.0
  %v637 = vmax.f32 %v605, 0.0
  %v638 = vmax.f32 %v606, 0.0
  %v639 = vmax.f32 %v607, 0.0
  %v640 = vmax.f32 %v608, 0.0
  %v641 = vmax.f32 %v609, 0.0
  %v642 = vmax.f32 %v610, 0.0
  %v643 = vmax.f32 %v611, 0.0
  %v644 = vmax.f32 %v612, 0.0
  %v645 = vmax.f32 %v613, 0.0
  %v646 = vmax.f32 %v614, 0.0
  %v647 = vadd.f32 %v615, 1e-05
  %v648 = vadd.f32 %v616, 1e-05
  %v649 = vadd.f32 %v617, 1e-05
  %v650 = vadd.f32 %v618, 1e-05
  %v651 = vadd.f32 %v619, 1e-05
  %v652 = vadd.f32 %v620, 1e-05
  %v653 = vadd.f32 %v621, 1e-05
  %v654 = vadd.f32 %v622, 1e-05
  %v655 = vadd.f32 %v623, 1e-05
  %v656 = vadd.f32 %v624, 1e-05
  %v657 = vadd.f32 %v625, 1e-05
  %v658 = vadd.f32 %v626, 1e-05
  %v659 = vadd.f32 %v627, 1e-05
  %v660 = vadd.f32 %v628, 1e-05
  %v661 = vadd.f32 %v629, 1e-05
  %v662 = vadd.f32 %v630, 1e-05
  %v663 = vadd.f32 %v631, 1e-05
  %v664 = vadd.f32 %v632, 1e-05
  %v665 = vadd.f32 %v633, 1e-05
  %v666 = vadd.f32 %v634, 1e-05
  %v667 = vadd.f32 %v635, 1e-05
  %v668 = vadd.f32 %v636, 1e-05
  %v669 = vadd.f32 %v637, 1e-05
  %v670 = vadd.f32 %v638, 1e-05
  %v671 = vadd.f32 %v639, 1e-05
  %v672 = vadd.f32 %v640, 1e-05
  %v673 = vadd.f32 %v641, 1e-05
  %v674 = vadd.f32 %v642, 1e-05
  %v675 = vadd.f32 %v643, 1e-05
  %v676 = vadd.f32 %v644, 1e-05
  %v677 = vadd.f32 %v645, 1e-05
  %v678 = vadd.f32 %v646, 1e-05
  %v679 = vrsqrt.pop %v647
  %v680 = vrsqrt.pop %v648
  %v681 = vrsqrt.pop %v649
  %v682 = vrsqrt.pop %v650
  %v683 = vrsqrt.pop %v651
  %v684 = vrsqrt.pop %v652
  %v685 = vrsqrt.pop %v653
  %v686 = vrsqrt.pop %v654
  %v687 = vrsqrt.pop %v655
  %v688 = vrsqrt.pop %v656
  %v689 = vrsqrt.pop %v657
  %v690 = vrsqrt.pop %v658
  %v691 = vrsqrt.pop %v659
  %v692 = vrsqrt.pop %v660
  %v693 = vrsqrt.pop %v661
  %v694 = vrsqrt.pop %v662
  %v695 = vrsqrt.pop %v663
  %v696 = vrsqrt.pop %v664
  %v697 = vrsqrt.pop %v665
  %v698 = vrsqrt.pop %v666
  %v699 = vrsqrt.pop %v667
  %v700 = vrsqrt.pop %v668
  %v701 = vrsqrt.pop %v669
  %v702 = vrsqrt.pop %v670
  %v703 = vrsqrt.pop %v671
  %v704 = vrsqrt.pop %v672
  %v705 = vrsqrt.pop %v673
  %v706 = vrsqrt.pop %v674
  %v707 = vrsqrt.pop %v675
  %v708 = vrsqrt.pop %v676
  %v709 = vrsqrt.pop %v677
  %v710 = vrsqrt.pop %v678
  %v711 = vsub.f32 %v198, %v391
  %v712 = vsub.f32 %v201, %v392
  %v713 = vsub.f32 %v206, %v393
  %v714 = vsub.f32 %v209, %v394
  %v715 = vsub.f32 %v214, %v395
  %v716 = vsub.f32 %v217, %v396
  %v717 = vsub.f32 %v222, %v397
  %v718 = vsub.f32 %v225, %v398
  %v719 = vsub.f32 %v230, %v399
  %v720 = vsub.f32 %v233, %v400
  %v721 = vsub.f32 %v238, %v401
  %v722 = vsub.f32 %v241, %v402
  %v723 = vsub.f32 %v246, %v403
  %v724 = vsub.f32 %v249, %v404
  %v725 = vsub.f32 %v254, %v405
  %v726 = vsub.f32 %v257, %v406
  %v727 = vsub.f32 %v262, %v407
  %v728 = vsub.f32 %v265, %v408
  %v729 = vsub.f32 %v270, %v409
  %v730 = vsub.f32 %v273, %v410
  %v731 = vsub.f32 %v278, %v411
  %v732 = vsub.f32 %v281, %v412
  %v733 = vsub.f32 %v286, %v413
  %v734 = vsub.f32 %v289, %v414
  %v735 = vsub.f32 %v294, %v415
  %v736 = vsub.f32 %v297, %v416
  %v737 = vsub.f32 %v302, %v417
  %v738 = vsub.f32 %v305, %v418
  %v739 = vsub.f32 %v310, %v419
  %v740 = vsub.f32 %v313, %v420
  %v741 = vsub.f32 %v318, %v421
  %v742 = vsub.f32 %v321, %v422
  %v743 = vmul.f32 %v711, %v679
  %v744 = vmul.f32 %v712, %v680
  %v745 = vmul.f32 %v713, %v681
  %v746 = vmul.f32 %v714, %v682
  %v747 = vmul.f32 %v715, %v683
  %v748 = vmul.f32 %v716, %v684
  %v749 = vmul.f32 %v717, %v685
  %v750 = vmul.f32 %v718, %v686
  %v751 = vmul.f32 %v719, %v687
  %v752 = vmul.f32 %v720, %v688
  %v753 = vmul.f32 %v721, %v689
  %v754 = vmul.f32 %v722, %v690
  %v755 = vmul.f32 %v723, %v691
  %v756 = vmul.f32 %v724, %v692
  %v757 = vmul.f32 %v725, %v693
  %v758 = vmul.f32 %v726, %v694
  %v759 = vmul.f32 %v727, %v695
  %v760 = vmul.f32 %v728, %v696
  %v761 = vmul.f32 %v729, %v697
  %v762 = vmul.f32 %v730, %v698
  %v763 = vmul.f32 %v731, %v699
  %v764 = vmul.f32 %v732, %v700
  %v765 = vmul.f32 %v733, %v701
  %v766 = vmul.f32 %v734, %v702
  %v767 = vmul.f32 %v735, %v703
  %v768 = vmul.f32 %v736, %v704
  %v769 = vmul.f32 %v737, %v705
  %v770 = vmul.f32 %v738, %v706
  %v771 = vmul.f32 %v739, %v707
  %v772 = vmul.f32 %v740, %v708
  %v773 = vmul.f32 %v741, %v709
  %v774 = vmul.f32 %v742, %v710
  %v776 = vlaneseq
  %v777 = vshrl.u32 %v776, 7
  %v778 = vsub.s32 0, %v777
  %v779 = vrot.slane %v324, %v778
  %v781 = vmul.f32 %v743, %v779
  %v782 = vmul.f32 %v744, %v779
  %v783 = vmul.f32 %v745, %v779
  %v784 = vmul.f32 %v746, %v779
  %v785 = vmul.f32 %v747, %v779
  %v786 = vmul.f32 %v748, %v779
  %v787 = vmul.f32 %v749, %v779
  %v788 = vmul.f32 %v750, %v779
  %v789 = vmul.f32 %v751, %v779
  %v790 = vmul.f32 %v752, %v779
  %v791 = vmul.f32 %v753, %v779
  %v792 = vmul.f32 %v754, %v779
  %v793 = vmul.f32 %v755, %v779
  %v794 = vmul.f32 %v756, %v779
  %v795 = vmul.f32 %v757, %v779
  %v796 = vmul.f32 %v758, %v779
  %v797 = vmul.f32 %v759, %v779
  %v798 = vmul.f32 %v760, %v779
  %v799 = vmul.f32 %v761, %v779
  %v800 = vmul.f32 %v762, %v779
  %v801 = vmul.f32 %v763, %v779
  %v802 = vmul.f32 %v764, %v779
  %v803 = vmul.f32 %v765, %v779
  %v804 = vmul.f32 %v766, %v779
  %v805 = vmul.f32 %v767, %v779
  %v806 = vmul.f32 %v768, %v779
  %v807 = vmul.f32 %v769, %v779
  %v808 = vmul.f32 %v770, %v779
  %v809 = vmul.f32 %v771, %v779
  %v810 = vmul.f32 %v772, %v779
  %v811 = vmul.f32 %v773, %v779
  %v812 = vmul.f32 %v774, %v779
  %v814 = vlaneseq
  %v815 = vshrl.u32 %v814, 7
  %v816 = vsub.s32 0, %v815
  %v817 = vrot.slane %v325, %v816
  %v819 = vadd.f32 %v781, %v817
  %v820 = vadd.f32 %v782, %v817
  %v821 = vadd.f32 %v783, %v817
  %v822 = vadd.f32 %v784, %v817
  %v823 = vadd.f32 %v785, %v817
  %v824 = vadd.f32 %v786, %v817
  %v825 = vadd.f32 %v787, %v817
  %v826 = vadd.f32 %v788, %v817
  %v827 = vadd.f32 %v789, %v817
  %v828 = vadd.f32 %v790, %v817
  %v829 = vadd.f32 %v791, %v817
  %v830 = vadd.f32 %v792, %v817
  %v831 = vadd.f32 %v793, %v817
  %v832 = vadd.f32 %v794, %v817
  %v833 = vadd.f32 %v795, %v817
  %v834 = vadd.f32 %v796, %v817
  %v835 = vadd.f32 %v797, %v817
  %v836 = vadd.f32 %v798, %v817
  %v837 = vadd.f32 %v799, %v817
  %v838 = vadd.f32 %v800, %v817
  %v839 = vadd.f32 %v801, %v817
  %v840 = vadd.f32 %v802, %v817
  %v841 = vadd.f32 %v803, %v817
  %v842 = vadd.f32 %v804, %v817
  %v843 = vadd.f32 %v805, %v817
  %v844 = vadd.f32 %v806, %v817
  %v845 = vadd.f32 %v807, %v817
  %v846 = vadd.f32 %v808, %v817
  %v847 = vadd.f32 %v809, %v817
  %v848 = vadd.f32 %v810, %v817
  %v849 = vadd.f32 %v811, %v817
  %v850 = vadd.f32 %v812, %v817
  %v851 = vmax.f32 %v819, 0.0
  %v852 = vmax.f32 %v820, 0.0
  %v853 = vmax.f32 %v821, 0.0
  %v854 = vmax.f32 %v822, 0.0
  %v855 = vmax.f32 %v823, 0.0
  %v856 = vmax.f32 %v824, 0.0
  %v857 = vmax.f32 %v825, 0.0
  %v858 = vmax.f32 %v826, 0.0
  %v859 = vmax.f32 %v827, 0.0
  %v860 = vmax.f32 %v828, 0.0
  %v861 = vmax.f32 %v829, 0.0
  %v862 = vmax.f32 %v830, 0.0
  %v863 = vmax.f32 %v831, 0.0
  %v864 = vmax.f32 %v832, 0.0
  %v865 = vmax.f32 %v833, 0.0
  %v866 = vmax.f32 %v834, 0.0
  %v867 = vmax.f32 %v835, 0.0
  %v868 = vmax.f32 %v836, 0.0
  %v869 = vmax.f32 %v837, 0.0
  %v870 = vmax.f32 %v838, 0.0
  %v871 = vmax.f32 %v839, 0.0
  %v872 = vmax.f32 %v840, 0.0
  %v873 = vmax.f32 %v841, 0.0
  %v874 = vmax.f32 %v842, 0.0
  %v875 = vmax.f32 %v843, 0.0
  %v876 = vmax.f32 %v844, 0.0
  %v877 = vmax.f32 %v845, 0.0
  %v878 = vmax.f32 %v846, 0.0
  %v879 = vmax.f32 %v847, 0.0
  %v880 = vmax.f32 %v848, 0.0
  %v881 = vmax.f32 %v849, 0.0
  %v882 = vmax.f32 %v850, 0.0
  %v883 = vpack.c.bf16 %v852, %v851
  %v884 = vpack.c.bf16 %v854, %v853
  %v885 = vpack.c.bf16 %v856, %v855
  %v886 = vpack.c.bf16 %v858, %v857
  %v887 = vpack.c.bf16 %v860, %v859
  %v888 = vpack.c.bf16 %v862, %v861
  %v889 = vpack.c.bf16 %v864, %v863
  %v890 = vpack.c.bf16 %v866, %v865
  %v891 = vpack.c.bf16 %v868, %v867
  %v892 = vpack.c.bf16 %v870, %v869
  %v893 = vpack.c.bf16 %v872, %v871
  %v894 = vpack.c.bf16 %v874, %v873
  %v895 = vpack.c.bf16 %v876, %v875
  %v896 = vpack.c.bf16 %v878, %v877
  %v897 = vpack.c.bf16 %v880, %v879
  %v898 = vpack.c.bf16 %v882, %v881
  %v899 = vld [vmem:[%s5] sm:$0xff]
  %v900 = vld [vmem:[%s5 + $0x8] sm:$0xff]
  %v901 = vld [vmem:[%s5 + $0x10] sm:$0xff]
  %v902 = vld [vmem:[%s5 + $0x18] sm:$0xff]
  %v903 = vld [vmem:[%s5 + $0x20] sm:$0xff]
  %v904 = vld [vmem:[%s5 + $0x28] sm:$0xff]
  %v905 = vld [vmem:[%s5 + $0x30] sm:$0xff]
  %v906 = vld [vmem:[%s5 + $0x38] sm:$0xff]
  %v907 = vld [vmem:[%s5 + $0x40] sm:$0xff]
  %v908 = vld [vmem:[%s5 + $0x48] sm:$0xff]
  %v909 = vld [vmem:[%s5 + $0x50] sm:$0xff]
  %v910 = vld [vmem:[%s5 + $0x58] sm:$0xff]
  %v911 = vld [vmem:[%s5 + $0x60] sm:$0xff]
  %v912 = vld [vmem:[%s5 + $0x68] sm:$0xff]
  %v913 = vld [vmem:[%s5 + $0x70] sm:$0xff]
  %v914 = vld [vmem:[%s5 + $0x78] sm:$0xff]
  %v915 = vld [vmem:[%s6] sm:$0x3]
  %v917 = vlaneseq
  %v918 = vshrl.u32 %v917, 7
  %v919 = vsub.s32 0, %v918
  %v920 = vrot.slane %v915, %v919
  %v921 = vlaneseq
  %v922 = vshrl.u32 %v921, 7
  %v923 = vsub.s32 1, %v922
  %v924 = vrot.slane %v915, %v923
  %v943 = vunpack.c.l.b16 %v899
  %v944 = vunpack.c.h.b16 %v899
  %v945 = vunpack.c.l.b16 %v900
  %v946 = vunpack.c.h.b16 %v900
  %v947 = vunpack.c.l.b16 %v901
  %v948 = vunpack.c.h.b16 %v901
  %v949 = vunpack.c.l.b16 %v902
  %v950 = vunpack.c.h.b16 %v902
  %v951 = vunpack.c.l.b16 %v903
  %v952 = vunpack.c.h.b16 %v903
  %v953 = vunpack.c.l.b16 %v904
  %v954 = vunpack.c.h.b16 %v904
  %v955 = vunpack.c.l.b16 %v905
  %v956 = vunpack.c.h.b16 %v905
  %v957 = vunpack.c.l.b16 %v906
  %v958 = vunpack.c.h.b16 %v906
  %v959 = vunpack.c.l.b16 %v907
  %v960 = vunpack.c.h.b16 %v907
  %v961 = vunpack.c.l.b16 %v908
  %v962 = vunpack.c.h.b16 %v908
  %v963 = vunpack.c.l.b16 %v909
  %v964 = vunpack.c.h.b16 %v909
  %v965 = vunpack.c.l.b16 %v910
  %v966 = vunpack.c.h.b16 %v910
  %v967 = vunpack.c.l.b16 %v911
  %v968 = vunpack.c.h.b16 %v911
  %v969 = vunpack.c.l.b16 %v912
  %v970 = vunpack.c.h.b16 %v912
  %v971 = vunpack.c.l.b16 %v913
  %v972 = vunpack.c.h.b16 %v913
  %v973 = vunpack.c.l.b16 %v914
  %v974 = vunpack.c.h.b16 %v914
  %v975 = vpack.c.b16 %v945, %v943
  %v976 = vpack.c.b16 %v946, %v944
  %v977 = vpack.c.b16 %v949, %v947
  %v978 = vpack.c.b16 %v950, %v948
  %v979 = vpack.c.b16 %v953, %v951
  %v980 = vpack.c.b16 %v954, %v952
  %v981 = vpack.c.b16 %v957, %v955
  %v982 = vpack.c.b16 %v958, %v956
  %v983 = vpack.c.b16 %v961, %v959
  %v984 = vpack.c.b16 %v962, %v960
  %v985 = vpack.c.b16 %v965, %v963
  %v986 = vpack.c.b16 %v966, %v964
  %v987 = vpack.c.b16 %v969, %v967
  %v988 = vpack.c.b16 %v970, %v968
  %v989 = vpack.c.b16 %v973, %v971
  %v990 = vpack.c.b16 %v974, %v972
  %1007 = vmatprep.subr.bf16.mxu0 %v976
  %1008 = vmatpush1.bf16.msra.mxu0 %v975
  %1009 = vmatprep.subr.bf16.mxu0 %v978
  %1010 = vmatpush1.bf16.msra.mxu0 %v977
  %1011 = vmatprep.subr.bf16.mxu0 %v980
  %1012 = vmatpush1.bf16.msra.mxu0 %v979
  %1013 = vmatprep.subr.bf16.mxu0 %v982
  %1014 = vmatpush1.bf16.msra.mxu0 %v981
  %1015 = vmatprep.subr.bf16.mxu0 %v984
  %1016 = vmatpush1.bf16.msra.mxu0 %v983
  %1017 = vmatprep.subr.bf16.mxu0 %v986
  %1018 = vmatpush1.bf16.msra.mxu0 %v985
  %1019 = vmatprep.subr.bf16.mxu0 %v988
  %1020 = vmatpush1.bf16.msra.mxu0 %v987
  %1021 = vmatprep.subr.bf16.mxu0 %v990
  %1022 = vmatpush1.bf16.msra.mxu0 %v989
  %1023 = vmatprep.subr.bf16.mxu0 0
  %1024 = vmatpush1.bf16.msra.mxu0 0
  %1025 = vmatprep.subr.bf16.mxu0 0
  %1026 = vmatpush1.bf16.msra.mxu0 0
  %1027 = vmatprep.subr.bf16.mxu0 0
  %1028 = vmatpush1.bf16.msra.mxu0 0
  %1029 = vmatprep.subr.bf16.mxu0 0
  %1030 = vmatpush1.bf16.msra.mxu0 0
  %1031 = vmatprep.subr.bf16.mxu0 0
  %1032 = vmatpush1.bf16.msra.mxu0 0
  %1033 = vmatprep.subr.bf16.mxu0 0
  %1034 = vmatpush1.bf16.msra.mxu0 0
  %1035 = vmatprep.subr.bf16.mxu0 0
  %1036 = vmatpush1.bf16.msra.mxu0 0
  %1037 = vmatprep.subr.bf16.mxu0 0
  %1038 = vmatpush1.bf16.msra.mxu0 0
  %1039 = vmatprep.mubr.bf16.mxu0 0
  %1040 = vmatmul.mubr.bf16.gmra.mrb[0].mxu0 %v883
  %v1041 = vpop.f32.mrb[0].mxu0
  %v1042 = vadd.f32 %v920, %v1041
  %v1043 = vpop.f32.mrb[0].mxu0
  %v1044 = vadd.f32 %v924, %v1043
  %v1045 = vpop.f32.mrb[0].mxu0
  %v1046 = vadd.f32 %v920, %v1045
  %v1047 = vpop.f32.mrb[0].mxu0
  %v1048 = vadd.f32 %v924, %v1047
  %1049 = vmatprep.mubr.bf16.mxu0 0
  %1050 = vmatmul.mubr.bf16.gmra.mrb[0].mxu0 %v884
  %v1051 = vpop.f32.mrb[0].mxu0
  %v1052 = vadd.f32 %v920, %v1051
  %v1053 = vpop.f32.mrb[0].mxu0
  %v1054 = vadd.f32 %v924, %v1053
  %v1055 = vpop.f32.mrb[0].mxu0
  %v1056 = vadd.f32 %v920, %v1055
  %v1057 = vpop.f32.mrb[0].mxu0
  %v1058 = vadd.f32 %v924, %v1057
  %1059 = vmatprep.mubr.bf16.mxu0 0
  %1060 = vmatmul.mubr.bf16.gmra.mrb[0].mxu0 %v885
  %v1061 = vpop.f32.mrb[0].mxu0
  %v1062 = vadd.f32 %v920, %v1061
  %v1063 = vpop.f32.mrb[0].mxu0
  %v1064 = vadd.f32 %v924, %v1063
  %v1065 = vpop.f32.mrb[0].mxu0
  %v1066 = vadd.f32 %v920, %v1065
  %v1067 = vpop.f32.mrb[0].mxu0
  %v1068 = vadd.f32 %v924, %v1067
  %1069 = vmatprep.mubr.bf16.mxu0 0
  %1070 = vmatmul.mubr.bf16.gmra.mrb[0].mxu0 %v886
  %v1071 = vpop.f32.mrb[0].mxu0
  %v1072 = vadd.f32 %v920, %v1071
  %v1073 = vpop.f32.mrb[0].mxu0
  %v1074 = vadd.f32 %v924, %v1073
  %v1075 = vpop.f32.mrb[0].mxu0
  %v1076 = vadd.f32 %v920, %v1075
  %v1077 = vpop.f32.mrb[0].mxu0
  %v1078 = vadd.f32 %v924, %v1077
  %1079 = vmatprep.mubr.bf16.mxu0 0
  %1080 = vmatmul.mubr.bf16.gmra.mrb[0].mxu0 %v887
  %v1081 = vpop.f32.mrb[0].mxu0
  %v1082 = vadd.f32 %v920, %v1081
  %v1083 = vpop.f32.mrb[0].mxu0
  %v1084 = vadd.f32 %v924, %v1083
  %v1085 = vpop.f32.mrb[0].mxu0
  %v1086 = vadd.f32 %v920, %v1085
  %v1087 = vpop.f32.mrb[0].mxu0
  %v1088 = vadd.f32 %v924, %v1087
  %1089 = vmatprep.mubr.bf16.mxu0 0
  %1090 = vmatmul.mubr.bf16.gmra.mrb[0].mxu0 %v888
  %v1091 = vpop.f32.mrb[0].mxu0
  %v1092 = vadd.f32 %v920, %v1091
  %v1093 = vpop.f32.mrb[0].mxu0
  %v1094 = vadd.f32 %v924, %v1093
  %v1095 = vpop.f32.mrb[0].mxu0
  %v1096 = vadd.f32 %v920, %v1095
  %v1097 = vpop.f32.mrb[0].mxu0
  %v1098 = vadd.f32 %v924, %v1097
  %1099 = vmatprep.mubr.bf16.mxu0 0
  %1100 = vmatmul.mubr.bf16.gmra.mrb[0].mxu0 %v889
  %v1101 = vpop.f32.mrb[0].mxu0
  %v1102 = vadd.f32 %v920, %v1101
  %v1103 = vpop.f32.mrb[0].mxu0
  %v1104 = vadd.f32 %v924, %v1103
  %v1105 = vpop.f32.mrb[0].mxu0
  %v1106 = vadd.f32 %v920, %v1105
  %v1107 = vpop.f32.mrb[0].mxu0
  %v1108 = vadd.f32 %v924, %v1107
  %1109 = vmatprep.mubr.bf16.mxu0 0
  %1110 = vmatmul.mubr.bf16.gmra.mrb[0].mxu0 %v890
  %v1111 = vpop.f32.mrb[0].mxu0
  %v1112 = vadd.f32 %v920, %v1111
  %v1113 = vpop.f32.mrb[0].mxu0
  %v1114 = vadd.f32 %v924, %v1113
  %v1115 = vpop.f32.mrb[0].mxu0
  %v1116 = vadd.f32 %v920, %v1115
  %v1117 = vpop.f32.mrb[0].mxu0
  %v1118 = vadd.f32 %v924, %v1117
  %1119 = vmatprep.mubr.bf16.mxu0 0
  %1120 = vmatmul.mubr.bf16.gmra.mrb[0].mxu0 %v891
  %v1121 = vpop.f32.mrb[0].mxu0
  %v1122 = vadd.f32 %v920, %v1121
  %v1123 = vpop.f32.mrb[0].mxu0
  %v1124 = vadd.f32 %v924, %v1123
  %v1125 = vpop.f32.mrb[0].mxu0
  %v1126 = vadd.f32 %v920, %v1125
  %v1127 = vpop.f32.mrb[0].mxu0
  %v1128 = vadd.f32 %v924, %v1127
  %1129 = vmatprep.mubr.bf16.mxu0 0
  %1130 = vmatmul.mubr.bf16.gmra.mrb[0].mxu0 %v892
  %v1131 = vpop.f32.mrb[0].mxu0
  %v1132 = vadd.f32 %v920, %v1131
  %v1133 = vpop.f32.mrb[0].mxu0
  %v1134 = vadd.f32 %v924, %v1133
  %v1135 = vpop.f32.mrb[0].mxu0
  %v1136 = vadd.f32 %v920, %v1135
  %v1137 = vpop.f32.mrb[0].mxu0
  %v1138 = vadd.f32 %v924, %v1137
  %1139 = vmatprep.mubr.bf16.mxu0 0
  %1140 = vmatmul.mubr.bf16.gmra.mrb[0].mxu0 %v893
  %v1141 = vpop.f32.mrb[0].mxu0
  %v1142 = vadd.f32 %v920, %v1141
  %v1143 = vpop.f32.mrb[0].mxu0
  %v1144 = vadd.f32 %v924, %v1143
  %v1145 = vpop.f32.mrb[0].mxu0
  %v1146 = vadd.f32 %v920, %v1145
  %v1147 = vpop.f32.mrb[0].mxu0
  %v1148 = vadd.f32 %v924, %v1147
  %1149 = vmatprep.mubr.bf16.mxu0 0
  %1150 = vmatmul.mubr.bf16.gmra.mrb[0].mxu0 %v894
  %v1151 = vpop.f32.mrb[0].mxu0
  %v1152 = vadd.f32 %v920, %v1151
  %v1153 = vpop.f32.mrb[0].mxu0
  %v1154 = vadd.f32 %v924, %v1153
  %v1155 = vpop.f32.mrb[0].mxu0
  %v1156 = vadd.f32 %v920, %v1155
  %v1157 = vpop.f32.mrb[0].mxu0
  %v1158 = vadd.f32 %v924, %v1157
  %1159 = vmatprep.mubr.bf16.mxu0 0
  %1160 = vmatmul.mubr.bf16.gmra.mrb[0].mxu0 %v895
  %v1161 = vpop.f32.mrb[0].mxu0
  %v1162 = vadd.f32 %v920, %v1161
  %v1163 = vpop.f32.mrb[0].mxu0
  %v1164 = vadd.f32 %v924, %v1163
  %v1165 = vpop.f32.mrb[0].mxu0
  %v1166 = vadd.f32 %v920, %v1165
  %v1167 = vpop.f32.mrb[0].mxu0
  %v1168 = vadd.f32 %v924, %v1167
  %1169 = vmatprep.mubr.bf16.mxu0 0
  %1170 = vmatmul.mubr.bf16.gmra.mrb[0].mxu0 %v896
  %v1171 = vpop.f32.mrb[0].mxu0
  %v1172 = vadd.f32 %v920, %v1171
  %v1173 = vpop.f32.mrb[0].mxu0
  %v1174 = vadd.f32 %v924, %v1173
  %v1175 = vpop.f32.mrb[0].mxu0
  %v1176 = vadd.f32 %v920, %v1175
  %v1177 = vpop.f32.mrb[0].mxu0
  %v1178 = vadd.f32 %v924, %v1177
  %1179 = vmatprep.mubr.bf16.mxu0 0
  %1180 = vmatmul.mubr.bf16.gmra.mrb[0].mxu0 %v897
  %v1181 = vpop.f32.mrb[0].mxu0
  %v1182 = vadd.f32 %v920, %v1181
  %v1183 = vpop.f32.mrb[0].mxu0
  %v1184 = vadd.f32 %v924, %v1183
  %v1185 = vpop.f32.mrb[0].mxu0
  %v1186 = vadd.f32 %v920, %v1185
  %v1187 = vpop.f32.mrb[0].mxu0
  %v1188 = vadd.f32 %v924, %v1187
  %1189 = vmatprep.mubr.bf16.mxu0 0
  %1190 = vmatmul.mubr.bf16.gmra.mrb[0].mxu0 %v898
  %v1191 = vpop.f32.mrb[0].mxu0
  %v1192 = vadd.f32 %v920, %v1191
  %v1193 = vpop.f32.mrb[0].mxu0
  %v1194 = vadd.f32 %v924, %v1193
  %v1195 = vpop.f32.mrb[0].mxu0
  %v1196 = vadd.f32 %v920, %v1195
  %v1197 = vpop.f32.mrb[0].mxu0
  %v1198 = vadd.f32 %v924, %v1197
  %1199 = vdwg.mxu0
  %v1200 = vld [vmem:[%s7] sm:$0x3]
  %v1201 = vld [vmem:[%s8] sm:$0x3]
  %v1202 = vadd.f32 %v1042, %v1044
  %1203 = vadd.xlane.f32.xlu0 %v1202
  %v1204 = vpop.xlane.xlu0 %1203
  %v1205 = vadd.f32 %v1046, %v1048
  %1206 = vadd.xlane.f32.xlu0 %v1205
  %v1207 = vpop.xlane.xlu0 %1206
  %v1208 = vadd.f32 %v1052, %v1054
  %1209 = vadd.xlane.f32.xlu0 %v1208
  %v1210 = vpop.xlane.xlu0 %1209
  %v1211 = vadd.f32 %v1056, %v1058
  %1212 = vadd.xlane.f32.xlu0 %v1211
  %v1213 = vpop.xlane.xlu0 %1212
  %v1214 = vadd.f32 %v1062, %v1064
  %1215 = vadd.xlane.f32.xlu0 %v1214
  %v1216 = vpop.xlane.xlu0 %1215
  %v1217 = vadd.f32 %v1066, %v1068
  %1218 = vadd.xlane.f32.xlu0 %v1217
  %v1219 = vpop.xlane.xlu0 %1218
  %v1220 = vadd.f32 %v1072, %v1074
  %1221 = vadd.xlane.f32.xlu0 %v1220
  %v1222 = vpop.xlane.xlu0 %1221
  %v1223 = vadd.f32 %v1076, %v1078
  %1224 = vadd.xlane.f32.xlu0 %v1223
  %v1225 = vpop.xlane.xlu0 %1224
  %v1226 = vadd.f32 %v1082, %v1084
  %1227 = vadd.xlane.f32.xlu0 %v1226
  %v1228 = vpop.xlane.xlu0 %1227
  %v1229 = vadd.f32 %v1086, %v1088
  %1230 = vadd.xlane.f32.xlu0 %v1229
  %v1231 = vpop.xlane.xlu0 %1230
  %v1232 = vadd.f32 %v1092, %v1094
  %1233 = vadd.xlane.f32.xlu0 %v1232
  %v1234 = vpop.xlane.xlu0 %1233
  %v1235 = vadd.f32 %v1096, %v1098
  %1236 = vadd.xlane.f32.xlu0 %v1235
  %v1237 = vpop.xlane.xlu0 %1236
  %v1238 = vadd.f32 %v1102, %v1104
  %1239 = vadd.xlane.f32.xlu0 %v1238
  %v1240 = vpop.xlane.xlu0 %1239
  %v1241 = vadd.f32 %v1106, %v1108
  %1242 = vadd.xlane.f32.xlu0 %v1241
  %v1243 = vpop.xlane.xlu0 %1242
  %v1244 = vadd.f32 %v1112, %v1114
  %1245 = vadd.xlane.f32.xlu0 %v1244
  %v1246 = vpop.xlane.xlu0 %1245
  %v1247 = vadd.f32 %v1116, %v1118
  %1248 = vadd.xlane.f32.xlu0 %v1247
  %v1249 = vpop.xlane.xlu0 %1248
  %v1250 = vadd.f32 %v1122, %v1124
  %1251 = vadd.xlane.f32.xlu0 %v1250
  %v1252 = vpop.xlane.xlu0 %1251
  %v1253 = vadd.f32 %v1126, %v1128
  %1254 = vadd.xlane.f32.xlu0 %v1253
  %v1255 = vpop.xlane.xlu0 %1254
  %v1256 = vadd.f32 %v1132, %v1134
  %1257 = vadd.xlane.f32.xlu0 %v1256
  %v1258 = vpop.xlane.xlu0 %1257
  %v1259 = vadd.f32 %v1136, %v1138
  %1260 = vadd.xlane.f32.xlu0 %v1259
  %v1261 = vpop.xlane.xlu0 %1260
  %v1262 = vadd.f32 %v1142, %v1144
  %1263 = vadd.xlane.f32.xlu0 %v1262
  %v1264 = vpop.xlane.xlu0 %1263
  %v1265 = vadd.f32 %v1146, %v1148
  %1266 = vadd.xlane.f32.xlu0 %v1265
  %v1267 = vpop.xlane.xlu0 %1266
  %v1268 = vadd.f32 %v1152, %v1154
  %1269 = vadd.xlane.f32.xlu0 %v1268
  %v1270 = vpop.xlane.xlu0 %1269
  %v1271 = vadd.f32 %v1156, %v1158
  %1272 = vadd.xlane.f32.xlu0 %v1271
  %v1273 = vpop.xlane.xlu0 %1272
  %v1274 = vadd.f32 %v1162, %v1164
  %1275 = vadd.xlane.f32.xlu0 %v1274
  %v1276 = vpop.xlane.xlu0 %1275
  %v1277 = vadd.f32 %v1166, %v1168
  %1278 = vadd.xlane.f32.xlu0 %v1277
  %v1279 = vpop.xlane.xlu0 %1278
  %v1280 = vadd.f32 %v1172, %v1174
  %1281 = vadd.xlane.f32.xlu0 %v1280
  %v1282 = vpop.xlane.xlu0 %1281
  %v1283 = vadd.f32 %v1176, %v1178
  %1284 = vadd.xlane.f32.xlu0 %v1283
  %v1285 = vpop.xlane.xlu0 %1284
  %v1286 = vadd.f32 %v1182, %v1184
  %1287 = vadd.xlane.f32.xlu0 %v1286
  %v1288 = vpop.xlane.xlu0 %1287
  %v1289 = vadd.f32 %v1186, %v1188
  %1290 = vadd.xlane.f32.xlu0 %v1289
  %v1291 = vpop.xlane.xlu0 %1290
  %v1292 = vadd.f32 %v1192, %v1194
  %1293 = vadd.xlane.f32.xlu0 %v1292
  %v1294 = vpop.xlane.xlu0 %1293
  %v1295 = vadd.f32 %v1196, %v1198
  %1296 = vadd.xlane.f32.xlu0 %v1295
  %v1297 = vpop.xlane.xlu0 %1296
  %v1298 = vrcp.pop 256.0
  %v1299 = vmul.f32 %v1204, %v1298
  %v1300 = vmul.f32 %v1207, %v1298
  %v1301 = vmul.f32 %v1210, %v1298
  %v1302 = vmul.f32 %v1213, %v1298
  %v1303 = vmul.f32 %v1216, %v1298
  %v1304 = vmul.f32 %v1219, %v1298
  %v1305 = vmul.f32 %v1222, %v1298
  %v1306 = vmul.f32 %v1225, %v1298
  %v1307 = vmul.f32 %v1228, %v1298
  %v1308 = vmul.f32 %v1231, %v1298
  %v1309 = vmul.f32 %v1234, %v1298
  %v1310 = vmul.f32 %v1237, %v1298
  %v1311 = vmul.f32 %v1240, %v1298
  %v1312 = vmul.f32 %v1243, %v1298
  %v1313 = vmul.f32 %v1246, %v1298
  %v1314 = vmul.f32 %v1249, %v1298
  %v1315 = vmul.f32 %v1252, %v1298
  %v1316 = vmul.f32 %v1255, %v1298
  %v1317 = vmul.f32 %v1258, %v1298
  %v1318 = vmul.f32 %v1261, %v1298
  %v1319 = vmul.f32 %v1264, %v1298
  %v1320 = vmul.f32 %v1267, %v1298
  %v1321 = vmul.f32 %v1270, %v1298
  %v1322 = vmul.f32 %v1273, %v1298
  %v1323 = vmul.f32 %v1276, %v1298
  %v1324 = vmul.f32 %v1279, %v1298
  %v1325 = vmul.f32 %v1282, %v1298
  %v1326 = vmul.f32 %v1285, %v1298
  %v1327 = vmul.f32 %v1288, %v1298
  %v1328 = vmul.f32 %v1291, %v1298
  %v1329 = vmul.f32 %v1294, %v1298
  %v1330 = vmul.f32 %v1297, %v1298
  %v1331 = vmul.f32 %v1042, %v1042
  %v1332 = vmul.f32 %v1044, %v1044
  %v1333 = vmul.f32 %v1046, %v1046
  %v1334 = vmul.f32 %v1048, %v1048
  %v1335 = vmul.f32 %v1052, %v1052
  %v1336 = vmul.f32 %v1054, %v1054
  %v1337 = vmul.f32 %v1056, %v1056
  %v1338 = vmul.f32 %v1058, %v1058
  %v1339 = vmul.f32 %v1062, %v1062
  %v1340 = vmul.f32 %v1064, %v1064
  %v1341 = vmul.f32 %v1066, %v1066
  %v1342 = vmul.f32 %v1068, %v1068
  %v1343 = vmul.f32 %v1072, %v1072
  %v1344 = vmul.f32 %v1074, %v1074
  %v1345 = vmul.f32 %v1076, %v1076
  %v1346 = vmul.f32 %v1078, %v1078
  %v1347 = vmul.f32 %v1082, %v1082
  %v1348 = vmul.f32 %v1084, %v1084
  %v1349 = vmul.f32 %v1086, %v1086
  %v1350 = vmul.f32 %v1088, %v1088
  %v1351 = vmul.f32 %v1092, %v1092
  %v1352 = vmul.f32 %v1094, %v1094
  %v1353 = vmul.f32 %v1096, %v1096
  %v1354 = vmul.f32 %v1098, %v1098
  %v1355 = vmul.f32 %v1102, %v1102
  %v1356 = vmul.f32 %v1104, %v1104
  %v1357 = vmul.f32 %v1106, %v1106
  %v1358 = vmul.f32 %v1108, %v1108
  %v1359 = vmul.f32 %v1112, %v1112
  %v1360 = vmul.f32 %v1114, %v1114
  %v1361 = vmul.f32 %v1116, %v1116
  %v1362 = vmul.f32 %v1118, %v1118
  %v1363 = vmul.f32 %v1122, %v1122
  %v1364 = vmul.f32 %v1124, %v1124
  %v1365 = vmul.f32 %v1126, %v1126
  %v1366 = vmul.f32 %v1128, %v1128
  %v1367 = vmul.f32 %v1132, %v1132
  %v1368 = vmul.f32 %v1134, %v1134
  %v1369 = vmul.f32 %v1136, %v1136
  %v1370 = vmul.f32 %v1138, %v1138
  %v1371 = vmul.f32 %v1142, %v1142
  %v1372 = vmul.f32 %v1144, %v1144
  %v1373 = vmul.f32 %v1146, %v1146
  %v1374 = vmul.f32 %v1148, %v1148
  %v1375 = vmul.f32 %v1152, %v1152
  %v1376 = vmul.f32 %v1154, %v1154
  %v1377 = vmul.f32 %v1156, %v1156
  %v1378 = vmul.f32 %v1158, %v1158
  %v1379 = vmul.f32 %v1162, %v1162
  %v1380 = vmul.f32 %v1164, %v1164
  %v1381 = vmul.f32 %v1166, %v1166
  %v1382 = vmul.f32 %v1168, %v1168
  %v1383 = vmul.f32 %v1172, %v1172
  %v1384 = vmul.f32 %v1174, %v1174
  %v1385 = vmul.f32 %v1176, %v1176
  %v1386 = vmul.f32 %v1178, %v1178
  %v1387 = vmul.f32 %v1182, %v1182
  %v1388 = vmul.f32 %v1184, %v1184
  %v1389 = vmul.f32 %v1186, %v1186
  %v1390 = vmul.f32 %v1188, %v1188
  %v1391 = vmul.f32 %v1192, %v1192
  %v1392 = vmul.f32 %v1194, %v1194
  %v1393 = vmul.f32 %v1196, %v1196
  %v1394 = vmul.f32 %v1198, %v1198
  %v1395 = vadd.f32 %v1331, %v1332
  %1396 = vadd.xlane.f32.xlu0 %v1395
  %v1397 = vpop.xlane.xlu0 %1396
  %v1398 = vadd.f32 %v1333, %v1334
  %1399 = vadd.xlane.f32.xlu0 %v1398
  %v1400 = vpop.xlane.xlu0 %1399
  %v1401 = vadd.f32 %v1335, %v1336
  %1402 = vadd.xlane.f32.xlu0 %v1401
  %v1403 = vpop.xlane.xlu0 %1402
  %v1404 = vadd.f32 %v1337, %v1338
  %1405 = vadd.xlane.f32.xlu0 %v1404
  %v1406 = vpop.xlane.xlu0 %1405
  %v1407 = vadd.f32 %v1339, %v1340
  %1408 = vadd.xlane.f32.xlu0 %v1407
  %v1409 = vpop.xlane.xlu0 %1408
  %v1410 = vadd.f32 %v1341, %v1342
  %1411 = vadd.xlane.f32.xlu0 %v1410
  %v1412 = vpop.xlane.xlu0 %1411
  %v1413 = vadd.f32 %v1343, %v1344
  %1414 = vadd.xlane.f32.xlu0 %v1413
  %v1415 = vpop.xlane.xlu0 %1414
  %v1416 = vadd.f32 %v1345, %v1346
  %1417 = vadd.xlane.f32.xlu0 %v1416
  %v1418 = vpop.xlane.xlu0 %1417
  %v1419 = vadd.f32 %v1347, %v1348
  %1420 = vadd.xlane.f32.xlu0 %v1419
  %v1421 = vpop.xlane.xlu0 %1420
  %v1422 = vadd.f32 %v1349, %v1350
  %1423 = vadd.xlane.f32.xlu0 %v1422
  %v1424 = vpop.xlane.xlu0 %1423
  %v1425 = vadd.f32 %v1351, %v1352
  %1426 = vadd.xlane.f32.xlu0 %v1425
  %v1427 = vpop.xlane.xlu0 %1426
  %v1428 = vadd.f32 %v1353, %v1354
  %1429 = vadd.xlane.f32.xlu0 %v1428
  %v1430 = vpop.xlane.xlu0 %1429
  %v1431 = vadd.f32 %v1355, %v1356
  %1432 = vadd.xlane.f32.xlu0 %v1431
  %v1433 = vpop.xlane.xlu0 %1432
  %v1434 = vadd.f32 %v1357, %v1358
  %1435 = vadd.xlane.f32.xlu0 %v1434
  %v1436 = vpop.xlane.xlu0 %1435
  %v1437 = vadd.f32 %v1359, %v1360
  %1438 = vadd.xlane.f32.xlu0 %v1437
  %v1439 = vpop.xlane.xlu0 %1438
  %v1440 = vadd.f32 %v1361, %v1362
  %1441 = vadd.xlane.f32.xlu0 %v1440
  %v1442 = vpop.xlane.xlu0 %1441
  %v1443 = vadd.f32 %v1363, %v1364
  %1444 = vadd.xlane.f32.xlu0 %v1443
  %v1445 = vpop.xlane.xlu0 %1444
  %v1446 = vadd.f32 %v1365, %v1366
  %1447 = vadd.xlane.f32.xlu0 %v1446
  %v1448 = vpop.xlane.xlu0 %1447
  %v1449 = vadd.f32 %v1367, %v1368
  %1450 = vadd.xlane.f32.xlu0 %v1449
  %v1451 = vpop.xlane.xlu0 %1450
  %v1452 = vadd.f32 %v1369, %v1370
  %1453 = vadd.xlane.f32.xlu0 %v1452
  %v1454 = vpop.xlane.xlu0 %1453
  %v1455 = vadd.f32 %v1371, %v1372
  %1456 = vadd.xlane.f32.xlu0 %v1455
  %v1457 = vpop.xlane.xlu0 %1456
  %v1458 = vadd.f32 %v1373, %v1374
  %1459 = vadd.xlane.f32.xlu0 %v1458
  %v1460 = vpop.xlane.xlu0 %1459
  %v1461 = vadd.f32 %v1375, %v1376
  %1462 = vadd.xlane.f32.xlu0 %v1461
  %v1463 = vpop.xlane.xlu0 %1462
  %v1464 = vadd.f32 %v1377, %v1378
  %1465 = vadd.xlane.f32.xlu0 %v1464
  %v1466 = vpop.xlane.xlu0 %1465
  %v1467 = vadd.f32 %v1379, %v1380
  %1468 = vadd.xlane.f32.xlu0 %v1467
  %v1469 = vpop.xlane.xlu0 %1468
  %v1470 = vadd.f32 %v1381, %v1382
  %1471 = vadd.xlane.f32.xlu0 %v1470
  %v1472 = vpop.xlane.xlu0 %1471
  %v1473 = vadd.f32 %v1383, %v1384
  %1474 = vadd.xlane.f32.xlu0 %v1473
  %v1475 = vpop.xlane.xlu0 %1474
  %v1476 = vadd.f32 %v1385, %v1386
  %1477 = vadd.xlane.f32.xlu0 %v1476
  %v1478 = vpop.xlane.xlu0 %1477
  %v1479 = vadd.f32 %v1387, %v1388
  %1480 = vadd.xlane.f32.xlu0 %v1479
  %v1481 = vpop.xlane.xlu0 %1480
  %v1482 = vadd.f32 %v1389, %v1390
  %1483 = vadd.xlane.f32.xlu0 %v1482
  %v1484 = vpop.xlane.xlu0 %1483
  %v1485 = vadd.f32 %v1391, %v1392
  %1486 = vadd.xlane.f32.xlu0 %v1485
  %v1487 = vpop.xlane.xlu0 %1486
  %v1488 = vadd.f32 %v1393, %v1394
  %1489 = vadd.xlane.f32.xlu0 %v1488
  %v1490 = vpop.xlane.xlu0 %1489
  %v1491 = vmul.f32 %v1397, %v1298
  %v1492 = vmul.f32 %v1400, %v1298
  %v1493 = vmul.f32 %v1403, %v1298
  %v1494 = vmul.f32 %v1406, %v1298
  %v1495 = vmul.f32 %v1409, %v1298
  %v1496 = vmul.f32 %v1412, %v1298
  %v1497 = vmul.f32 %v1415, %v1298
  %v1498 = vmul.f32 %v1418, %v1298
  %v1499 = vmul.f32 %v1421, %v1298
  %v1500 = vmul.f32 %v1424, %v1298
  %v1501 = vmul.f32 %v1427, %v1298
  %v1502 = vmul.f32 %v1430, %v1298
  %v1503 = vmul.f32 %v1433, %v1298
  %v1504 = vmul.f32 %v1436, %v1298
  %v1505 = vmul.f32 %v1439, %v1298
  %v1506 = vmul.f32 %v1442, %v1298
  %v1507 = vmul.f32 %v1445, %v1298
  %v1508 = vmul.f32 %v1448, %v1298
  %v1509 = vmul.f32 %v1451, %v1298
  %v1510 = vmul.f32 %v1454, %v1298
  %v1511 = vmul.f32 %v1457, %v1298
  %v1512 = vmul.f32 %v1460, %v1298
  %v1513 = vmul.f32 %v1463, %v1298
  %v1514 = vmul.f32 %v1466, %v1298
  %v1515 = vmul.f32 %v1469, %v1298
  %v1516 = vmul.f32 %v1472, %v1298
  %v1517 = vmul.f32 %v1475, %v1298
  %v1518 = vmul.f32 %v1478, %v1298
  %v1519 = vmul.f32 %v1481, %v1298
  %v1520 = vmul.f32 %v1484, %v1298
  %v1521 = vmul.f32 %v1487, %v1298
  %v1522 = vmul.f32 %v1490, %v1298
  %v1523 = vmul.f32 %v1299, %v1299
  %v1524 = vmul.f32 %v1300, %v1300
  %v1525 = vmul.f32 %v1301, %v1301
  %v1526 = vmul.f32 %v1302, %v1302
  %v1527 = vmul.f32 %v1303, %v1303
  %v1528 = vmul.f32 %v1304, %v1304
  %v1529 = vmul.f32 %v1305, %v1305
  %v1530 = vmul.f32 %v1306, %v1306
  %v1531 = vmul.f32 %v1307, %v1307
  %v1532 = vmul.f32 %v1308, %v1308
  %v1533 = vmul.f32 %v1309, %v1309
  %v1534 = vmul.f32 %v1310, %v1310
  %v1535 = vmul.f32 %v1311, %v1311
  %v1536 = vmul.f32 %v1312, %v1312
  %v1537 = vmul.f32 %v1313, %v1313
  %v1538 = vmul.f32 %v1314, %v1314
  %v1539 = vmul.f32 %v1315, %v1315
  %v1540 = vmul.f32 %v1316, %v1316
  %v1541 = vmul.f32 %v1317, %v1317
  %v1542 = vmul.f32 %v1318, %v1318
  %v1543 = vmul.f32 %v1319, %v1319
  %v1544 = vmul.f32 %v1320, %v1320
  %v1545 = vmul.f32 %v1321, %v1321
  %v1546 = vmul.f32 %v1322, %v1322
  %v1547 = vmul.f32 %v1323, %v1323
  %v1548 = vmul.f32 %v1324, %v1324
  %v1549 = vmul.f32 %v1325, %v1325
  %v1550 = vmul.f32 %v1326, %v1326
  %v1551 = vmul.f32 %v1327, %v1327
  %v1552 = vmul.f32 %v1328, %v1328
  %v1553 = vmul.f32 %v1329, %v1329
  %v1554 = vmul.f32 %v1330, %v1330
  %v1555 = vsub.f32 %v1491, %v1523
  %v1556 = vsub.f32 %v1492, %v1524
  %v1557 = vsub.f32 %v1493, %v1525
  %v1558 = vsub.f32 %v1494, %v1526
  %v1559 = vsub.f32 %v1495, %v1527
  %v1560 = vsub.f32 %v1496, %v1528
  %v1561 = vsub.f32 %v1497, %v1529
  %v1562 = vsub.f32 %v1498, %v1530
  %v1563 = vsub.f32 %v1499, %v1531
  %v1564 = vsub.f32 %v1500, %v1532
  %v1565 = vsub.f32 %v1501, %v1533
  %v1566 = vsub.f32 %v1502, %v1534
  %v1567 = vsub.f32 %v1503, %v1535
  %v1568 = vsub.f32 %v1504, %v1536
  %v1569 = vsub.f32 %v1505, %v1537
  %v1570 = vsub.f32 %v1506, %v1538
  %v1571 = vsub.f32 %v1507, %v1539
  %v1572 = vsub.f32 %v1508, %v1540
  %v1573 = vsub.f32 %v1509, %v1541
  %v1574 = vsub.f32 %v1510, %v1542
  %v1575 = vsub.f32 %v1511, %v1543
  %v1576 = vsub.f32 %v1512, %v1544
  %v1577 = vsub.f32 %v1513, %v1545
  %v1578 = vsub.f32 %v1514, %v1546
  %v1579 = vsub.f32 %v1515, %v1547
  %v1580 = vsub.f32 %v1516, %v1548
  %v1581 = vsub.f32 %v1517, %v1549
  %v1582 = vsub.f32 %v1518, %v1550
  %v1583 = vsub.f32 %v1519, %v1551
  %v1584 = vsub.f32 %v1520, %v1552
  %v1585 = vsub.f32 %v1521, %v1553
  %v1586 = vsub.f32 %v1522, %v1554
  %v1587 = vmax.f32 %v1555, 0.0
  %v1588 = vmax.f32 %v1556, 0.0
  %v1589 = vmax.f32 %v1557, 0.0
  %v1590 = vmax.f32 %v1558, 0.0
  %v1591 = vmax.f32 %v1559, 0.0
  %v1592 = vmax.f32 %v1560, 0.0
  %v1593 = vmax.f32 %v1561, 0.0
  %v1594 = vmax.f32 %v1562, 0.0
  %v1595 = vmax.f32 %v1563, 0.0
  %v1596 = vmax.f32 %v1564, 0.0
  %v1597 = vmax.f32 %v1565, 0.0
  %v1598 = vmax.f32 %v1566, 0.0
  %v1599 = vmax.f32 %v1567, 0.0
  %v1600 = vmax.f32 %v1568, 0.0
  %v1601 = vmax.f32 %v1569, 0.0
  %v1602 = vmax.f32 %v1570, 0.0
  %v1603 = vmax.f32 %v1571, 0.0
  %v1604 = vmax.f32 %v1572, 0.0
  %v1605 = vmax.f32 %v1573, 0.0
  %v1606 = vmax.f32 %v1574, 0.0
  %v1607 = vmax.f32 %v1575, 0.0
  %v1608 = vmax.f32 %v1576, 0.0
  %v1609 = vmax.f32 %v1577, 0.0
  %v1610 = vmax.f32 %v1578, 0.0
  %v1611 = vmax.f32 %v1579, 0.0
  %v1612 = vmax.f32 %v1580, 0.0
  %v1613 = vmax.f32 %v1581, 0.0
  %v1614 = vmax.f32 %v1582, 0.0
  %v1615 = vmax.f32 %v1583, 0.0
  %v1616 = vmax.f32 %v1584, 0.0
  %v1617 = vmax.f32 %v1585, 0.0
  %v1618 = vmax.f32 %v1586, 0.0
  %v1619 = vadd.f32 %v1587, 1e-05
  %v1620 = vadd.f32 %v1588, 1e-05
  %v1621 = vadd.f32 %v1589, 1e-05
  %v1622 = vadd.f32 %v1590, 1e-05
  %v1623 = vadd.f32 %v1591, 1e-05
  %v1624 = vadd.f32 %v1592, 1e-05
  %v1625 = vadd.f32 %v1593, 1e-05
  %v1626 = vadd.f32 %v1594, 1e-05
  %v1627 = vadd.f32 %v1595, 1e-05
  %v1628 = vadd.f32 %v1596, 1e-05
  %v1629 = vadd.f32 %v1597, 1e-05
  %v1630 = vadd.f32 %v1598, 1e-05
  %v1631 = vadd.f32 %v1599, 1e-05
  %v1632 = vadd.f32 %v1600, 1e-05
  %v1633 = vadd.f32 %v1601, 1e-05
  %v1634 = vadd.f32 %v1602, 1e-05
  %v1635 = vadd.f32 %v1603, 1e-05
  %v1636 = vadd.f32 %v1604, 1e-05
  %v1637 = vadd.f32 %v1605, 1e-05
  %v1638 = vadd.f32 %v1606, 1e-05
  %v1639 = vadd.f32 %v1607, 1e-05
  %v1640 = vadd.f32 %v1608, 1e-05
  %v1641 = vadd.f32 %v1609, 1e-05
  %v1642 = vadd.f32 %v1610, 1e-05
  %v1643 = vadd.f32 %v1611, 1e-05
  %v1644 = vadd.f32 %v1612, 1e-05
  %v1645 = vadd.f32 %v1613, 1e-05
  %v1646 = vadd.f32 %v1614, 1e-05
  %v1647 = vadd.f32 %v1615, 1e-05
  %v1648 = vadd.f32 %v1616, 1e-05
  %v1649 = vadd.f32 %v1617, 1e-05
  %v1650 = vadd.f32 %v1618, 1e-05
  %v1651 = vrsqrt.pop %v1619
  %v1652 = vrsqrt.pop %v1620
  %v1653 = vrsqrt.pop %v1621
  %v1654 = vrsqrt.pop %v1622
  %v1655 = vrsqrt.pop %v1623
  %v1656 = vrsqrt.pop %v1624
  %v1657 = vrsqrt.pop %v1625
  %v1658 = vrsqrt.pop %v1626
  %v1659 = vrsqrt.pop %v1627
  %v1660 = vrsqrt.pop %v1628
  %v1661 = vrsqrt.pop %v1629
  %v1662 = vrsqrt.pop %v1630
  %v1663 = vrsqrt.pop %v1631
  %v1664 = vrsqrt.pop %v1632
  %v1665 = vrsqrt.pop %v1633
  %v1666 = vrsqrt.pop %v1634
  %v1667 = vrsqrt.pop %v1635
  %v1668 = vrsqrt.pop %v1636
  %v1669 = vrsqrt.pop %v1637
  %v1670 = vrsqrt.pop %v1638
  %v1671 = vrsqrt.pop %v1639
  %v1672 = vrsqrt.pop %v1640
  %v1673 = vrsqrt.pop %v1641
  %v1674 = vrsqrt.pop %v1642
  %v1675 = vrsqrt.pop %v1643
  %v1676 = vrsqrt.pop %v1644
  %v1677 = vrsqrt.pop %v1645
  %v1678 = vrsqrt.pop %v1646
  %v1679 = vrsqrt.pop %v1647
  %v1680 = vrsqrt.pop %v1648
  %v1681 = vrsqrt.pop %v1649
  %v1682 = vrsqrt.pop %v1650
  %v1683 = vsub.f32 %v1042, %v1299
  %v1684 = vsub.f32 %v1044, %v1299
  %v1685 = vsub.f32 %v1046, %v1300
  %v1686 = vsub.f32 %v1048, %v1300
  %v1687 = vsub.f32 %v1052, %v1301
  %v1688 = vsub.f32 %v1054, %v1301
  %v1689 = vsub.f32 %v1056, %v1302
  %v1690 = vsub.f32 %v1058, %v1302
  %v1691 = vsub.f32 %v1062, %v1303
  %v1692 = vsub.f32 %v1064, %v1303
  %v1693 = vsub.f32 %v1066, %v1304
  %v1694 = vsub.f32 %v1068, %v1304
  %v1695 = vsub.f32 %v1072, %v1305
  %v1696 = vsub.f32 %v1074, %v1305
  %v1697 = vsub.f32 %v1076, %v1306
  %v1698 = vsub.f32 %v1078, %v1306
  %v1699 = vsub.f32 %v1082, %v1307
  %v1700 = vsub.f32 %v1084, %v1307
  %v1701 = vsub.f32 %v1086, %v1308
  %v1702 = vsub.f32 %v1088, %v1308
  %v1703 = vsub.f32 %v1092, %v1309
  %v1704 = vsub.f32 %v1094, %v1309
  %v1705 = vsub.f32 %v1096, %v1310
  %v1706 = vsub.f32 %v1098, %v1310
  %v1707 = vsub.f32 %v1102, %v1311
  %v1708 = vsub.f32 %v1104, %v1311
  %v1709 = vsub.f32 %v1106, %v1312
  %v1710 = vsub.f32 %v1108, %v1312
  %v1711 = vsub.f32 %v1112, %v1313
  %v1712 = vsub.f32 %v1114, %v1313
  %v1713 = vsub.f32 %v1116, %v1314
  %v1714 = vsub.f32 %v1118, %v1314
  %v1715 = vsub.f32 %v1122, %v1315
  %v1716 = vsub.f32 %v1124, %v1315
  %v1717 = vsub.f32 %v1126, %v1316
  %v1718 = vsub.f32 %v1128, %v1316
  %v1719 = vsub.f32 %v1132, %v1317
  %v1720 = vsub.f32 %v1134, %v1317
  %v1721 = vsub.f32 %v1136, %v1318
  %v1722 = vsub.f32 %v1138, %v1318
  %v1723 = vsub.f32 %v1142, %v1319
  %v1724 = vsub.f32 %v1144, %v1319
  %v1725 = vsub.f32 %v1146, %v1320
  %v1726 = vsub.f32 %v1148, %v1320
  %v1727 = vsub.f32 %v1152, %v1321
  %v1728 = vsub.f32 %v1154, %v1321
  %v1729 = vsub.f32 %v1156, %v1322
  %v1730 = vsub.f32 %v1158, %v1322
  %v1731 = vsub.f32 %v1162, %v1323
  %v1732 = vsub.f32 %v1164, %v1323
  %v1733 = vsub.f32 %v1166, %v1324
  %v1734 = vsub.f32 %v1168, %v1324
  %v1735 = vsub.f32 %v1172, %v1325
  %v1736 = vsub.f32 %v1174, %v1325
  %v1737 = vsub.f32 %v1176, %v1326
  %v1738 = vsub.f32 %v1178, %v1326
  %v1739 = vsub.f32 %v1182, %v1327
  %v1740 = vsub.f32 %v1184, %v1327
  %v1741 = vsub.f32 %v1186, %v1328
  %v1742 = vsub.f32 %v1188, %v1328
  %v1743 = vsub.f32 %v1192, %v1329
  %v1744 = vsub.f32 %v1194, %v1329
  %v1745 = vsub.f32 %v1196, %v1330
  %v1746 = vsub.f32 %v1198, %v1330
  %v1747 = vmul.f32 %v1683, %v1651
  %v1748 = vmul.f32 %v1684, %v1651
  %v1749 = vmul.f32 %v1685, %v1652
  %v1750 = vmul.f32 %v1686, %v1652
  %v1751 = vmul.f32 %v1687, %v1653
  %v1752 = vmul.f32 %v1688, %v1653
  %v1753 = vmul.f32 %v1689, %v1654
  %v1754 = vmul.f32 %v1690, %v1654
  %v1755 = vmul.f32 %v1691, %v1655
  %v1756 = vmul.f32 %v1692, %v1655
  %v1757 = vmul.f32 %v1693, %v1656
  %v1758 = vmul.f32 %v1694, %v1656
  %v1759 = vmul.f32 %v1695, %v1657
  %v1760 = vmul.f32 %v1696, %v1657
  %v1761 = vmul.f32 %v1697, %v1658
  %v1762 = vmul.f32 %v1698, %v1658
  %v1763 = vmul.f32 %v1699, %v1659
  %v1764 = vmul.f32 %v1700, %v1659
  %v1765 = vmul.f32 %v1701, %v1660
  %v1766 = vmul.f32 %v1702, %v1660
  %v1767 = vmul.f32 %v1703, %v1661
  %v1768 = vmul.f32 %v1704, %v1661
  %v1769 = vmul.f32 %v1705, %v1662
  %v1770 = vmul.f32 %v1706, %v1662
  %v1771 = vmul.f32 %v1707, %v1663
  %v1772 = vmul.f32 %v1708, %v1663
  %v1773 = vmul.f32 %v1709, %v1664
  %v1774 = vmul.f32 %v1710, %v1664
  %v1775 = vmul.f32 %v1711, %v1665
  %v1776 = vmul.f32 %v1712, %v1665
  %v1777 = vmul.f32 %v1713, %v1666
  %v1778 = vmul.f32 %v1714, %v1666
  %v1779 = vmul.f32 %v1715, %v1667
  %v1780 = vmul.f32 %v1716, %v1667
  %v1781 = vmul.f32 %v1717, %v1668
  %v1782 = vmul.f32 %v1718, %v1668
  %v1783 = vmul.f32 %v1719, %v1669
  %v1784 = vmul.f32 %v1720, %v1669
  %v1785 = vmul.f32 %v1721, %v1670
  %v1786 = vmul.f32 %v1722, %v1670
  %v1787 = vmul.f32 %v1723, %v1671
  %v1788 = vmul.f32 %v1724, %v1671
  %v1789 = vmul.f32 %v1725, %v1672
  %v1790 = vmul.f32 %v1726, %v1672
  %v1791 = vmul.f32 %v1727, %v1673
  %v1792 = vmul.f32 %v1728, %v1673
  %v1793 = vmul.f32 %v1729, %v1674
  %v1794 = vmul.f32 %v1730, %v1674
  %v1795 = vmul.f32 %v1731, %v1675
  %v1796 = vmul.f32 %v1732, %v1675
  %v1797 = vmul.f32 %v1733, %v1676
  %v1798 = vmul.f32 %v1734, %v1676
  %v1799 = vmul.f32 %v1735, %v1677
  %v1800 = vmul.f32 %v1736, %v1677
  %v1801 = vmul.f32 %v1737, %v1678
  %v1802 = vmul.f32 %v1738, %v1678
  %v1803 = vmul.f32 %v1739, %v1679
  %v1804 = vmul.f32 %v1740, %v1679
  %v1805 = vmul.f32 %v1741, %v1680
  %v1806 = vmul.f32 %v1742, %v1680
  %v1807 = vmul.f32 %v1743, %v1681
  %v1808 = vmul.f32 %v1744, %v1681
  %v1809 = vmul.f32 %v1745, %v1682
  %v1810 = vmul.f32 %v1746, %v1682
  %v1812 = vlaneseq
  %v1813 = vshrl.u32 %v1812, 7
  %v1814 = vsub.s32 0, %v1813
  %v1815 = vrot.slane %v1200, %v1814
  %v1816 = vlaneseq
  %v1817 = vshrl.u32 %v1816, 7
  %v1818 = vsub.s32 1, %v1817
  %v1819 = vrot.slane %v1200, %v1818
  %v1822 = vmul.f32 %v1747, %v1815
  %v1823 = vmul.f32 %v1748, %v1819
  %v1824 = vmul.f32 %v1749, %v1815
  %v1825 = vmul.f32 %v1750, %v1819
  %v1826 = vmul.f32 %v1751, %v1815
  %v1827 = vmul.f32 %v1752, %v1819
  %v1828 = vmul.f32 %v1753, %v1815
  %v1829 = vmul.f32 %v1754, %v1819
  %v1830 = vmul.f32 %v1755, %v1815
  %v1831 = vmul.f32 %v1756, %v1819
  %v1832 = vmul.f32 %v1757, %v1815
  %v1833 = vmul.f32 %v1758, %v1819
  %v1834 = vmul.f32 %v1759, %v1815
  %v1835 = vmul.f32 %v1760, %v1819
  %v1836 = vmul.f32 %v1761, %v1815
  %v1837 = vmul.f32 %v1762, %v1819
  %v1838 = vmul.f32 %v1763, %v1815
  %v1839 = vmul.f32 %v1764, %v1819
  %v1840 = vmul.f32 %v1765, %v1815
  %v1841 = vmul.f32 %v1766, %v1819
  %v1842 = vmul.f32 %v1767, %v1815
  %v1843 = vmul.f32 %v1768, %v1819
  %v1844 = vmul.f32 %v1769, %v1815
  %v1845 = vmul.f32 %v1770, %v1819
  %v1846 = vmul.f32 %v1771, %v1815
  %v1847 = vmul.f32 %v1772, %v1819
  %v1848 = vmul.f32 %v1773, %v1815
  %v1849 = vmul.f32 %v1774, %v1819
  %v1850 = vmul.f32 %v1775, %v1815
  %v1851 = vmul.f32 %v1776, %v1819
  %v1852 = vmul.f32 %v1777, %v1815
  %v1853 = vmul.f32 %v1778, %v1819
  %v1854 = vmul.f32 %v1779, %v1815
  %v1855 = vmul.f32 %v1780, %v1819
  %v1856 = vmul.f32 %v1781, %v1815
  %v1857 = vmul.f32 %v1782, %v1819
  %v1858 = vmul.f32 %v1783, %v1815
  %v1859 = vmul.f32 %v1784, %v1819
  %v1860 = vmul.f32 %v1785, %v1815
  %v1861 = vmul.f32 %v1786, %v1819
  %v1862 = vmul.f32 %v1787, %v1815
  %v1863 = vmul.f32 %v1788, %v1819
  %v1864 = vmul.f32 %v1789, %v1815
  %v1865 = vmul.f32 %v1790, %v1819
  %v1866 = vmul.f32 %v1791, %v1815
  %v1867 = vmul.f32 %v1792, %v1819
  %v1868 = vmul.f32 %v1793, %v1815
  %v1869 = vmul.f32 %v1794, %v1819
  %v1870 = vmul.f32 %v1795, %v1815
  %v1871 = vmul.f32 %v1796, %v1819
  %v1872 = vmul.f32 %v1797, %v1815
  %v1873 = vmul.f32 %v1798, %v1819
  %v1874 = vmul.f32 %v1799, %v1815
  %v1875 = vmul.f32 %v1800, %v1819
  %v1876 = vmul.f32 %v1801, %v1815
  %v1877 = vmul.f32 %v1802, %v1819
  %v1878 = vmul.f32 %v1803, %v1815
  %v1879 = vmul.f32 %v1804, %v1819
  %v1880 = vmul.f32 %v1805, %v1815
  %v1881 = vmul.f32 %v1806, %v1819
  %v1882 = vmul.f32 %v1807, %v1815
  %v1883 = vmul.f32 %v1808, %v1819
  %v1884 = vmul.f32 %v1809, %v1815
  %v1885 = vmul.f32 %v1810, %v1819
  %v1887 = vlaneseq
  %v1888 = vshrl.u32 %v1887, 7
  %v1889 = vsub.s32 0, %v1888
  %v1890 = vrot.slane %v1201, %v1889
  %v1891 = vlaneseq
  %v1892 = vshrl.u32 %v1891, 7
  %v1893 = vsub.s32 1, %v1892
  %v1894 = vrot.slane %v1201, %v1893
  %v1897 = vadd.f32 %v1822, %v1890
  %v1898 = vadd.f32 %v1823, %v1894
  %v1899 = vadd.f32 %v1824, %v1890
  %v1900 = vadd.f32 %v1825, %v1894
  %v1901 = vadd.f32 %v1826, %v1890
  %v1902 = vadd.f32 %v1827, %v1894
  %v1903 = vadd.f32 %v1828, %v1890
  %v1904 = vadd.f32 %v1829, %v1894
  %v1905 = vadd.f32 %v1830, %v1890
  %v1906 = vadd.f32 %v1831, %v1894
  %v1907 = vadd.f32 %v1832, %v1890
  %v1908 = vadd.f32 %v1833, %v1894
  %v1909 = vadd.f32 %v1834, %v1890
  %v1910 = vadd.f32 %v1835, %v1894
  %v1911 = vadd.f32 %v1836, %v1890
  %v1912 = vadd.f32 %v1837, %v1894
  %v1913 = vadd.f32 %v1838, %v1890
  %v1914 = vadd.f32 %v1839, %v1894
  %v1915 = vadd.f32 %v1840, %v1890
  %v1916 = vadd.f32 %v1841, %v1894
  %v1917 = vadd.f32 %v1842, %v1890
  %v1918 = vadd.f32 %v1843, %v1894
  %v1919 = vadd.f32 %v1844, %v1890
  %v1920 = vadd.f32 %v1845, %v1894
  %v1921 = vadd.f32 %v1846, %v1890
  %v1922 = vadd.f32 %v1847, %v1894
  %v1923 = vadd.f32 %v1848, %v1890
  %v1924 = vadd.f32 %v1849, %v1894
  %v1925 = vadd.f32 %v1850, %v1890
  %v1926 = vadd.f32 %v1851, %v1894
  %v1927 = vadd.f32 %v1852, %v1890
  %v1928 = vadd.f32 %v1853, %v1894
  %v1929 = vadd.f32 %v1854, %v1890
  %v1930 = vadd.f32 %v1855, %v1894
  %v1931 = vadd.f32 %v1856, %v1890
  %v1932 = vadd.f32 %v1857, %v1894
  %v1933 = vadd.f32 %v1858, %v1890
  %v1934 = vadd.f32 %v1859, %v1894
  %v1935 = vadd.f32 %v1860, %v1890
  %v1936 = vadd.f32 %v1861, %v1894
  %v1937 = vadd.f32 %v1862, %v1890
  %v1938 = vadd.f32 %v1863, %v1894
  %v1939 = vadd.f32 %v1864, %v1890
  %v1940 = vadd.f32 %v1865, %v1894
  %v1941 = vadd.f32 %v1866, %v1890
  %v1942 = vadd.f32 %v1867, %v1894
  %v1943 = vadd.f32 %v1868, %v1890
  %v1944 = vadd.f32 %v1869, %v1894
  %v1945 = vadd.f32 %v1870, %v1890
  %v1946 = vadd.f32 %v1871, %v1894
  %v1947 = vadd.f32 %v1872, %v1890
  %v1948 = vadd.f32 %v1873, %v1894
  %v1949 = vadd.f32 %v1874, %v1890
  %v1950 = vadd.f32 %v1875, %v1894
  %v1951 = vadd.f32 %v1876, %v1890
  %v1952 = vadd.f32 %v1877, %v1894
  %v1953 = vadd.f32 %v1878, %v1890
  %v1954 = vadd.f32 %v1879, %v1894
  %v1955 = vadd.f32 %v1880, %v1890
  %v1956 = vadd.f32 %v1881, %v1894
  %v1957 = vadd.f32 %v1882, %v1890
  %v1958 = vadd.f32 %v1883, %v1894
  %v1959 = vadd.f32 %v1884, %v1890
  %v1960 = vadd.f32 %v1885, %v1894
  %v1961 = vmax.f32 %v1897, 0.0
  %v1962 = vmax.f32 %v1898, 0.0
  %v1963 = vmax.f32 %v1899, 0.0
  %v1964 = vmax.f32 %v1900, 0.0
  %v1965 = vmax.f32 %v1901, 0.0
  %v1966 = vmax.f32 %v1902, 0.0
  %v1967 = vmax.f32 %v1903, 0.0
  %v1968 = vmax.f32 %v1904, 0.0
  %v1969 = vmax.f32 %v1905, 0.0
  %v1970 = vmax.f32 %v1906, 0.0
  %v1971 = vmax.f32 %v1907, 0.0
  %v1972 = vmax.f32 %v1908, 0.0
  %v1973 = vmax.f32 %v1909, 0.0
  %v1974 = vmax.f32 %v1910, 0.0
  %v1975 = vmax.f32 %v1911, 0.0
  %v1976 = vmax.f32 %v1912, 0.0
  %v1977 = vmax.f32 %v1913, 0.0
  %v1978 = vmax.f32 %v1914, 0.0
  %v1979 = vmax.f32 %v1915, 0.0
  %v1980 = vmax.f32 %v1916, 0.0
  %v1981 = vmax.f32 %v1917, 0.0
  %v1982 = vmax.f32 %v1918, 0.0
  %v1983 = vmax.f32 %v1919, 0.0
  %v1984 = vmax.f32 %v1920, 0.0
  %v1985 = vmax.f32 %v1921, 0.0
  %v1986 = vmax.f32 %v1922, 0.0
  %v1987 = vmax.f32 %v1923, 0.0
  %v1988 = vmax.f32 %v1924, 0.0
  %v1989 = vmax.f32 %v1925, 0.0
  %v1990 = vmax.f32 %v1926, 0.0
  %v1991 = vmax.f32 %v1927, 0.0
  %v1992 = vmax.f32 %v1928, 0.0
  %v1993 = vmax.f32 %v1929, 0.0
  %v1994 = vmax.f32 %v1930, 0.0
  %v1995 = vmax.f32 %v1931, 0.0
  %v1996 = vmax.f32 %v1932, 0.0
  %v1997 = vmax.f32 %v1933, 0.0
  %v1998 = vmax.f32 %v1934, 0.0
  %v1999 = vmax.f32 %v1935, 0.0
  %v2000 = vmax.f32 %v1936, 0.0
  %v2001 = vmax.f32 %v1937, 0.0
  %v2002 = vmax.f32 %v1938, 0.0
  %v2003 = vmax.f32 %v1939, 0.0
  %v2004 = vmax.f32 %v1940, 0.0
  %v2005 = vmax.f32 %v1941, 0.0
  %v2006 = vmax.f32 %v1942, 0.0
  %v2007 = vmax.f32 %v1943, 0.0
  %v2008 = vmax.f32 %v1944, 0.0
  %v2009 = vmax.f32 %v1945, 0.0
  %v2010 = vmax.f32 %v1946, 0.0
  %v2011 = vmax.f32 %v1947, 0.0
  %v2012 = vmax.f32 %v1948, 0.0
  %v2013 = vmax.f32 %v1949, 0.0
  %v2014 = vmax.f32 %v1950, 0.0
  %v2015 = vmax.f32 %v1951, 0.0
  %v2016 = vmax.f32 %v1952, 0.0
  %v2017 = vmax.f32 %v1953, 0.0
  %v2018 = vmax.f32 %v1954, 0.0
  %v2019 = vmax.f32 %v1955, 0.0
  %v2020 = vmax.f32 %v1956, 0.0
  %v2021 = vmax.f32 %v1957, 0.0
  %v2022 = vmax.f32 %v1958, 0.0
  %v2023 = vmax.f32 %v1959, 0.0
  %v2024 = vmax.f32 %v1960, 0.0
  %v2025 = vpack.c.bf16 %v1963, %v1961
  %v2026 = vpack.c.bf16 %v1964, %v1962
  %v2027 = vpack.c.bf16 %v1967, %v1965
  %v2028 = vpack.c.bf16 %v1968, %v1966
  %v2029 = vpack.c.bf16 %v1971, %v1969
  %v2030 = vpack.c.bf16 %v1972, %v1970
  %v2031 = vpack.c.bf16 %v1975, %v1973
  %v2032 = vpack.c.bf16 %v1976, %v1974
  %v2033 = vpack.c.bf16 %v1979, %v1977
  %v2034 = vpack.c.bf16 %v1980, %v1978
  %v2035 = vpack.c.bf16 %v1983, %v1981
  %v2036 = vpack.c.bf16 %v1984, %v1982
  %v2037 = vpack.c.bf16 %v1987, %v1985
  %v2038 = vpack.c.bf16 %v1988, %v1986
  %v2039 = vpack.c.bf16 %v1991, %v1989
  %v2040 = vpack.c.bf16 %v1992, %v1990
  %v2041 = vpack.c.bf16 %v1995, %v1993
  %v2042 = vpack.c.bf16 %v1996, %v1994
  %v2043 = vpack.c.bf16 %v1999, %v1997
  %v2044 = vpack.c.bf16 %v2000, %v1998
  %v2045 = vpack.c.bf16 %v2003, %v2001
  %v2046 = vpack.c.bf16 %v2004, %v2002
  %v2047 = vpack.c.bf16 %v2007, %v2005
  %v2048 = vpack.c.bf16 %v2008, %v2006
  %v2049 = vpack.c.bf16 %v2011, %v2009
  %v2050 = vpack.c.bf16 %v2012, %v2010
  %v2051 = vpack.c.bf16 %v2015, %v2013
  %v2052 = vpack.c.bf16 %v2016, %v2014
  %v2053 = vpack.c.bf16 %v2019, %v2017
  %v2054 = vpack.c.bf16 %v2020, %v2018
  %v2055 = vpack.c.bf16 %v2023, %v2021
  %v2056 = vpack.c.bf16 %v2024, %v2022
  %v2057 = vld [vmem:[%s9] sm:$0xf]
  %v2058 = vld [vmem:[%s9 + $0x4] sm:$0xf]
  %v2059 = vld [vmem:[%s9 + $0x8] sm:$0xf]
  %v2060 = vld [vmem:[%s9 + $0xc] sm:$0xf]
  %v2061 = vld [vmem:[%s9 + $0x10] sm:$0xf]
  %v2062 = vld [vmem:[%s9 + $0x14] sm:$0xf]
  %v2063 = vld [vmem:[%s9 + $0x18] sm:$0xf]
  %v2064 = vld [vmem:[%s9 + $0x1c] sm:$0xf]
  %v2065 = vld [vmem:[%s9 + $0x20] sm:$0xf]
  %v2066 = vld [vmem:[%s9 + $0x24] sm:$0xf]
  %v2067 = vld [vmem:[%s9 + $0x28] sm:$0xf]
  %v2068 = vld [vmem:[%s9 + $0x2c] sm:$0xf]
  %v2069 = vld [vmem:[%s9 + $0x30] sm:$0xf]
  %v2070 = vld [vmem:[%s9 + $0x34] sm:$0xf]
  %v2071 = vld [vmem:[%s9 + $0x38] sm:$0xf]
  %v2072 = vld [vmem:[%s9 + $0x3c] sm:$0xf]
  %v2073 = vld [vmem:[%s9 + $0x40] sm:$0xf]
  %v2074 = vld [vmem:[%s9 + $0x44] sm:$0xf]
  %v2075 = vld [vmem:[%s9 + $0x48] sm:$0xf]
  %v2076 = vld [vmem:[%s9 + $0x4c] sm:$0xf]
  %v2077 = vld [vmem:[%s9 + $0x50] sm:$0xf]
  %v2078 = vld [vmem:[%s9 + $0x54] sm:$0xf]
  %v2079 = vld [vmem:[%s9 + $0x58] sm:$0xf]
  %v2080 = vld [vmem:[%s9 + $0x5c] sm:$0xf]
  %v2081 = vld [vmem:[%s9 + $0x60] sm:$0xf]
  %v2082 = vld [vmem:[%s9 + $0x64] sm:$0xf]
  %v2083 = vld [vmem:[%s9 + $0x68] sm:$0xf]
  %v2084 = vld [vmem:[%s9 + $0x6c] sm:$0xf]
  %v2085 = vld [vmem:[%s9 + $0x70] sm:$0xf]
  %v2086 = vld [vmem:[%s9 + $0x74] sm:$0xf]
  %v2087 = vld [vmem:[%s9 + $0x78] sm:$0xf]
  %v2088 = vld [vmem:[%s9 + $0x7c] sm:$0xf]
  %v2089 = vld [vmem:[%s10] sm:$0x1]
  %v2091 = vlaneseq
  %v2092 = vshrl.u32 %v2091, 7
  %v2093 = vsub.s32 0, %v2092
  %v2094 = vrot.slane %v2089, %v2093
  %v2128 = vunpack.c.l.b16 %v2057
  %v2129 = vunpack.c.l.b16 %v2058
  %v2130 = vunpack.c.l.b16 %v2059
  %v2131 = vunpack.c.l.b16 %v2060
  %v2132 = vunpack.c.l.b16 %v2061
  %v2133 = vunpack.c.l.b16 %v2062
  %v2134 = vunpack.c.l.b16 %v2063
  %v2135 = vunpack.c.l.b16 %v2064
  %v2136 = vunpack.c.l.b16 %v2065
  %v2137 = vunpack.c.l.b16 %v2066
  %v2138 = vunpack.c.l.b16 %v2067
  %v2139 = vunpack.c.l.b16 %v2068
  %v2140 = vunpack.c.l.b16 %v2069
  %v2141 = vunpack.c.l.b16 %v2070
  %v2142 = vunpack.c.l.b16 %v2071
  %v2143 = vunpack.c.l.b16 %v2072
  %v2144 = vunpack.c.l.b16 %v2073
  %v2145 = vunpack.c.l.b16 %v2074
  %v2146 = vunpack.c.l.b16 %v2075
  %v2147 = vunpack.c.l.b16 %v2076
  %v2148 = vunpack.c.l.b16 %v2077
  %v2149 = vunpack.c.l.b16 %v2078
  %v2150 = vunpack.c.l.b16 %v2079
  %v2151 = vunpack.c.l.b16 %v2080
  %v2152 = vunpack.c.l.b16 %v2081
  %v2153 = vunpack.c.l.b16 %v2082
  %v2154 = vunpack.c.l.b16 %v2083
  %v2155 = vunpack.c.l.b16 %v2084
  %v2156 = vunpack.c.l.b16 %v2085
  %v2157 = vunpack.c.l.b16 %v2086
  %v2158 = vunpack.c.l.b16 %v2087
  %v2159 = vunpack.c.l.b16 %v2088
  %v2160 = vpack.c.b16 %v2129, %v2128
  %v2161 = vpack.c.b16 %v2131, %v2130
  %v2162 = vpack.c.b16 %v2133, %v2132
  %v2163 = vpack.c.b16 %v2135, %v2134
  %v2164 = vpack.c.b16 %v2137, %v2136
  %v2165 = vpack.c.b16 %v2139, %v2138
  %v2166 = vpack.c.b16 %v2141, %v2140
  %v2167 = vpack.c.b16 %v2143, %v2142
  %v2168 = vpack.c.b16 %v2145, %v2144
  %v2169 = vpack.c.b16 %v2147, %v2146
  %v2170 = vpack.c.b16 %v2149, %v2148
  %v2171 = vpack.c.b16 %v2151, %v2150
  %v2172 = vpack.c.b16 %v2153, %v2152
  %v2173 = vpack.c.b16 %v2155, %v2154
  %v2174 = vpack.c.b16 %v2157, %v2156
  %v2175 = vpack.c.b16 %v2159, %v2158
  %2192 = vmatprep.subr.bf16.mxu0 0
  %2193 = vmatpush1.bf16.msra.mxu0 %v2160
  %2194 = vmatprep.subr.bf16.mxu0 0
  %2195 = vmatpush1.bf16.msra.mxu0 %v2161
  %2196 = vmatprep.subr.bf16.mxu0 0
  %2197 = vmatpush1.bf16.msra.mxu0 %v2162
  %2198 = vmatprep.subr.bf16.mxu0 0
  %2199 = vmatpush1.bf16.msra.mxu0 %v2163
  %2200 = vmatprep.subr.bf16.mxu0 0
  %2201 = vmatpush1.bf16.msra.mxu0 %v2164
  %2202 = vmatprep.subr.bf16.mxu0 0
  %2203 = vmatpush1.bf16.msra.mxu0 %v2165
  %2204 = vmatprep.subr.bf16.mxu0 0
  %2205 = vmatpush1.bf16.msra.mxu0 %v2166
  %2206 = vmatprep.subr.bf16.mxu0 0
  %2207 = vmatpush1.bf16.msra.mxu0 %v2167
  %2208 = vmatprep.subr.bf16.mxu0 0
  %2209 = vmatpush1.bf16.msra.mxu0 %v2168
  %2210 = vmatprep.subr.bf16.mxu0 0
  %2211 = vmatpush1.bf16.msra.mxu0 %v2169
  %2212 = vmatprep.subr.bf16.mxu0 0
  %2213 = vmatpush1.bf16.msra.mxu0 %v2170
  %2214 = vmatprep.subr.bf16.mxu0 0
  %2215 = vmatpush1.bf16.msra.mxu0 %v2171
  %2216 = vmatprep.subr.bf16.mxu0 0
  %2217 = vmatpush1.bf16.msra.mxu0 %v2172
  %2218 = vmatprep.subr.bf16.mxu0 0
  %2219 = vmatpush1.bf16.msra.mxu0 %v2173
  %2220 = vmatprep.subr.bf16.mxu0 0
  %2221 = vmatpush1.bf16.msra.mxu0 %v2174
  %2222 = vmatprep.subr.bf16.mxu0 0
  %2223 = vmatpush1.bf16.msra.mxu0 %v2175
  %2224 = vmatprep.mubr.bf16.mxu0 %v2026
  %2225 = vmatmul.mubr.bf16.gmra.mrb[0].mxu0 %v2025
  %v2226 = vpop.f32.mrb[0].mxu0
  %v2227 = vadd.f32 %v2094, %v2226
  %v2228 = vpop.f32.mrb[0].mxu0
  %v2229 = vpop.f32.mrb[0].mxu0
  %v2230 = vadd.f32 %v2094, %v2229
  %v2231 = vpop.f32.mrb[0].mxu0
  %2232 = vmatprep.mubr.bf16.mxu0 %v2028
  %2233 = vmatmul.mubr.bf16.gmra.mrb[0].mxu0 %v2027
  %v2234 = vpop.f32.mrb[0].mxu0
  %v2235 = vadd.f32 %v2094, %v2234
  %v2236 = vpop.f32.mrb[0].mxu0
  %v2237 = vpop.f32.mrb[0].mxu0
  %v2238 = vadd.f32 %v2094, %v2237
  %v2239 = vpop.f32.mrb[0].mxu0
  %2240 = vmatprep.mubr.bf16.mxu0 %v2030
  %2241 = vmatmul.mubr.bf16.gmra.mrb[0].mxu0 %v2029
  %v2242 = vpop.f32.mrb[0].mxu0
  %v2243 = vadd.f32 %v2094, %v2242
  %v2244 = vpop.f32.mrb[0].mxu0
  %v2245 = vpop.f32.mrb[0].mxu0
  %v2246 = vadd.f32 %v2094, %v2245
  %v2247 = vpop.f32.mrb[0].mxu0
  %2248 = vmatprep.mubr.bf16.mxu0 %v2032
  %2249 = vmatmul.mubr.bf16.gmra.mrb[0].mxu0 %v2031
  %v2250 = vpop.f32.mrb[0].mxu0
  %v2251 = vadd.f32 %v2094, %v2250
  %v2252 = vpop.f32.mrb[0].mxu0
  %v2253 = vpop.f32.mrb[0].mxu0
  %v2254 = vadd.f32 %v2094, %v2253
  %v2255 = vpop.f32.mrb[0].mxu0
  %2256 = vmatprep.mubr.bf16.mxu0 %v2034
  %2257 = vmatmul.mubr.bf16.gmra.mrb[0].mxu0 %v2033
  %v2258 = vpop.f32.mrb[0].mxu0
  %v2259 = vadd.f32 %v2094, %v2258
  %v2260 = vpop.f32.mrb[0].mxu0
  %v2261 = vpop.f32.mrb[0].mxu0
  %v2262 = vadd.f32 %v2094, %v2261
  %v2263 = vpop.f32.mrb[0].mxu0
  %2264 = vmatprep.mubr.bf16.mxu0 %v2036
  %2265 = vmatmul.mubr.bf16.gmra.mrb[0].mxu0 %v2035
  %v2266 = vpop.f32.mrb[0].mxu0
  %v2267 = vadd.f32 %v2094, %v2266
  %v2268 = vpop.f32.mrb[0].mxu0
  %v2269 = vpop.f32.mrb[0].mxu0
  %v2270 = vadd.f32 %v2094, %v2269
  %v2271 = vpop.f32.mrb[0].mxu0
  %2272 = vmatprep.mubr.bf16.mxu0 %v2038
  %2273 = vmatmul.mubr.bf16.gmra.mrb[0].mxu0 %v2037
  %v2274 = vpop.f32.mrb[0].mxu0
  %v2275 = vadd.f32 %v2094, %v2274
  %v2276 = vpop.f32.mrb[0].mxu0
  %v2277 = vpop.f32.mrb[0].mxu0
  %v2278 = vadd.f32 %v2094, %v2277
  %v2279 = vpop.f32.mrb[0].mxu0
  %2280 = vmatprep.mubr.bf16.mxu0 %v2040
  %2281 = vmatmul.mubr.bf16.gmra.mrb[0].mxu0 %v2039
  %v2282 = vpop.f32.mrb[0].mxu0
  %v2283 = vadd.f32 %v2094, %v2282
  %v2284 = vpop.f32.mrb[0].mxu0
  %v2285 = vpop.f32.mrb[0].mxu0
  %v2286 = vadd.f32 %v2094, %v2285
  %v2287 = vpop.f32.mrb[0].mxu0
  %2288 = vmatprep.mubr.bf16.mxu0 %v2042
  %2289 = vmatmul.mubr.bf16.gmra.mrb[0].mxu0 %v2041
  %v2290 = vpop.f32.mrb[0].mxu0
  %v2291 = vadd.f32 %v2094, %v2290
  %v2292 = vpop.f32.mrb[0].mxu0
  %v2293 = vpop.f32.mrb[0].mxu0
  %v2294 = vadd.f32 %v2094, %v2293
  %v2295 = vpop.f32.mrb[0].mxu0
  %2296 = vmatprep.mubr.bf16.mxu0 %v2044
  %2297 = vmatmul.mubr.bf16.gmra.mrb[0].mxu0 %v2043
  %v2298 = vpop.f32.mrb[0].mxu0
  %v2299 = vadd.f32 %v2094, %v2298
  %v2300 = vpop.f32.mrb[0].mxu0
  %v2301 = vpop.f32.mrb[0].mxu0
  %v2302 = vadd.f32 %v2094, %v2301
  %v2303 = vpop.f32.mrb[0].mxu0
  %2304 = vmatprep.mubr.bf16.mxu0 %v2046
  %2305 = vmatmul.mubr.bf16.gmra.mrb[0].mxu0 %v2045
  %v2306 = vpop.f32.mrb[0].mxu0
  %v2307 = vadd.f32 %v2094, %v2306
  %v2308 = vpop.f32.mrb[0].mxu0
  %v2309 = vpop.f32.mrb[0].mxu0
  %v2310 = vadd.f32 %v2094, %v2309
  %v2311 = vpop.f32.mrb[0].mxu0
  %2312 = vmatprep.mubr.bf16.mxu0 %v2048
  %2313 = vmatmul.mubr.bf16.gmra.mrb[0].mxu0 %v2047
  %v2314 = vpop.f32.mrb[0].mxu0
  %v2315 = vadd.f32 %v2094, %v2314
  %v2316 = vpop.f32.mrb[0].mxu0
  %v2317 = vpop.f32.mrb[0].mxu0
  %v2318 = vadd.f32 %v2094, %v2317
  %v2319 = vpop.f32.mrb[0].mxu0
  %2320 = vmatprep.mubr.bf16.mxu0 %v2050
  %2321 = vmatmul.mubr.bf16.gmra.mrb[0].mxu0 %v2049
  %v2322 = vpop.f32.mrb[0].mxu0
  %v2323 = vadd.f32 %v2094, %v2322
  %v2324 = vpop.f32.mrb[0].mxu0
  %v2325 = vpop.f32.mrb[0].mxu0
  %v2326 = vadd.f32 %v2094, %v2325
  %v2327 = vpop.f32.mrb[0].mxu0
  %2328 = vmatprep.mubr.bf16.mxu0 %v2052
  %2329 = vmatmul.mubr.bf16.gmra.mrb[0].mxu0 %v2051
  %v2330 = vpop.f32.mrb[0].mxu0
  %v2331 = vadd.f32 %v2094, %v2330
  %v2332 = vpop.f32.mrb[0].mxu0
  %v2333 = vpop.f32.mrb[0].mxu0
  %v2334 = vadd.f32 %v2094, %v2333
  %v2335 = vpop.f32.mrb[0].mxu0
  %2336 = vmatprep.mubr.bf16.mxu0 %v2054
  %2337 = vmatmul.mubr.bf16.gmra.mrb[0].mxu0 %v2053
  %v2338 = vpop.f32.mrb[0].mxu0
  %v2339 = vadd.f32 %v2094, %v2338
  %v2340 = vpop.f32.mrb[0].mxu0
  %v2341 = vpop.f32.mrb[0].mxu0
  %v2342 = vadd.f32 %v2094, %v2341
  %v2343 = vpop.f32.mrb[0].mxu0
  %2344 = vmatprep.mubr.bf16.mxu0 %v2056
  %2345 = vmatmul.mubr.bf16.gmra.mrb[0].mxu0 %v2055
  %v2346 = vpop.f32.mrb[0].mxu0
  %v2347 = vadd.f32 %v2094, %v2346
  %v2348 = vpop.f32.mrb[0].mxu0
  %v2349 = vpop.f32.mrb[0].mxu0
  %v2350 = vadd.f32 %v2094, %v2349
  %v2351 = vpop.f32.mrb[0].mxu0
  %2352 = vdwg.mxu0
  %v2353 = vld [vmem:[%s11] sm:$0x1]
  %v2354 = vld [vmem:[%s12] sm:$0x1]
  %2355 = vadd.xlane.f32.xlu0 %v2227
  %v2356 = vpop.xlane.xlu0 %2355
  %2357 = vadd.xlane.f32.xlu0 %v2230
  %v2358 = vpop.xlane.xlu0 %2357
  %2359 = vadd.xlane.f32.xlu0 %v2235
  %v2360 = vpop.xlane.xlu0 %2359
  %2361 = vadd.xlane.f32.xlu0 %v2238
  %v2362 = vpop.xlane.xlu0 %2361
  %2363 = vadd.xlane.f32.xlu0 %v2243
  %v2364 = vpop.xlane.xlu0 %2363
  %2365 = vadd.xlane.f32.xlu0 %v2246
  %v2366 = vpop.xlane.xlu0 %2365
  %2367 = vadd.xlane.f32.xlu0 %v2251
  %v2368 = vpop.xlane.xlu0 %2367
  %2369 = vadd.xlane.f32.xlu0 %v2254
  %v2370 = vpop.xlane.xlu0 %2369
  %2371 = vadd.xlane.f32.xlu0 %v2259
  %v2372 = vpop.xlane.xlu0 %2371
  %2373 = vadd.xlane.f32.xlu0 %v2262
  %v2374 = vpop.xlane.xlu0 %2373
  %2375 = vadd.xlane.f32.xlu0 %v2267
  %v2376 = vpop.xlane.xlu0 %2375
  %2377 = vadd.xlane.f32.xlu0 %v2270
  %v2378 = vpop.xlane.xlu0 %2377
  %2379 = vadd.xlane.f32.xlu0 %v2275
  %v2380 = vpop.xlane.xlu0 %2379
  %2381 = vadd.xlane.f32.xlu0 %v2278
  %v2382 = vpop.xlane.xlu0 %2381
  %2383 = vadd.xlane.f32.xlu0 %v2283
  %v2384 = vpop.xlane.xlu0 %2383
  %2385 = vadd.xlane.f32.xlu0 %v2286
  %v2386 = vpop.xlane.xlu0 %2385
  %2387 = vadd.xlane.f32.xlu0 %v2291
  %v2388 = vpop.xlane.xlu0 %2387
  %2389 = vadd.xlane.f32.xlu0 %v2294
  %v2390 = vpop.xlane.xlu0 %2389
  %2391 = vadd.xlane.f32.xlu0 %v2299
  %v2392 = vpop.xlane.xlu0 %2391
  %2393 = vadd.xlane.f32.xlu0 %v2302
  %v2394 = vpop.xlane.xlu0 %2393
  %2395 = vadd.xlane.f32.xlu0 %v2307
  %v2396 = vpop.xlane.xlu0 %2395
  %2397 = vadd.xlane.f32.xlu0 %v2310
  %v2398 = vpop.xlane.xlu0 %2397
  %2399 = vadd.xlane.f32.xlu0 %v2315
  %v2400 = vpop.xlane.xlu0 %2399
  %2401 = vadd.xlane.f32.xlu0 %v2318
  %v2402 = vpop.xlane.xlu0 %2401
  %2403 = vadd.xlane.f32.xlu0 %v2323
  %v2404 = vpop.xlane.xlu0 %2403
  %2405 = vadd.xlane.f32.xlu0 %v2326
  %v2406 = vpop.xlane.xlu0 %2405
  %2407 = vadd.xlane.f32.xlu0 %v2331
  %v2408 = vpop.xlane.xlu0 %2407
  %2409 = vadd.xlane.f32.xlu0 %v2334
  %v2410 = vpop.xlane.xlu0 %2409
  %2411 = vadd.xlane.f32.xlu0 %v2339
  %v2412 = vpop.xlane.xlu0 %2411
  %2413 = vadd.xlane.f32.xlu0 %v2342
  %v2414 = vpop.xlane.xlu0 %2413
  %2415 = vadd.xlane.f32.xlu0 %v2347
  %v2416 = vpop.xlane.xlu0 %2415
  %2417 = vadd.xlane.f32.xlu0 %v2350
  %v2418 = vpop.xlane.xlu0 %2417
  %v2419 = vmul.f32 %v2356, %v390
  %v2420 = vmul.f32 %v2358, %v390
  %v2421 = vmul.f32 %v2360, %v390
  %v2422 = vmul.f32 %v2362, %v390
  %v2423 = vmul.f32 %v2364, %v390
  %v2424 = vmul.f32 %v2366, %v390
  %v2425 = vmul.f32 %v2368, %v390
  %v2426 = vmul.f32 %v2370, %v390
  %v2427 = vmul.f32 %v2372, %v390
  %v2428 = vmul.f32 %v2374, %v390
  %v2429 = vmul.f32 %v2376, %v390
  %v2430 = vmul.f32 %v2378, %v390
  %v2431 = vmul.f32 %v2380, %v390
  %v2432 = vmul.f32 %v2382, %v390
  %v2433 = vmul.f32 %v2384, %v390
  %v2434 = vmul.f32 %v2386, %v390
  %v2435 = vmul.f32 %v2388, %v390
  %v2436 = vmul.f32 %v2390, %v390
  %v2437 = vmul.f32 %v2392, %v390
  %v2438 = vmul.f32 %v2394, %v390
  %v2439 = vmul.f32 %v2396, %v390
  %v2440 = vmul.f32 %v2398, %v390
  %v2441 = vmul.f32 %v2400, %v390
  %v2442 = vmul.f32 %v2402, %v390
  %v2443 = vmul.f32 %v2404, %v390
  %v2444 = vmul.f32 %v2406, %v390
  %v2445 = vmul.f32 %v2408, %v390
  %v2446 = vmul.f32 %v2410, %v390
  %v2447 = vmul.f32 %v2412, %v390
  %v2448 = vmul.f32 %v2414, %v390
  %v2449 = vmul.f32 %v2416, %v390
  %v2450 = vmul.f32 %v2418, %v390
  %v2451 = vmul.f32 %v2227, %v2227
  %v2452 = vmul.f32 %v2230, %v2230
  %v2453 = vmul.f32 %v2235, %v2235
  %v2454 = vmul.f32 %v2238, %v2238
  %v2455 = vmul.f32 %v2243, %v2243
  %v2456 = vmul.f32 %v2246, %v2246
  %v2457 = vmul.f32 %v2251, %v2251
  %v2458 = vmul.f32 %v2254, %v2254
  %v2459 = vmul.f32 %v2259, %v2259
  %v2460 = vmul.f32 %v2262, %v2262
  %v2461 = vmul.f32 %v2267, %v2267
  %v2462 = vmul.f32 %v2270, %v2270
  %v2463 = vmul.f32 %v2275, %v2275
  %v2464 = vmul.f32 %v2278, %v2278
  %v2465 = vmul.f32 %v2283, %v2283
  %v2466 = vmul.f32 %v2286, %v2286
  %v2467 = vmul.f32 %v2291, %v2291
  %v2468 = vmul.f32 %v2294, %v2294
  %v2469 = vmul.f32 %v2299, %v2299
  %v2470 = vmul.f32 %v2302, %v2302
  %v2471 = vmul.f32 %v2307, %v2307
  %v2472 = vmul.f32 %v2310, %v2310
  %v2473 = vmul.f32 %v2315, %v2315
  %v2474 = vmul.f32 %v2318, %v2318
  %v2475 = vmul.f32 %v2323, %v2323
  %v2476 = vmul.f32 %v2326, %v2326
  %v2477 = vmul.f32 %v2331, %v2331
  %v2478 = vmul.f32 %v2334, %v2334
  %v2479 = vmul.f32 %v2339, %v2339
  %v2480 = vmul.f32 %v2342, %v2342
  %v2481 = vmul.f32 %v2347, %v2347
  %v2482 = vmul.f32 %v2350, %v2350
  %2483 = vadd.xlane.f32.xlu0 %v2451
  %v2484 = vpop.xlane.xlu0 %2483
  %2485 = vadd.xlane.f32.xlu0 %v2452
  %v2486 = vpop.xlane.xlu0 %2485
  %2487 = vadd.xlane.f32.xlu0 %v2453
  %v2488 = vpop.xlane.xlu0 %2487
  %2489 = vadd.xlane.f32.xlu0 %v2454
  %v2490 = vpop.xlane.xlu0 %2489
  %2491 = vadd.xlane.f32.xlu0 %v2455
  %v2492 = vpop.xlane.xlu0 %2491
  %2493 = vadd.xlane.f32.xlu0 %v2456
  %v2494 = vpop.xlane.xlu0 %2493
  %2495 = vadd.xlane.f32.xlu0 %v2457
  %v2496 = vpop.xlane.xlu0 %2495
  %2497 = vadd.xlane.f32.xlu0 %v2458
  %v2498 = vpop.xlane.xlu0 %2497
  %2499 = vadd.xlane.f32.xlu0 %v2459
  %v2500 = vpop.xlane.xlu0 %2499
  %2501 = vadd.xlane.f32.xlu0 %v2460
  %v2502 = vpop.xlane.xlu0 %2501
  %2503 = vadd.xlane.f32.xlu0 %v2461
  %v2504 = vpop.xlane.xlu0 %2503
  %2505 = vadd.xlane.f32.xlu0 %v2462
  %v2506 = vpop.xlane.xlu0 %2505
  %2507 = vadd.xlane.f32.xlu0 %v2463
  %v2508 = vpop.xlane.xlu0 %2507
  %2509 = vadd.xlane.f32.xlu0 %v2464
  %v2510 = vpop.xlane.xlu0 %2509
  %2511 = vadd.xlane.f32.xlu0 %v2465
  %v2512 = vpop.xlane.xlu0 %2511
  %2513 = vadd.xlane.f32.xlu0 %v2466
  %v2514 = vpop.xlane.xlu0 %2513
  %2515 = vadd.xlane.f32.xlu0 %v2467
  %v2516 = vpop.xlane.xlu0 %2515
  %2517 = vadd.xlane.f32.xlu0 %v2468
  %v2518 = vpop.xlane.xlu0 %2517
  %2519 = vadd.xlane.f32.xlu0 %v2469
  %v2520 = vpop.xlane.xlu0 %2519
  %2521 = vadd.xlane.f32.xlu0 %v2470
  %v2522 = vpop.xlane.xlu0 %2521
  %2523 = vadd.xlane.f32.xlu0 %v2471
  %v2524 = vpop.xlane.xlu0 %2523
  %2525 = vadd.xlane.f32.xlu0 %v2472
  %v2526 = vpop.xlane.xlu0 %2525
  %2527 = vadd.xlane.f32.xlu0 %v2473
  %v2528 = vpop.xlane.xlu0 %2527
  %2529 = vadd.xlane.f32.xlu0 %v2474
  %v2530 = vpop.xlane.xlu0 %2529
  %2531 = vadd.xlane.f32.xlu0 %v2475
  %v2532 = vpop.xlane.xlu0 %2531
  %2533 = vadd.xlane.f32.xlu0 %v2476
  %v2534 = vpop.xlane.xlu0 %2533
  %2535 = vadd.xlane.f32.xlu0 %v2477
  %v2536 = vpop.xlane.xlu0 %2535
  %2537 = vadd.xlane.f32.xlu0 %v2478
  %v2538 = vpop.xlane.xlu0 %2537
  %2539 = vadd.xlane.f32.xlu0 %v2479
  %v2540 = vpop.xlane.xlu0 %2539
  %2541 = vadd.xlane.f32.xlu0 %v2480
  %v2542 = vpop.xlane.xlu0 %2541
  %2543 = vadd.xlane.f32.xlu0 %v2481
  %v2544 = vpop.xlane.xlu0 %2543
  %2545 = vadd.xlane.f32.xlu0 %v2482
  %v2546 = vpop.xlane.xlu0 %2545
  %v2547 = vmul.f32 %v2484, %v390
  %v2548 = vmul.f32 %v2486, %v390
  %v2549 = vmul.f32 %v2488, %v390
  %v2550 = vmul.f32 %v2490, %v390
  %v2551 = vmul.f32 %v2492, %v390
  %v2552 = vmul.f32 %v2494, %v390
  %v2553 = vmul.f32 %v2496, %v390
  %v2554 = vmul.f32 %v2498, %v390
  %v2555 = vmul.f32 %v2500, %v390
  %v2556 = vmul.f32 %v2502, %v390
  %v2557 = vmul.f32 %v2504, %v390
  %v2558 = vmul.f32 %v2506, %v390
  %v2559 = vmul.f32 %v2508, %v390
  %v2560 = vmul.f32 %v2510, %v390
  %v2561 = vmul.f32 %v2512, %v390
  %v2562 = vmul.f32 %v2514, %v390
  %v2563 = vmul.f32 %v2516, %v390
  %v2564 = vmul.f32 %v2518, %v390
  %v2565 = vmul.f32 %v2520, %v390
  %v2566 = vmul.f32 %v2522, %v390
  %v2567 = vmul.f32 %v2524, %v390
  %v2568 = vmul.f32 %v2526, %v390
  %v2569 = vmul.f32 %v2528, %v390
  %v2570 = vmul.f32 %v2530, %v390
  %v2571 = vmul.f32 %v2532, %v390
  %v2572 = vmul.f32 %v2534, %v390
  %v2573 = vmul.f32 %v2536, %v390
  %v2574 = vmul.f32 %v2538, %v390
  %v2575 = vmul.f32 %v2540, %v390
  %v2576 = vmul.f32 %v2542, %v390
  %v2577 = vmul.f32 %v2544, %v390
  %v2578 = vmul.f32 %v2546, %v390
  %v2579 = vmul.f32 %v2419, %v2419
  %v2580 = vmul.f32 %v2420, %v2420
  %v2581 = vmul.f32 %v2421, %v2421
  %v2582 = vmul.f32 %v2422, %v2422
  %v2583 = vmul.f32 %v2423, %v2423
  %v2584 = vmul.f32 %v2424, %v2424
  %v2585 = vmul.f32 %v2425, %v2425
  %v2586 = vmul.f32 %v2426, %v2426
  %v2587 = vmul.f32 %v2427, %v2427
  %v2588 = vmul.f32 %v2428, %v2428
  %v2589 = vmul.f32 %v2429, %v2429
  %v2590 = vmul.f32 %v2430, %v2430
  %v2591 = vmul.f32 %v2431, %v2431
  %v2592 = vmul.f32 %v2432, %v2432
  %v2593 = vmul.f32 %v2433, %v2433
  %v2594 = vmul.f32 %v2434, %v2434
  %v2595 = vmul.f32 %v2435, %v2435
  %v2596 = vmul.f32 %v2436, %v2436
  %v2597 = vmul.f32 %v2437, %v2437
  %v2598 = vmul.f32 %v2438, %v2438
  %v2599 = vmul.f32 %v2439, %v2439
  %v2600 = vmul.f32 %v2440, %v2440
  %v2601 = vmul.f32 %v2441, %v2441
  %v2602 = vmul.f32 %v2442, %v2442
  %v2603 = vmul.f32 %v2443, %v2443
  %v2604 = vmul.f32 %v2444, %v2444
  %v2605 = vmul.f32 %v2445, %v2445
  %v2606 = vmul.f32 %v2446, %v2446
  %v2607 = vmul.f32 %v2447, %v2447
  %v2608 = vmul.f32 %v2448, %v2448
  %v2609 = vmul.f32 %v2449, %v2449
  %v2610 = vmul.f32 %v2450, %v2450
  %v2611 = vsub.f32 %v2547, %v2579
  %v2612 = vsub.f32 %v2548, %v2580
  %v2613 = vsub.f32 %v2549, %v2581
  %v2614 = vsub.f32 %v2550, %v2582
  %v2615 = vsub.f32 %v2551, %v2583
  %v2616 = vsub.f32 %v2552, %v2584
  %v2617 = vsub.f32 %v2553, %v2585
  %v2618 = vsub.f32 %v2554, %v2586
  %v2619 = vsub.f32 %v2555, %v2587
  %v2620 = vsub.f32 %v2556, %v2588
  %v2621 = vsub.f32 %v2557, %v2589
  %v2622 = vsub.f32 %v2558, %v2590
  %v2623 = vsub.f32 %v2559, %v2591
  %v2624 = vsub.f32 %v2560, %v2592
  %v2625 = vsub.f32 %v2561, %v2593
  %v2626 = vsub.f32 %v2562, %v2594
  %v2627 = vsub.f32 %v2563, %v2595
  %v2628 = vsub.f32 %v2564, %v2596
  %v2629 = vsub.f32 %v2565, %v2597
  %v2630 = vsub.f32 %v2566, %v2598
  %v2631 = vsub.f32 %v2567, %v2599
  %v2632 = vsub.f32 %v2568, %v2600
  %v2633 = vsub.f32 %v2569, %v2601
  %v2634 = vsub.f32 %v2570, %v2602
  %v2635 = vsub.f32 %v2571, %v2603
  %v2636 = vsub.f32 %v2572, %v2604
  %v2637 = vsub.f32 %v2573, %v2605
  %v2638 = vsub.f32 %v2574, %v2606
  %v2639 = vsub.f32 %v2575, %v2607
  %v2640 = vsub.f32 %v2576, %v2608
  %v2641 = vsub.f32 %v2577, %v2609
  %v2642 = vsub.f32 %v2578, %v2610
  %v2643 = vmax.f32 %v2611, 0.0
  %v2644 = vmax.f32 %v2612, 0.0
  %v2645 = vmax.f32 %v2613, 0.0
  %v2646 = vmax.f32 %v2614, 0.0
  %v2647 = vmax.f32 %v2615, 0.0
  %v2648 = vmax.f32 %v2616, 0.0
  %v2649 = vmax.f32 %v2617, 0.0
  %v2650 = vmax.f32 %v2618, 0.0
  %v2651 = vmax.f32 %v2619, 0.0
  %v2652 = vmax.f32 %v2620, 0.0
  %v2653 = vmax.f32 %v2621, 0.0
  %v2654 = vmax.f32 %v2622, 0.0
  %v2655 = vmax.f32 %v2623, 0.0
  %v2656 = vmax.f32 %v2624, 0.0
  %v2657 = vmax.f32 %v2625, 0.0
  %v2658 = vmax.f32 %v2626, 0.0
  %v2659 = vmax.f32 %v2627, 0.0
  %v2660 = vmax.f32 %v2628, 0.0
  %v2661 = vmax.f32 %v2629, 0.0
  %v2662 = vmax.f32 %v2630, 0.0
  %v2663 = vmax.f32 %v2631, 0.0
  %v2664 = vmax.f32 %v2632, 0.0
  %v2665 = vmax.f32 %v2633, 0.0
  %v2666 = vmax.f32 %v2634, 0.0
  %v2667 = vmax.f32 %v2635, 0.0
  %v2668 = vmax.f32 %v2636, 0.0
  %v2669 = vmax.f32 %v2637, 0.0
  %v2670 = vmax.f32 %v2638, 0.0
  %v2671 = vmax.f32 %v2639, 0.0
  %v2672 = vmax.f32 %v2640, 0.0
  %v2673 = vmax.f32 %v2641, 0.0
  %v2674 = vmax.f32 %v2642, 0.0
  %v2675 = vadd.f32 %v2643, 1e-05
  %v2676 = vadd.f32 %v2644, 1e-05
  %v2677 = vadd.f32 %v2645, 1e-05
  %v2678 = vadd.f32 %v2646, 1e-05
  %v2679 = vadd.f32 %v2647, 1e-05
  %v2680 = vadd.f32 %v2648, 1e-05
  %v2681 = vadd.f32 %v2649, 1e-05
  %v2682 = vadd.f32 %v2650, 1e-05
  %v2683 = vadd.f32 %v2651, 1e-05
  %v2684 = vadd.f32 %v2652, 1e-05
  %v2685 = vadd.f32 %v2653, 1e-05
  %v2686 = vadd.f32 %v2654, 1e-05
  %v2687 = vadd.f32 %v2655, 1e-05
  %v2688 = vadd.f32 %v2656, 1e-05
  %v2689 = vadd.f32 %v2657, 1e-05
  %v2690 = vadd.f32 %v2658, 1e-05
  %v2691 = vadd.f32 %v2659, 1e-05
  %v2692 = vadd.f32 %v2660, 1e-05
  %v2693 = vadd.f32 %v2661, 1e-05
  %v2694 = vadd.f32 %v2662, 1e-05
  %v2695 = vadd.f32 %v2663, 1e-05
  %v2696 = vadd.f32 %v2664, 1e-05
  %v2697 = vadd.f32 %v2665, 1e-05
  %v2698 = vadd.f32 %v2666, 1e-05
  %v2699 = vadd.f32 %v2667, 1e-05
  %v2700 = vadd.f32 %v2668, 1e-05
  %v2701 = vadd.f32 %v2669, 1e-05
  %v2702 = vadd.f32 %v2670, 1e-05
  %v2703 = vadd.f32 %v2671, 1e-05
  %v2704 = vadd.f32 %v2672, 1e-05
  %v2705 = vadd.f32 %v2673, 1e-05
  %v2706 = vadd.f32 %v2674, 1e-05
  %v2707 = vrsqrt.pop %v2675
  %v2708 = vrsqrt.pop %v2676
  %v2709 = vrsqrt.pop %v2677
  %v2710 = vrsqrt.pop %v2678
  %v2711 = vrsqrt.pop %v2679
  %v2712 = vrsqrt.pop %v2680
  %v2713 = vrsqrt.pop %v2681
  %v2714 = vrsqrt.pop %v2682
  %v2715 = vrsqrt.pop %v2683
  %v2716 = vrsqrt.pop %v2684
  %v2717 = vrsqrt.pop %v2685
  %v2718 = vrsqrt.pop %v2686
  %v2719 = vrsqrt.pop %v2687
  %v2720 = vrsqrt.pop %v2688
  %v2721 = vrsqrt.pop %v2689
  %v2722 = vrsqrt.pop %v2690
  %v2723 = vrsqrt.pop %v2691
  %v2724 = vrsqrt.pop %v2692
  %v2725 = vrsqrt.pop %v2693
  %v2726 = vrsqrt.pop %v2694
  %v2727 = vrsqrt.pop %v2695
  %v2728 = vrsqrt.pop %v2696
  %v2729 = vrsqrt.pop %v2697
  %v2730 = vrsqrt.pop %v2698
  %v2731 = vrsqrt.pop %v2699
  %v2732 = vrsqrt.pop %v2700
  %v2733 = vrsqrt.pop %v2701
  %v2734 = vrsqrt.pop %v2702
  %v2735 = vrsqrt.pop %v2703
  %v2736 = vrsqrt.pop %v2704
  %v2737 = vrsqrt.pop %v2705
  %v2738 = vrsqrt.pop %v2706
  %v2739 = vsub.f32 %v2227, %v2419
  %v2740 = vsub.f32 %v2230, %v2420
  %v2741 = vsub.f32 %v2235, %v2421
  %v2742 = vsub.f32 %v2238, %v2422
  %v2743 = vsub.f32 %v2243, %v2423
  %v2744 = vsub.f32 %v2246, %v2424
  %v2745 = vsub.f32 %v2251, %v2425
  %v2746 = vsub.f32 %v2254, %v2426
  %v2747 = vsub.f32 %v2259, %v2427
  %v2748 = vsub.f32 %v2262, %v2428
  %v2749 = vsub.f32 %v2267, %v2429
  %v2750 = vsub.f32 %v2270, %v2430
  %v2751 = vsub.f32 %v2275, %v2431
  %v2752 = vsub.f32 %v2278, %v2432
  %v2753 = vsub.f32 %v2283, %v2433
  %v2754 = vsub.f32 %v2286, %v2434
  %v2755 = vsub.f32 %v2291, %v2435
  %v2756 = vsub.f32 %v2294, %v2436
  %v2757 = vsub.f32 %v2299, %v2437
  %v2758 = vsub.f32 %v2302, %v2438
  %v2759 = vsub.f32 %v2307, %v2439
  %v2760 = vsub.f32 %v2310, %v2440
  %v2761 = vsub.f32 %v2315, %v2441
  %v2762 = vsub.f32 %v2318, %v2442
  %v2763 = vsub.f32 %v2323, %v2443
  %v2764 = vsub.f32 %v2326, %v2444
  %v2765 = vsub.f32 %v2331, %v2445
  %v2766 = vsub.f32 %v2334, %v2446
  %v2767 = vsub.f32 %v2339, %v2447
  %v2768 = vsub.f32 %v2342, %v2448
  %v2769 = vsub.f32 %v2347, %v2449
  %v2770 = vsub.f32 %v2350, %v2450
  %v2771 = vmul.f32 %v2739, %v2707
  %v2772 = vmul.f32 %v2740, %v2708
  %v2773 = vmul.f32 %v2741, %v2709
  %v2774 = vmul.f32 %v2742, %v2710
  %v2775 = vmul.f32 %v2743, %v2711
  %v2776 = vmul.f32 %v2744, %v2712
  %v2777 = vmul.f32 %v2745, %v2713
  %v2778 = vmul.f32 %v2746, %v2714
  %v2779 = vmul.f32 %v2747, %v2715
  %v2780 = vmul.f32 %v2748, %v2716
  %v2781 = vmul.f32 %v2749, %v2717
  %v2782 = vmul.f32 %v2750, %v2718
  %v2783 = vmul.f32 %v2751, %v2719
  %v2784 = vmul.f32 %v2752, %v2720
  %v2785 = vmul.f32 %v2753, %v2721
  %v2786 = vmul.f32 %v2754, %v2722
  %v2787 = vmul.f32 %v2755, %v2723
  %v2788 = vmul.f32 %v2756, %v2724
  %v2789 = vmul.f32 %v2757, %v2725
  %v2790 = vmul.f32 %v2758, %v2726
  %v2791 = vmul.f32 %v2759, %v2727
  %v2792 = vmul.f32 %v2760, %v2728
  %v2793 = vmul.f32 %v2761, %v2729
  %v2794 = vmul.f32 %v2762, %v2730
  %v2795 = vmul.f32 %v2763, %v2731
  %v2796 = vmul.f32 %v2764, %v2732
  %v2797 = vmul.f32 %v2765, %v2733
  %v2798 = vmul.f32 %v2766, %v2734
  %v2799 = vmul.f32 %v2767, %v2735
  %v2800 = vmul.f32 %v2768, %v2736
  %v2801 = vmul.f32 %v2769, %v2737
  %v2802 = vmul.f32 %v2770, %v2738
  %v2804 = vlaneseq
  %v2805 = vshrl.u32 %v2804, 7
  %v2806 = vsub.s32 0, %v2805
  %v2807 = vrot.slane %v2353, %v2806
  %v2809 = vmul.f32 %v2771, %v2807
  %v2810 = vmul.f32 %v2772, %v2807
  %v2811 = vmul.f32 %v2773, %v2807
  %v2812 = vmul.f32 %v2774, %v2807
  %v2813 = vmul.f32 %v2775, %v2807
  %v2814 = vmul.f32 %v2776, %v2807
  %v2815 = vmul.f32 %v2777, %v2807
  %v2816 = vmul.f32 %v2778, %v2807
  %v2817 = vmul.f32 %v2779, %v2807
  %v2818 = vmul.f32 %v2780, %v2807
  %v2819 = vmul.f32 %v2781, %v2807
  %v2820 = vmul.f32 %v2782, %v2807
  %v2821 = vmul.f32 %v2783, %v2807
  %v2822 = vmul.f32 %v2784, %v2807
  %v2823 = vmul.f32 %v2785, %v2807
  %v2824 = vmul.f32 %v2786, %v2807
  %v2825 = vmul.f32 %v2787, %v2807
  %v2826 = vmul.f32 %v2788, %v2807
  %v2827 = vmul.f32 %v2789, %v2807
  %v2828 = vmul.f32 %v2790, %v2807
  %v2829 = vmul.f32 %v2791, %v2807
  %v2830 = vmul.f32 %v2792, %v2807
  %v2831 = vmul.f32 %v2793, %v2807
  %v2832 = vmul.f32 %v2794, %v2807
  %v2833 = vmul.f32 %v2795, %v2807
  %v2834 = vmul.f32 %v2796, %v2807
  %v2835 = vmul.f32 %v2797, %v2807
  %v2836 = vmul.f32 %v2798, %v2807
  %v2837 = vmul.f32 %v2799, %v2807
  %v2838 = vmul.f32 %v2800, %v2807
  %v2839 = vmul.f32 %v2801, %v2807
  %v2840 = vmul.f32 %v2802, %v2807
  %v2842 = vlaneseq
  %v2843 = vshrl.u32 %v2842, 7
  %v2844 = vsub.s32 0, %v2843
  %v2845 = vrot.slane %v2354, %v2844
  %v2847 = vadd.f32 %v2809, %v2845
  %v2848 = vadd.f32 %v2810, %v2845
  %v2849 = vadd.f32 %v2811, %v2845
  %v2850 = vadd.f32 %v2812, %v2845
  %v2851 = vadd.f32 %v2813, %v2845
  %v2852 = vadd.f32 %v2814, %v2845
  %v2853 = vadd.f32 %v2815, %v2845
  %v2854 = vadd.f32 %v2816, %v2845
  %v2855 = vadd.f32 %v2817, %v2845
  %v2856 = vadd.f32 %v2818, %v2845
  %v2857 = vadd.f32 %v2819, %v2845
  %v2858 = vadd.f32 %v2820, %v2845
  %v2859 = vadd.f32 %v2821, %v2845
  %v2860 = vadd.f32 %v2822, %v2845
  %v2861 = vadd.f32 %v2823, %v2845
  %v2862 = vadd.f32 %v2824, %v2845
  %v2863 = vadd.f32 %v2825, %v2845
  %v2864 = vadd.f32 %v2826, %v2845
  %v2865 = vadd.f32 %v2827, %v2845
  %v2866 = vadd.f32 %v2828, %v2845
  %v2867 = vadd.f32 %v2829, %v2845
  %v2868 = vadd.f32 %v2830, %v2845
  %v2869 = vadd.f32 %v2831, %v2845
  %v2870 = vadd.f32 %v2832, %v2845
  %v2871 = vadd.f32 %v2833, %v2845
  %v2872 = vadd.f32 %v2834, %v2845
  %v2873 = vadd.f32 %v2835, %v2845
  %v2874 = vadd.f32 %v2836, %v2845
  %v2875 = vadd.f32 %v2837, %v2845
  %v2876 = vadd.f32 %v2838, %v2845
  %v2877 = vadd.f32 %v2839, %v2845
  %v2878 = vadd.f32 %v2840, %v2845
  %v2879 = vmax.f32 %v2847, 0.0
  %v2880 = vmax.f32 %v2848, 0.0
  %v2881 = vmax.f32 %v2849, 0.0
  %v2882 = vmax.f32 %v2850, 0.0
  %v2883 = vmax.f32 %v2851, 0.0
  %v2884 = vmax.f32 %v2852, 0.0
  %v2885 = vmax.f32 %v2853, 0.0
  %v2886 = vmax.f32 %v2854, 0.0
  %v2887 = vmax.f32 %v2855, 0.0
  %v2888 = vmax.f32 %v2856, 0.0
  %v2889 = vmax.f32 %v2857, 0.0
  %v2890 = vmax.f32 %v2858, 0.0
  %v2891 = vmax.f32 %v2859, 0.0
  %v2892 = vmax.f32 %v2860, 0.0
  %v2893 = vmax.f32 %v2861, 0.0
  %v2894 = vmax.f32 %v2862, 0.0
  %v2895 = vmax.f32 %v2863, 0.0
  %v2896 = vmax.f32 %v2864, 0.0
  %v2897 = vmax.f32 %v2865, 0.0
  %v2898 = vmax.f32 %v2866, 0.0
  %v2899 = vmax.f32 %v2867, 0.0
  %v2900 = vmax.f32 %v2868, 0.0
  %v2901 = vmax.f32 %v2869, 0.0
  %v2902 = vmax.f32 %v2870, 0.0
  %v2903 = vmax.f32 %v2871, 0.0
  %v2904 = vmax.f32 %v2872, 0.0
  %v2905 = vmax.f32 %v2873, 0.0
  %v2906 = vmax.f32 %v2874, 0.0
  %v2907 = vmax.f32 %v2875, 0.0
  %v2908 = vmax.f32 %v2876, 0.0
  %v2909 = vmax.f32 %v2877, 0.0
  %v2910 = vmax.f32 %v2878, 0.0
  %v2911 = vpack.c.bf16 %v2880, %v2879
  %v2912 = vpack.c.bf16 %v2882, %v2881
  %v2913 = vpack.c.bf16 %v2884, %v2883
  %v2914 = vpack.c.bf16 %v2886, %v2885
  %v2915 = vpack.c.bf16 %v2888, %v2887
  %v2916 = vpack.c.bf16 %v2890, %v2889
  %v2917 = vpack.c.bf16 %v2892, %v2891
  %v2918 = vpack.c.bf16 %v2894, %v2893
  %v2919 = vpack.c.bf16 %v2896, %v2895
  %v2920 = vpack.c.bf16 %v2898, %v2897
  %v2921 = vpack.c.bf16 %v2900, %v2899
  %v2922 = vpack.c.bf16 %v2902, %v2901
  %v2923 = vpack.c.bf16 %v2904, %v2903
  %v2924 = vpack.c.bf16 %v2906, %v2905
  %v2925 = vpack.c.bf16 %v2908, %v2907
  %v2926 = vpack.c.bf16 %v2910, %v2909
  %v2927 = vld [vmem:[%s13] sm:$0xf]
  %v2928 = vld [vmem:[%s13 + $0x4] sm:$0xf]
  %v2929 = vld [vmem:[%s13 + $0x8] sm:$0xf]
  %v2930 = vld [vmem:[%s13 + $0xc] sm:$0xf]
  %v2931 = vld [vmem:[%s13 + $0x10] sm:$0xf]
  %v2932 = vld [vmem:[%s13 + $0x14] sm:$0xf]
  %v2933 = vld [vmem:[%s13 + $0x18] sm:$0xf]
  %v2934 = vld [vmem:[%s13 + $0x1c] sm:$0xf]
  %v2935 = vld [vmem:[%s13 + $0x20] sm:$0xf]
  %v2936 = vld [vmem:[%s13 + $0x24] sm:$0xf]
  %v2937 = vld [vmem:[%s13 + $0x28] sm:$0xf]
  %v2938 = vld [vmem:[%s13 + $0x2c] sm:$0xf]
  %v2939 = vld [vmem:[%s13 + $0x30] sm:$0xf]
  %v2940 = vld [vmem:[%s13 + $0x34] sm:$0xf]
  %v2941 = vld [vmem:[%s13 + $0x38] sm:$0xf]
  %v2942 = vld [vmem:[%s13 + $0x3c] sm:$0xf]
  %v2943 = vld [vmem:[%s14] sm:$0x1]
  %v2945 = vlaneseq
  %v2946 = vshrl.u32 %v2945, 7
  %v2947 = vsub.s32 0, %v2946
  %v2948 = vrot.slane %v2943, %v2947
  %v2966 = vunpack.c.l.b16 %v2927
  %v2967 = vunpack.c.l.b16 %v2928
  %v2968 = vunpack.c.l.b16 %v2929
  %v2969 = vunpack.c.l.b16 %v2930
  %v2970 = vunpack.c.l.b16 %v2931
  %v2971 = vunpack.c.l.b16 %v2932
  %v2972 = vunpack.c.l.b16 %v2933
  %v2973 = vunpack.c.l.b16 %v2934
  %v2974 = vunpack.c.l.b16 %v2935
  %v2975 = vunpack.c.l.b16 %v2936
  %v2976 = vunpack.c.l.b16 %v2937
  %v2977 = vunpack.c.l.b16 %v2938
  %v2978 = vunpack.c.l.b16 %v2939
  %v2979 = vunpack.c.l.b16 %v2940
  %v2980 = vunpack.c.l.b16 %v2941
  %v2981 = vunpack.c.l.b16 %v2942
  %v2982 = vpack.c.b16 %v2967, %v2966
  %v2983 = vpack.c.b16 %v2969, %v2968
  %v2984 = vpack.c.b16 %v2971, %v2970
  %v2985 = vpack.c.b16 %v2973, %v2972
  %v2986 = vpack.c.b16 %v2975, %v2974
  %v2987 = vpack.c.b16 %v2977, %v2976
  %v2988 = vpack.c.b16 %v2979, %v2978
  %v2989 = vpack.c.b16 %v2981, %v2980
  %2998 = vmatprep.subr.bf16.mxu0 0
  %2999 = vmatpush1.bf16.msra.mxu0 %v2982
  %3000 = vmatprep.subr.bf16.mxu0 0
  %3001 = vmatpush1.bf16.msra.mxu0 %v2983
  %3002 = vmatprep.subr.bf16.mxu0 0
  %3003 = vmatpush1.bf16.msra.mxu0 %v2984
  %3004 = vmatprep.subr.bf16.mxu0 0
  %3005 = vmatpush1.bf16.msra.mxu0 %v2985
  %3006 = vmatprep.subr.bf16.mxu0 0
  %3007 = vmatpush1.bf16.msra.mxu0 %v2986
  %3008 = vmatprep.subr.bf16.mxu0 0
  %3009 = vmatpush1.bf16.msra.mxu0 %v2987
  %3010 = vmatprep.subr.bf16.mxu0 0
  %3011 = vmatpush1.bf16.msra.mxu0 %v2988
  %3012 = vmatprep.subr.bf16.mxu0 0
  %3013 = vmatpush1.bf16.msra.mxu0 %v2989
  %3014 = vmatprep.subr.bf16.mxu0 0
  %3015 = vmatpush1.bf16.msra.mxu0 0
  %3016 = vmatprep.subr.bf16.mxu0 0
  %3017 = vmatpush1.bf16.msra.mxu0 0
  %3018 = vmatprep.subr.bf16.mxu0 0
  %3019 = vmatpush1.bf16.msra.mxu0 0
  %3020 = vmatprep.subr.bf16.mxu0 0
  %3021 = vmatpush1.bf16.msra.mxu0 0
  %3022 = vmatprep.subr.bf16.mxu0 0
  %3023 = vmatpush1.bf16.msra.mxu0 0
  %3024 = vmatprep.subr.bf16.mxu0 0
  %3025 = vmatpush1.bf16.msra.mxu0 0
  %3026 = vmatprep.subr.bf16.mxu0 0
  %3027 = vmatpush1.bf16.msra.mxu0 0
  %3028 = vmatprep.subr.bf16.mxu0 0
  %3029 = vmatpush1.bf16.msra.mxu0 0
  %3030 = vmatprep.mubr.bf16.mxu0 0
  %3031 = vmatmul.mubr.bf16.gmra.mrb[0].mxu0 %v2911
  %v3032 = vpop.f32.mrb[0].mxu0
  %v3033 = vadd.f32 %v2948, %v3032
  %v3034 = vpop.f32.mrb[0].mxu0
  %v3035 = vpop.f32.mrb[0].mxu0
  %v3036 = vadd.f32 %v2948, %v3035
  %v3037 = vpop.f32.mrb[0].mxu0
  %3038 = vmatprep.mubr.bf16.mxu0 0
  %3039 = vmatmul.mubr.bf16.gmra.mrb[0].mxu0 %v2912
  %v3040 = vpop.f32.mrb[0].mxu0
  %v3041 = vadd.f32 %v2948, %v3040
  %v3042 = vpop.f32.mrb[0].mxu0
  %v3043 = vpop.f32.mrb[0].mxu0
  %v3044 = vadd.f32 %v2948, %v3043
  %v3045 = vpop.f32.mrb[0].mxu0
  %3046 = vmatprep.mubr.bf16.mxu0 0
  %3047 = vmatmul.mubr.bf16.gmra.mrb[0].mxu0 %v2913
  %v3048 = vpop.f32.mrb[0].mxu0
  %v3049 = vadd.f32 %v2948, %v3048
  %v3050 = vpop.f32.mrb[0].mxu0
  %v3051 = vpop.f32.mrb[0].mxu0
  %v3052 = vadd.f32 %v2948, %v3051
  %v3053 = vpop.f32.mrb[0].mxu0
  %3054 = vmatprep.mubr.bf16.mxu0 0
  %3055 = vmatmul.mubr.bf16.gmra.mrb[0].mxu0 %v2914
  %v3056 = vpop.f32.mrb[0].mxu0
  %v3057 = vadd.f32 %v2948, %v3056
  %v3058 = vpop.f32.mrb[0].mxu0
  %v3059 = vpop.f32.mrb[0].mxu0
  %v3060 = vadd.f32 %v2948, %v3059
  %v3061 = vpop.f32.mrb[0].mxu0
  %3062 = vmatprep.mubr.bf16.mxu0 0
  %3063 = vmatmul.mubr.bf16.gmra.mrb[0].mxu0 %v2915
  %v3064 = vpop.f32.mrb[0].mxu0
  %v3065 = vadd.f32 %v2948, %v3064
  %v3066 = vpop.f32.mrb[0].mxu0
  %v3067 = vpop.f32.mrb[0].mxu0
  %v3068 = vadd.f32 %v2948, %v3067
  %v3069 = vpop.f32.mrb[0].mxu0
  %3070 = vmatprep.mubr.bf16.mxu0 0
  %3071 = vmatmul.mubr.bf16.gmra.mrb[0].mxu0 %v2916
  %v3072 = vpop.f32.mrb[0].mxu0
  %v3073 = vadd.f32 %v2948, %v3072
  %v3074 = vpop.f32.mrb[0].mxu0
  %v3075 = vpop.f32.mrb[0].mxu0
  %v3076 = vadd.f32 %v2948, %v3075
  %v3077 = vpop.f32.mrb[0].mxu0
  %3078 = vmatprep.mubr.bf16.mxu0 0
  %3079 = vmatmul.mubr.bf16.gmra.mrb[0].mxu0 %v2917
  %v3080 = vpop.f32.mrb[0].mxu0
  %v3081 = vadd.f32 %v2948, %v3080
  %v3082 = vpop.f32.mrb[0].mxu0
  %v3083 = vpop.f32.mrb[0].mxu0
  %v3084 = vadd.f32 %v2948, %v3083
  %v3085 = vpop.f32.mrb[0].mxu0
  %3086 = vmatprep.mubr.bf16.mxu0 0
  %3087 = vmatmul.mubr.bf16.gmra.mrb[0].mxu0 %v2918
  %v3088 = vpop.f32.mrb[0].mxu0
  %v3089 = vadd.f32 %v2948, %v3088
  %v3090 = vpop.f32.mrb[0].mxu0
  %v3091 = vpop.f32.mrb[0].mxu0
  %v3092 = vadd.f32 %v2948, %v3091
  %v3093 = vpop.f32.mrb[0].mxu0
  %3094 = vmatprep.mubr.bf16.mxu0 0
  %3095 = vmatmul.mubr.bf16.gmra.mrb[0].mxu0 %v2919
  %v3096 = vpop.f32.mrb[0].mxu0
  %v3097 = vadd.f32 %v2948, %v3096
  %v3098 = vpop.f32.mrb[0].mxu0
  %v3099 = vpop.f32.mrb[0].mxu0
  %v3100 = vadd.f32 %v2948, %v3099
  %v3101 = vpop.f32.mrb[0].mxu0
  %3102 = vmatprep.mubr.bf16.mxu0 0
  %3103 = vmatmul.mubr.bf16.gmra.mrb[0].mxu0 %v2920
  %v3104 = vpop.f32.mrb[0].mxu0
  %v3105 = vadd.f32 %v2948, %v3104
  %v3106 = vpop.f32.mrb[0].mxu0
  %v3107 = vpop.f32.mrb[0].mxu0
  %v3108 = vadd.f32 %v2948, %v3107
  %v3109 = vpop.f32.mrb[0].mxu0
  %3110 = vmatprep.mubr.bf16.mxu0 0
  %3111 = vmatmul.mubr.bf16.gmra.mrb[0].mxu0 %v2921
  %v3112 = vpop.f32.mrb[0].mxu0
  %v3113 = vadd.f32 %v2948, %v3112
  %v3114 = vpop.f32.mrb[0].mxu0
  %v3115 = vpop.f32.mrb[0].mxu0
  %v3116 = vadd.f32 %v2948, %v3115
  %v3117 = vpop.f32.mrb[0].mxu0
  %3118 = vmatprep.mubr.bf16.mxu0 0
  %3119 = vmatmul.mubr.bf16.gmra.mrb[0].mxu0 %v2922
  %v3120 = vpop.f32.mrb[0].mxu0
  %v3121 = vadd.f32 %v2948, %v3120
  %v3122 = vpop.f32.mrb[0].mxu0
  %v3123 = vpop.f32.mrb[0].mxu0
  %v3124 = vadd.f32 %v2948, %v3123
  %v3125 = vpop.f32.mrb[0].mxu0
  %3126 = vmatprep.mubr.bf16.mxu0 0
  %3127 = vmatmul.mubr.bf16.gmra.mrb[0].mxu0 %v2923
  %v3128 = vpop.f32.mrb[0].mxu0
  %v3129 = vadd.f32 %v2948, %v3128
  %v3130 = vpop.f32.mrb[0].mxu0
  %v3131 = vpop.f32.mrb[0].mxu0
  %v3132 = vadd.f32 %v2948, %v3131
  %v3133 = vpop.f32.mrb[0].mxu0
  %3134 = vmatprep.mubr.bf16.mxu0 0
  %3135 = vmatmul.mubr.bf16.gmra.mrb[0].mxu0 %v2924
  %v3136 = vpop.f32.mrb[0].mxu0
  %v3137 = vadd.f32 %v2948, %v3136
  %v3138 = vpop.f32.mrb[0].mxu0
  %v3139 = vpop.f32.mrb[0].mxu0
  %v3140 = vadd.f32 %v2948, %v3139
  %v3141 = vpop.f32.mrb[0].mxu0
  %3142 = vmatprep.mubr.bf16.mxu0 0
  %3143 = vmatmul.mubr.bf16.gmra.mrb[0].mxu0 %v2925
  %v3144 = vpop.f32.mrb[0].mxu0
  %v3145 = vadd.f32 %v2948, %v3144
  %v3146 = vpop.f32.mrb[0].mxu0
  %v3147 = vpop.f32.mrb[0].mxu0
  %v3148 = vadd.f32 %v2948, %v3147
  %v3149 = vpop.f32.mrb[0].mxu0
  %3150 = vmatprep.mubr.bf16.mxu0 0
  %3151 = vmatmul.mubr.bf16.gmra.mrb[0].mxu0 %v2926
  %v3152 = vpop.f32.mrb[0].mxu0
  %v3153 = vadd.f32 %v2948, %v3152
  %v3154 = vpop.f32.mrb[0].mxu0
  %v3155 = vpop.f32.mrb[0].mxu0
  %v3156 = vadd.f32 %v2948, %v3155
  %v3157 = vpop.f32.mrb[0].mxu0
  %3158 = vdwg.mxu0
  %vm3159 = vcmask 31744
  %3160 = vst.msk [vmem:[%s15] sm:$0xff] %vm3159, %v3033
  %3161 = vst.msk [vmem:[%s15 + $0x8] sm:$0xff] %vm3159, %v3036
  %3162 = vst.msk [vmem:[%s15 + $0x10] sm:$0xff] %vm3159, %v3041
  %3163 = vst.msk [vmem:[%s15 + $0x18] sm:$0xff] %vm3159, %v3044
  %3164 = vst.msk [vmem:[%s15 + $0x20] sm:$0xff] %vm3159, %v3049
  %3165 = vst.msk [vmem:[%s15 + $0x28] sm:$0xff] %vm3159, %v3052
  %3166 = vst.msk [vmem:[%s15 + $0x30] sm:$0xff] %vm3159, %v3057
  %3167 = vst.msk [vmem:[%s15 + $0x38] sm:$0xff] %vm3159, %v3060
  %3168 = vst.msk [vmem:[%s15 + $0x40] sm:$0xff] %vm3159, %v3065
  %3169 = vst.msk [vmem:[%s15 + $0x48] sm:$0xff] %vm3159, %v3068
  %3170 = vst.msk [vmem:[%s15 + $0x50] sm:$0xff] %vm3159, %v3073
  %3171 = vst.msk [vmem:[%s15 + $0x58] sm:$0xff] %vm3159, %v3076
  %3172 = vst.msk [vmem:[%s15 + $0x60] sm:$0xff] %vm3159, %v3081
  %3173 = vst.msk [vmem:[%s15 + $0x68] sm:$0xff] %vm3159, %v3084
  %3174 = vst.msk [vmem:[%s15 + $0x70] sm:$0xff] %vm3159, %v3089
  %3175 = vst.msk [vmem:[%s15 + $0x78] sm:$0xff] %vm3159, %v3092
  %3176 = vst.msk [vmem:[%s15 + $0x80] sm:$0xff] %vm3159, %v3097
  %3177 = vst.msk [vmem:[%s15 + $0x88] sm:$0xff] %vm3159, %v3100
  %3178 = vst.msk [vmem:[%s15 + $0x90] sm:$0xff] %vm3159, %v3105
  %3179 = vst.msk [vmem:[%s15 + $0x98] sm:$0xff] %vm3159, %v3108
  %3180 = vst.msk [vmem:[%s15 + $0xa0] sm:$0xff] %vm3159, %v3113
  %3181 = vst.msk [vmem:[%s15 + $0xa8] sm:$0xff] %vm3159, %v3116
  %3182 = vst.msk [vmem:[%s15 + $0xb0] sm:$0xff] %vm3159, %v3121
  %3183 = vst.msk [vmem:[%s15 + $0xb8] sm:$0xff] %vm3159, %v3124
  %3184 = vst.msk [vmem:[%s15 + $0xc0] sm:$0xff] %vm3159, %v3129
  %3185 = vst.msk [vmem:[%s15 + $0xc8] sm:$0xff] %vm3159, %v3132
  %3186 = vst.msk [vmem:[%s15 + $0xd0] sm:$0xff] %vm3159, %v3137
  %3187 = vst.msk [vmem:[%s15 + $0xd8] sm:$0xff] %vm3159, %v3140
  %3188 = vst.msk [vmem:[%s15 + $0xe0] sm:$0xff] %vm3159, %v3145
  %3189 = vst.msk [vmem:[%s15 + $0xe8] sm:$0xff] %vm3159, %v3148
  %3190 = vst.msk [vmem:[%s15 + $0xf0] sm:$0xff] %vm3159, %v3153
  %3191 = vst.msk [vmem:[%s15 + $0xf8] sm:$0xff] %vm3159, %v3156
  // Predicated region
  $region62: #{tpu_custom_call.1} parent=0 // pred_check
    _
  $region63: #{tpu_custom_call.1} parent=0 // pred_check_branch
    %3193 = sbr.rel (0) target = $region65
  $region64: #{tpu_custom_call.1} parent=0 // pred_region
    _
  $region65: #{tpu_custom_call.1} parent=0 // pred_fallthru
    _
  // Predicated region
  $region66: #{tpu_custom_call.1} parent=0 // pred_check
    _
  $region67: #{tpu_custom_call.1} parent=0 // pred_check_branch
    %3195 = sbr.rel (0) target = $region69
  $region68: #{tpu_custom_call.1} parent=0 // pred_region
    _
  $region69: #{tpu_custom_call.1} parent=0 // pred_fallthru
    _

</llo_original>
